<compile_context>
chip_gen: v5e
topology: v5e:2x2
jax: 0.10.0
libtpu: 0.0.40
codegen_flags: <defaults>
</compile_context>

<pallas_src>
import math

import numpy as np

import jax
import jax.numpy as jnp
from jax.experimental import pallas as pl
from jax.experimental.pallas import tpu as pltpu


# ----------------------------------------------------------------------------
# Fused kernel factory: 3x SocialEncoder + social_merge + 3-layer MLP head
# ----------------------------------------------------------------------------
def _make_fused_kernel(*, B, T, TBS, F, D, Di, H1, H2, off):
    G = 1 + T          # pooling groups: [self, relation_0, relation_1, relation_2]
    GB = G * B
    DN_T = (((1,), (1,)), ((), ()))   # x @ W^T   (F.linear orientation)
    DN_N = (((1,), (0,)), ((), ()))   # plain x @ W

    def kernel(self_ref, soc_ref, item_ref, slab_ref, out_ref, rep_p_ref, pool_in_ref):
        f32 = jnp.float32

        # ---------------- parameters & baked constants from the packed slab ----------------
        w_user = slab_ref[off['w_user']:off['w_user'] + D, :F]            # [D, F]
        sw1    = slab_ref[off['sw1']:off['sw1'] + D, :D]                  # [D, D]
        w1i    = slab_ref[off['w1']:off['w1'] + H1, 0:Di]                 # [H1, Di]
        w1s    = slab_ref[off['w1']:off['w1'] + H1, Di:Di + D]            # [H1, D]
        w1o    = slab_ref[off['w1']:off['w1'] + H1, Di + D:Di + 2 * D]    # [H1, D]
        w2     = slab_ref[off['w2']:off['w2'] + H2, :H1]                  # [H2, H1]
        ub     = slab_ref[off['ub']:off['ub'] + 1, :D]                    # [1, D]
        sb1    = slab_ref[off['sb1']:off['sb1'] + 1, :D]
        b1     = slab_ref[off['b1']:off['b1'] + 1, :H1]
        b2     = slab_ref[off['b2']:off['b2'] + 1, :H2]
        sw2    = slab_ref[off['sw2']:off['sw2'] + 1, :D]
        w3     = slab_ref[off['w3']:off['w3'] + 1, :H2]
        b3     = slab_ref[off['b3']:off['b3'] + 1, :1]                    # [1, 1]
        mrg4   = slab_ref[off['mrg4']:off['mrg4'] + 1, :G]                # [1, G] = [0, m0..m_{T-1}]
        sel0   = slab_ref[off['sel0']:off['sel0'] + 1, :G]                # [1, G] = [1, 0, ...]
        k_sel  = slab_ref[off['k_sel']:off['k_sel'] + T * B, :TBS]        # [T*B, TBS] 0/1
        k_grp  = slab_ref[off['k_grp']:off['k_grp'] + G, :GB]             # [G, G*B]   0/1

        # ---------------- masked mean over interaction items ----------------
        self_ui = self_ref[:, :, :F]                      # [B, L, F]
        self_m  = self_ref[:, :, F:F + 1]                 # [B, L, 1]  (mask column)
        soc_ui  = soc_ref[:, :, :F]                       # [TBS, Lk, F]
        soc_m   = soc_ref[:, :, F:F + 1]                  # [TBS, Lk, 1]
        agg_self = (jnp.sum(self_ui * self_m, axis=1)
                    / (jnp.sum(self_m, axis=1) + 1e-4))                               # [B, F]
        agg_soc = (jnp.sum(soc_ui * soc_m, axis=1)
                   / (jnp.sum(soc_m, axis=1) + 1e-4))                                 # [TBS, F]

        # ---------------- user linear: relu(x @ W_user^T + b) ----------------
        self_e = jnp.maximum(jax.lax.dot_general(agg_self, w_user, DN_T,
                                                 preferred_element_type=f32) + ub, 0.0)   # [B, D]
        soc_e = jnp.maximum(jax.lax.dot_general(agg_soc, w_user, DN_T,
                                                preferred_element_type=f32) + ub, 0.0)    # [TBS, D]

        # ---------------- self -> social attention, all T relations in ONE matmul ----------
        logits = jax.lax.dot_general(self_e, soc_e, DN_T,
                                     preferred_element_type=f32)                          # [B, TBS]
        p = jnp.exp(logits - jnp.max(logits, axis=1, keepdims=True))                      # [B, TBS]
        for t in range(T):                        # replicate the B query rows per relation
            rep_p_ref[t * B:(t + 1) * B, :] = p
        p_big = rep_p_ref[...] * k_sel            # block-diag selector -> only own S columns
        denom = jnp.sum(p_big, axis=1, keepdims=True)                                     # [T*B, 1]
        soc_att = (jax.lax.dot_general(p_big, soc_e, DN_N,
                                       preferred_element_type=f32) / denom)              # [T*B, D]

        # ---------------- batched aggregate_rate over [self ; T relations] ----------------
        pool_in_ref[0:B, :] = self_e
        pool_in_ref[B:GB, :] = soc_att
        pooled_in = pool_in_ref[...]                                                      # [G*B, D]
        trans = jnp.maximum(jax.lax.dot_general(pooled_in, sw1, DN_T,
                                                preferred_element_type=f32) + sb1, 0.0)   # [G*B, D]
        lg = jax.lax.dot_general(sw2, trans, DN_T, preferred_element_type=f32)            # [1, G*B]
        pr = jnp.exp(lg - jnp.max(lg, axis=1, keepdims=True))                             # [1, G*B]
        a_big = k_grp * pr                                                                # [G, G*B]
        pooled = (jax.lax.dot_general(a_big, pooled_in, DN_N, preferred_element_type=f32)
                  / jnp.sum(a_big, axis=1, keepdims=True))                                # [G, D]

        x_self   = jax.lax.dot_general(sel0, pooled, DN_N, preferred_element_type=f32)    # [1, D]
        x_social = jax.lax.dot_general(mrg4, pooled, DN_N, preferred_element_type=f32)    # [1, D]

        # ---------------- MLP head: broadcast fc1 terms folded into an effective bias ------
        b1_eff = (b1
                  + jax.lax.dot_general(x_self, w1s, DN_T, preferred_element_type=f32)
                  + jax.lax.dot_general(x_social, w1o, DN_T, preferred_element_type=f32)) # [1, H1]
        h1 = jnp.maximum(jax.lax.dot_general(item_ref[...], w1i, DN_T,
                                             preferred_element_type=f32) + b1_eff, 0.0)   # [Np, H1]
        h2 = jnp.maximum(jax.lax.dot_general(h1, w2, DN_T,
                                             preferred_element_type=f32) + b2, 0.0)       # [Np, H2]
        # fc3 as [1,H2] x [Np,H2]^T -> lane-dense (1, Np) unmasked store
        out_ref[...] = (jax.lax.dot_general(w3, h2, DN_T, preferred_element_type=f32)
                        + b3)

    return kernel


# ----------------------------------------------------------------------------
# Full MetaLearner.forward: one jitted wrapper, one pallas_call, 4 inputs
# ----------------------------------------------------------------------------
def _metalearner_forward_impl(params, item_emb, user_emb, kw):
    del user_emb                                  # unused by the reference forward as well
    f32 = jnp.float32

    # ---- self side (torch .squeeze(dim=1)); mask packed as an extra feature column ----
    self_u = kw['self_users_embd'][:, 0].astype(f32)               # [B, L, Du]
    self_i = kw['self_items_embd'][:, 0].astype(f32)               # [B, L, Di]
    self_m = kw['self_mask'][:, 0].astype(f32)                     # [B, L]
    B, L, Du = self_u.shape
    F = Du + self_i.shape[-1]
    self_packed = jnp.concatenate([self_u, self_i, self_m[..., None]], axis=-1)   # [B, L, F+1]

    # ---- the T relations, row-stacked into one tensor ----
    T = params['social_merge'].shape[1]
    rel_names = ('social', 'implicit', 'coclick')[:T]
    blocks, s_list = [], []
    for rel in rel_names:
        u = kw[f'{rel}_users_embd'].astype(f32)                    # [B, S, Lk, Du]
        i = kw[f'{rel}_items_embd'].astype(f32)                    # [B, S, Lk, Di]
        m = kw[f'{rel}_mask'].astype(f32)                          # [B, S, Lk]
        S, Lk = u.shape[1], u.shape[2]
        s_list.append(S)
        blocks.append(jnp.concatenate([u, i, m[..., None]], axis=-1).reshape(B * S, Lk, F + 1))
    soc_packed = jnp.concatenate(blocks, axis=0)                   # [TBS, Lk, F+1]
    TBS = soc_packed.shape[0]
    G = 1 + T
    GB = G * B

    # ---- trace-time 0/1 selector constants (block-diagonal attention / grouped pooling) ----
    col_rel = np.concatenate([np.full(B * s, r) for r, s in enumerate(s_list)])
    col_b = np.concatenate([np.repeat(np.arange(B), s) for s in s_list])
    row_rel = np.repeat(np.arange(T), B)
    row_b = np.tile(np.arange(B), T)
    k_sel = ((col_rel[None, :] == row_rel[:, None]) &
             (col_b[None, :] == row_b[:, None])).astype(np.float32)                # [T*B, TBS]
    k_grp = (np.arange(GB)[None, :] // B == np.arange(G)[:, None]).astype(np.float32)  # [G, GB]
    sel0 = np.zeros((1, G), np.float32)
    sel0[0, 0] = 1.0

    # ---- pack all parameters + constants into ONE lane-aligned f32 slab (one DMA) ----
    D = params['ml_user_b'].shape[0]
    H1 = params['ml_fc_b1'].shape[0]
    H2 = params['ml_fc_b2'].shape[0]
    Di = item_emb.shape[1]
    W = -(-max(F, Di + 2 * D, D, H1, H2, TBS, GB) // 128) * 128

    def pad_rows(x):
        x = jnp.asarray(x, f32)
        x = x.reshape(1, -1) if x.ndim == 1 else x
        return jnp.pad(x, ((0, 0), (0, W - x.shape[1])))

    mrg4 = jnp.concatenate([jnp.zeros((1, 1), f32), params['social_merge'].astype(f32)], axis=1)

    pieces = [
        ('w_user', params['ml_user_w']),
        ('sw1',    params['ml_social_w1']),
        ('w1',     params['ml_fc_w1']),
        ('w2',     params['ml_fc_w2']),
        ('ub',     params['ml_user_b']),
        ('sb1',    params['ml_social_b1']),
        ('b1',     params['ml_fc_b1']),
        ('b2',     params['ml_fc_b2']),
        ('sw2',    params['ml_social_w2']),
        ('w3',     params['ml_fc_w3']),
        ('b3',     params['ml_fc_b3']),
        ('mrg4',   mrg4),
        ('sel0',   sel0),
        ('k_sel',  k_sel),
        ('k_grp',  k_grp),
    ]
    off, rows, o = {}, [], 0
    for name, arr in pieces:
        padded = pad_rows(arr)
        off[name] = o
        o += padded.shape[0]
        rows.append(padded)
    slab = jnp.concatenate(rows, axis=0)
    slab = jnp.pad(slab, ((0, -(-o // 8) * 8 - o), (0, 0)))        # sublane-align total rows

    # ---- candidate items, padded so the (1, N_pad) output store is lane-dense ----
    N = item_emb.shape[0]
    N_pad = -(-N // 128) * 128
    item_pad = jnp.pad(item_emb.astype(f32), ((0, N_pad - N), (0, 0)))

    kernel = _make_fused_kernel(B=B, T=T, TBS=TBS, F=F, D=D, Di=Di, H1=H1, H2=H2, off=off)
    vmem = pl.BlockSpec(memory_space=pltpu.MemorySpace.VMEM)
    out = pl.pallas_call(
        kernel,
        in_specs=[vmem, vmem, vmem, vmem],
        out_specs=vmem,
        out_shape=jax.ShapeDtypeStruct((1, N_pad), f32),
        scratch_shapes=[
            pltpu.VMEM((T * B, TBS), f32),     # relation-replicated attention numerators
            pltpu.VMEM((GB, D), f32),          # [self_e ; soc_att] stack for aggregate_rate
        ],
    )(self_packed, soc_packed, item_pad, slab)
    return out[0, :N]                           # == torch .squeeze()


metalearner_forward = jax.jit(_metalearner_forward_impl)


# ----------------------------------------------------------------------------
# Pure-JAX reference (mirrors the PyTorch code 1:1) for correctness check
# ----------------------------------------------------------------------------
def _ref_forward(params, item_emb, user_emb, kw):
    def linear(x, w, b=None):
        y = x @ w.T
        return y if b is None else y + b

    def agg_items(users, items, mask):
        ui = jnp.concatenate([users, items], axis=-1) * mask[..., None]
        return jnp.sum(ui, axis=2) / (jnp.sum(mask, axis=2, keepdims=True) + 1e-4)

    def agg_rate(e, p):
        trans = jax.nn.relu(linear(e, p['ml_social_w1'], p['ml_social_b1']))
        att = jax.nn.softmax(p['ml_social_w2'] @ trans.T, axis=1)
        return att @ e

    def encoder(su, si, sm, ou, oi, om, p):
        se = jax.nn.relu(linear(agg_items(su, si, sm), p['ml_user_w'], p['ml_user_b']))
        oe = jax.nn.relu(linear(agg_items(ou, oi, om), p['ml_user_w'], p['ml_user_b']))
        att = jax.nn.softmax(jnp.einsum('bqd,bkd->bqk', se, oe), axis=2)
        oa = jnp.einsum('bqk,bkd->bqd', att, oe)
        return agg_rate(jnp.squeeze(se, axis=1), p), agg_rate(jnp.squeeze(oa, axis=1), p)

    xs_list, xo_list = [], []
    for key in ('social', 'implicit', 'coclick'):
        xs, xo = encoder(kw['self_users_embd'], kw['self_items_embd'], kw['self_mask'],
                         kw[f'{key}_users_embd'], kw[f'{key}_items_embd'],
                         kw[f'{key}_mask'], params)
        xs_list.append(xs)
        xo_list.append(xo)
    x_self = xs_list[0]
    x_social = params['social_merge'] @ jnp.concatenate(xo_list, axis=0)
    N = item_emb.shape[0]
    x = jnp.concatenate([item_emb, jnp.tile(x_self, (N, 1)), jnp.tile(x_social, (N, 1))], axis=1)
    x = jax.nn.relu(linear(x, params['ml_fc_w1'], params['ml_fc_b1']))
    x = jax.nn.relu(linear(x, params['ml_fc_w2'], params['ml_fc_b2']))
    x = linear(x, params['ml_fc_w3'], params['ml_fc_b3'])
    return x[:, 0]


# ----------------------------------------------------------------------------
# deterministic parameter init (xavier_normal_ for weights, zeros for biases)
# ----------------------------------------------------------------------------
def _xavier_normal(key, out_n, in_n):
    std = math.sqrt(2.0 / (in_n + out_n))
    return (std * jax.random.normal(key, (out_n, in_n))).astype(jnp.float32)


def init_params(key, D, used_feat, social_types, fc1_in, H1, H2):
    ks = jax.random.split(key, 8)
    return {
        'ml_user_w':    _xavier_normal(ks[0], D, D * used_feat),
        'ml_user_b':    jnp.zeros((D,), jnp.float32),
        'ml_social_w1': _xavier_normal(ks[1], D, D),
        'ml_social_b1': jnp.zeros((D,), jnp.float32),
        'ml_social_w2': _xavier_normal(ks[2], 1, D),
        'social_merge': _xavier_normal(ks[3], 1, social_types),
        'ml_fc_w1':     _xavier_normal(ks[4], H1, fc1_in),
        'ml_fc_b1':     jnp.zeros((H1,), jnp.float32),
        'ml_fc_w2':     _xavier_normal(ks[5], H2, H1),
        'ml_fc_b2':     jnp.zeros((H2,), jnp.float32),
        'ml_fc_w3':     _xavier_normal(ks[6], 1, H2),
        'ml_fc_b3':     jnp.zeros((1,), jnp.float32),
    }


# ----------------------------------------------------------------------------
if __name__ == "__main__":
    # config: embedding_dim=32, use_fea_user=1, use_fea_item=1, use_coclick=True,
    #         first_fc_hidden_dim=32, second_fc_hidden_dim=32, dropout (eval: no-op)
    D = 32
    use_fea_user, use_fea_item = 1, 1
    used_feat = use_fea_user + use_fea_item
    social_types = 3                       # 2 + use_coclick
    H1, H2 = 32, 32
    Du, Di = D * use_fea_user, D * use_fea_item
    fc1_in = D * (use_fea_item + 2)

    N = 8          # number of candidate items in forward()
    B = 4          # support-set size (leading dim of self_* tensors)
    L = 8          # items per self record
    S, Lk = 5, 6   # social neighbors per record, items per neighbor

    key = jax.random.PRNGKey(0)
    kp, kd = jax.random.split(key)
    params = init_params(kp, D, used_feat, social_types, fc1_in, H1, H2)

    dks = jax.random.split(kd, 16)

    def mask(k, shape):
        return (jax.random.uniform(k, shape) > 0.3).astype(jnp.float32)

    item_emb = jax.random.normal(dks[0], (N, Di), jnp.float32)
    user_emb = jax.random.normal(dks[1], (N, Du), jnp.float32)  # unused (as in torch)

    kwargs = {
        'self_users_embd': jax.random.normal(dks[2], (B, 1, L, Du), jnp.float32),
        'self_items_embd': jax.random.normal(dks[3], (B, 1, L, Di), jnp.float32),
        'self_mask':       mask(dks[4], (B, 1, L)),
    }
    for idx, rel in enumerate(('social', 'implicit', 'coclick')):
        kwargs[f'{rel}_users_embd'] = jax.random.normal(dks[5 + 3 * idx], (B, S, Lk, Du), jnp.float32)
        kwargs[f'{rel}_items_embd'] = jax.random.normal(dks[6 + 3 * idx], (B, S, Lk, Di), jnp.float32)
        kwargs[f'{rel}_mask'] = mask(dks[7 + 3 * idx], (B, S, Lk))

    out = metalearner_forward(params, item_emb, user_emb, kwargs)
    out = jax.block_until_ready(out)

    ref = _ref_forward(params, item_emb, user_emb, kwargs)
    assert out.shape == (N,)
    assert jnp.allclose(out, ref, atol=1e-4, rtol=1e-4), (out, ref)

    print("KERNEL_OK")
</pallas_src>

<mosaic_0001>
module attributes {stable_mosaic.version = 11 : i64} {
  func.func @kernel(%arg0: memref<4x8x65xf32, #tpu.memory_space<vmem>>, %arg1: memref<60x6x65xf32, #tpu.memory_space<vmem>>, %arg2: memref<128x32xf32, #tpu.memory_space<vmem>>, %arg3: memref<160x128xf32, #tpu.memory_space<vmem>>, %arg4: memref<1x128xf32, #tpu.memory_space<vmem>>, %arg5: memref<12x60xf32, #tpu.memory_space<vmem>>, %arg6: memref<16x32xf32, #tpu.memory_space<vmem>>) attributes {dimension_semantics = [], scalar_prefetch = 0 : i64, scratch_operands = 2 : i64, tpu.core_type = #tpu.core_type<tc>} {
    %c0 = arith.constant 0 : index
    %c0_0 = arith.constant 0 : index
    %0 = vector.load %arg3[%c0, %c0_0] : memref<160x128xf32, #tpu.memory_space<vmem>>, vector<32x64xf32>
    %c32 = arith.constant 32 : index
    %c0_1 = arith.constant 0 : index
    %1 = vector.load %arg3[%c32, %c0_1] : memref<160x128xf32, #tpu.memory_space<vmem>>, vector<32x32xf32>
    %c64 = arith.constant 64 : index
    %c0_2 = arith.constant 0 : index
    %2 = vector.load %arg3[%c64, %c0_2] : memref<160x128xf32, #tpu.memory_space<vmem>>, vector<32x32xf32>
    %c64_3 = arith.constant 64 : index
    %c32_4 = arith.constant 32 : index
    %3 = vector.load %arg3[%c64_3, %c32_4] : memref<160x128xf32, #tpu.memory_space<vmem>>, vector<32x32xf32>
    %c64_5 = arith.constant 64 : index
    %c64_6 = arith.constant 64 : index
    %4 = vector.load %arg3[%c64_5, %c64_6] : memref<160x128xf32, #tpu.memory_space<vmem>>, vector<32x32xf32>
    %c96 = arith.constant 96 : index
    %c0_7 = arith.constant 0 : index
    %5 = vector.load %arg3[%c96, %c0_7] : memref<160x128xf32, #tpu.memory_space<vmem>>, vector<32x32xf32>
    %c128 = arith.constant 128 : index
    %c0_8 = arith.constant 0 : index
    %6 = vector.load %arg3[%c128, %c0_8] : memref<160x128xf32, #tpu.memory_space<vmem>>, vector<1x32xf32>
    %c129 = arith.constant 129 : index
    %c0_9 = arith.constant 0 : index
    %7 = vector.load %arg3[%c129, %c0_9] : memref<160x128xf32, #tpu.memory_space<vmem>>, vector<1x32xf32>
    %c130 = arith.constant 130 : index
    %c0_10 = arith.constant 0 : index
    %8 = vector.load %arg3[%c130, %c0_10] : memref<160x128xf32, #tpu.memory_space<vmem>>, vector<1x32xf32>
    %c131 = arith.constant 131 : index
    %c0_11 = arith.constant 0 : index
    %9 = vector.load %arg3[%c131, %c0_11] : memref<160x128xf32, #tpu.memory_space<vmem>>, vector<1x32xf32>
    %c132 = arith.constant 132 : index
    %c0_12 = arith.constant 0 : index
    %10 = vector.load %arg3[%c132, %c0_12] : memref<160x128xf32, #tpu.memory_space<vmem>>, vector<1x32xf32>
    %c133 = arith.constant 133 : index
    %c0_13 = arith.constant 0 : index
    %11 = vector.load %arg3[%c133, %c0_13] : memref<160x128xf32, #tpu.memory_space<vmem>>, vector<1x32xf32>
    %c134 = arith.constant 134 : index
    %c0_14 = arith.constant 0 : index
    %12 = vector.load %arg3[%c134, %c0_14] : memref<160x128xf32, #tpu.memory_space<vmem>>, vector<1x1xf32>
    %c135 = arith.constant 135 : index
    %c0_15 = arith.constant 0 : index
    %13 = vector.load %arg3[%c135, %c0_15] : memref<160x128xf32, #tpu.memory_space<vmem>>, vector<1x4xf32>
    %c136 = arith.constant 136 : index
    %c0_16 = arith.constant 0 : index
    %14 = vector.load %arg3[%c136, %c0_16] : memref<160x128xf32, #tpu.memory_space<vmem>>, vector<1x4xf32>
    %c137 = arith.constant 137 : index
    %c0_17 = arith.constant 0 : index
    %15 = vector.load %arg3[%c137, %c0_17] : memref<160x128xf32, #tpu.memory_space<vmem>>, vector<12x60xf32>
    %c149 = arith.constant 149 : index
    %c0_18 = arith.constant 0 : index
    %16 = vector.load %arg3[%c149, %c0_18] : memref<160x128xf32, #tpu.memory_space<vmem>>, vector<4x16xf32>
    %c0_19 = arith.constant 0 : index
    %c0_20 = arith.constant 0 : index
    %c0_21 = arith.constant 0 : index
    %17 = vector.load %arg0[%c0_19, %c0_20, %c0_21] : memref<4x8x65xf32, #tpu.memory_space<vmem>>, vector<4x8x64xf32>
    %c0_22 = arith.constant 0 : index
    %c0_23 = arith.constant 0 : index
    %c64_24 = arith.constant 64 : index
    %18 = vector.load %arg0[%c0_22, %c0_23, %c64_24] : memref<4x8x65xf32, #tpu.memory_space<vmem>>, vector<4x8x1xf32>
    %c0_25 = arith.constant 0 : index
    %c0_26 = arith.constant 0 : index
    %c0_27 = arith.constant 0 : index
    %19 = vector.load %arg1[%c0_25, %c0_26, %c0_27] : memref<60x6x65xf32, #tpu.memory_space<vmem>>, vector<60x6x64xf32>
    %c0_28 = arith.constant 0 : index
    %c0_29 = arith.constant 0 : index
    %c64_30 = arith.constant 64 : index
    %20 = vector.load %arg1[%c0_28, %c0_29, %c64_30] : memref<60x6x65xf32, #tpu.memory_space<vmem>>, vector<60x6x1xf32>
    %21 = vector.broadcast %18 : vector<4x8x1xf32> to vector<4x8x64xf32>
    %22 = arith.mulf %17, %21 : vector<4x8x64xf32>
    %cst = arith.constant dense<0.000000e+00> : vector<4x64xf32>
    %23 = vector.multi_reduction <add>, %22, %cst [1] : vector<4x8x64xf32> to vector<4x64xf32>
    %cst_31 = arith.constant dense<0.000000e+00> : vector<4x1xf32>
    %24 = vector.multi_reduction <add>, %18, %cst_31 [1] : vector<4x8x1xf32> to vector<4x1xf32>
    %cst_32 = arith.constant 9.99999974E-5 : f32
    %25 = vector.broadcast %cst_32 : f32 to vector<4x1xf32>
    %26 = arith.addf %24, %25 : vector<4x1xf32>
    %27 = vector.broadcast %26 : vector<4x1xf32> to vector<4x64xf32>
    %28 = arith.divf %23, %27 : vector<4x64xf32>
    %29 = vector.broadcast %20 : vector<60x6x1xf32> to vector<60x6x64xf32>
    %30 = arith.mulf %19, %29 : vector<60x6x64xf32>
    %cst_33 = arith.constant dense<0.000000e+00> : vector<60x64xf32>
    %31 = vector.multi_reduction <add>, %30, %cst_33 [1] : vector<60x6x64xf32> to vector<60x64xf32>
    %cst_34 = arith.constant dense<0.000000e+00> : vector<60x1xf32>
    %32 = vector.multi_reduction <add>, %20, %cst_34 [1] : vector<60x6x1xf32> to vector<60x1xf32>
    %cst_35 = arith.constant 9.99999974E-5 : f32
    %33 = vector.broadcast %cst_35 : f32 to vector<60x1xf32>
    %34 = arith.addf %32, %33 : vector<60x1xf32>
    %35 = vector.broadcast %34 : vector<60x1xf32> to vector<60x64xf32>
    %36 = arith.divf %31, %35 : vector<60x64xf32>
    %cst_36 = arith.constant dense<0.000000e+00> : vector<4x32xf32>
    %37 = tpu.matmul %28, %0, %cst_36 {dimension_numbers = #tpu.dot_dimension_numbers<[1], [1], [0], [0], [0, 0, 1, 0], [], []>} : vector<4x64xf32>, vector<32x64xf32>, vector<4x32xf32> -> vector<4x32xf32>
    %38 = vector.broadcast %6 : vector<1x32xf32> to vector<4x32xf32>
    %39 = arith.addf %37, %38 : vector<4x32xf32>
    %cst_37 = arith.constant 0.000000e+00 : f32
    %40 = vector.broadcast %cst_37 : f32 to vector<4x32xf32>
    %41 = arith.maximumf %39, %40 : vector<4x32xf32>
    %cst_38 = arith.constant dense<0.000000e+00> : vector<60x32xf32>
    %42 = tpu.matmul %36, %0, %cst_38 {dimension_numbers = #tpu.dot_dimension_numbers<[1], [1], [0], [0], [0, 0, 1, 0], [], []>} : vector<60x64xf32>, vector<32x64xf32>, vector<60x32xf32> -> vector<60x32xf32>
    %43 = vector.broadcast %6 : vector<1x32xf32> to vector<60x32xf32>
    %44 = arith.addf %42, %43 : vector<60x32xf32>
    %cst_39 = arith.constant 0.000000e+00 : f32
    %45 = vector.broadcast %cst_39 : f32 to vector<60x32xf32>
    %46 = arith.maximumf %44, %45 : vector<60x32xf32>
    %cst_40 = arith.constant dense<0.000000e+00> : vector<4x60xf32>
    %47 = tpu.matmul %41, %46, %cst_40 {dimension_numbers = #tpu.dot_dimension_numbers<[1], [1], [0], [0], [0, 0, 1, 0], [], []>} : vector<4x32xf32>, vector<60x32xf32>, vector<4x60xf32> -> vector<4x60xf32>
    %cst_41 = arith.constant dense<0xFF800000> : vector<4xf32>
    %48 = vector.multi_reduction <maximumf>, %47, %cst_41 [1] : vector<4x60xf32> to vector<4xf32>
    %49 = vector.shape_cast %48 : vector<4xf32> to vector<4x1xf32>
    %50 = vector.broadcast %49 : vector<4x1xf32> to vector<4x60xf32>
    %51 = arith.subf %47, %50 : vector<4x60xf32>
    %52 = math.exp %51 : vector<4x60xf32>
    %c0_42 = arith.constant 0 : index
    %c0_43 = arith.constant 0 : index
    %53 = vector.load %arg5[%c0_42, %c0_43] : memref<12x60xf32, #tpu.memory_space<vmem>>, vector<4x60xf32>
    tpu.vector_store %arg5[%c0_42, %c0_43], %52 {strides = array<i32>} : memref<12x60xf32, #tpu.memory_space<vmem>>, vector<4x60xf32>,
    %c4 = arith.constant 4 : index
    %c0_44 = arith.constant 0 : index
    %54 = vector.load %arg5[%c4, %c0_44] : memref<12x60xf32, #tpu.memory_space<vmem>>, vector<4x60xf32>
    tpu.vector_store %arg5[%c4, %c0_44], %52 {strides = array<i32>} : memref<12x60xf32, #tpu.memory_space<vmem>>, vector<4x60xf32>,
    %c8 = arith.constant 8 : index
    %c0_45 = arith.constant 0 : index
    %55 = vector.load %arg5[%c8, %c0_45] : memref<12x60xf32, #tpu.memory_space<vmem>>, vector<4x60xf32>
    tpu.vector_store %arg5[%c8, %c0_45], %52 {strides = array<i32>} : memref<12x60xf32, #tpu.memory_space<vmem>>, vector<4x60xf32>,
    %c0_46 = arith.constant 0 : index
    %c0_47 = arith.constant 0 : index
    %56 = vector.load %arg5[%c0_46, %c0_47] : memref<12x60xf32, #tpu.memory_space<vmem>>, vector<12x60xf32>
    %57 = arith.mulf %56, %15 : vector<12x60xf32>
    %cst_48 = arith.constant dense<0.000000e+00> : vector<12xf32>
    %58 = vector.multi_reduction <add>, %57, %cst_48 [1] : vector<12x60xf32> to vector<12xf32>
    %59 = vector.shape_cast %58 : vector<12xf32> to vector<12x1xf32>
    %cst_49 = arith.constant dense<0.000000e+00> : vector<12x32xf32>
    %60 = tpu.matmul %57, %46, %cst_49 {dimension_numbers = #tpu.dot_dimension_numbers<[1], [0], [0], [1], [0, 0, 1, 1], [], []>} : vector<12x60xf32>, vector<60x32xf32>, vector<12x32xf32> -> vector<12x32xf32>
    %61 = vector.broadcast %59 : vector<12x1xf32> to vector<12x32xf32>
    %62 = arith.divf %60, %61 : vector<12x32xf32>
    %c0_50 = arith.constant 0 : index
    %c0_51 = arith.constant 0 : index
    %63 = vector.load %arg6[%c0_50, %c0_51] : memref<16x32xf32, #tpu.memory_space<vmem>>, vector<4x32xf32>
    tpu.vector_store %arg6[%c0_50, %c0_51], %41 {strides = array<i32>} : memref<16x32xf32, #tpu.memory_space<vmem>>, vector<4x32xf32>,
    %c4_52 = arith.constant 4 : index
    %c0_53 = arith.constant 0 : index
    %64 = vector.load %arg6[%c4_52, %c0_53] : memref<16x32xf32, #tpu.memory_space<vmem>>, vector<12x32xf32>
    tpu.vector_store %arg6[%c4_52, %c0_53], %62 {strides = array<i32>} : memref<16x32xf32, #tpu.memory_space<vmem>>, vector<12x32xf32>,
    %c0_54 = arith.constant 0 : index
    %c0_55 = arith.constant 0 : index
    %65 = vector.load %arg6[%c0_54, %c0_55] : memref<16x32xf32, #tpu.memory_space<vmem>>, vector<16x32xf32>
    %cst_56 = arith.constant dense<0.000000e+00> : vector<16x32xf32>
    %66 = tpu.matmul %65, %1, %cst_56 {dimension_numbers = #tpu.dot_dimension_numbers<[1], [1], [0], [0], [0, 0, 1, 0], [], []>} : vector<16x32xf32>, vector<32x32xf32>, vector<16x32xf32> -> vector<16x32xf32>
    %67 = vector.broadcast %7 : vector<1x32xf32> to vector<16x32xf32>
    %68 = arith.addf %66, %67 : vector<16x32xf32>
    %cst_57 = arith.constant 0.000000e+00 : f32
    %69 = vector.broadcast %cst_57 : f32 to vector<16x32xf32>
    %70 = arith.maximumf %68, %69 : vector<16x32xf32>
    %cst_58 = arith.constant dense<0.000000e+00> : vector<1x16xf32>
    %71 = tpu.matmul %10, %70, %cst_58 {dimension_numbers = #tpu.dot_dimension_numbers<[1], [1], [0], [0], [0, 0, 1, 0], [], []>} : vector<1x32xf32>, vector<16x32xf32>, vector<1x16xf32> -> vector<1x16xf32>
    %cst_59 = arith.constant dense<0xFF800000> : vector<1xf32>
    %72 = vector.multi_reduction <maximumf>, %71, %cst_59 [1] : vector<1x16xf32> to vector<1xf32>
    %73 = vector.shape_cast %72 : vector<1xf32> to vector<1x1xf32>
    %74 = vector.broadcast %73 : vector<1x1xf32> to vector<1x16xf32>
    %75 = arith.subf %71, %74 : vector<1x16xf32>
    %76 = math.exp %75 : vector<1x16xf32>
    %77 = vector.broadcast %76 : vector<1x16xf32> to vector<4x16xf32>
    %78 = arith.mulf %16, %77 : vector<4x16xf32>
    %cst_60 = arith.constant dense<0.000000e+00> : vector<4x32xf32>
    %79 = tpu.matmul %78, %65, %cst_60 {dimension_numbers = #tpu.dot_dimension_numbers<[1], [0], [0], [1], [0, 0, 1, 1], [], []>} : vector<4x16xf32>, vector<16x32xf32>, vector<4x32xf32> -> vector<4x32xf32>
    %cst_61 = arith.constant dense<0.000000e+00> : vector<4xf32>
    %80 = vector.multi_reduction <add>, %78, %cst_61 [1] : vector<4x16xf32> to vector<4xf32>
    %81 = vector.shape_cast %80 : vector<4xf32> to vector<4x1xf32>
    %82 = vector.broadcast %81 : vector<4x1xf32> to vector<4x32xf32>
    %83 = arith.divf %79, %82 : vector<4x32xf32>
    %cst_62 = arith.constant dense<0.000000e+00> : vector<1x32xf32>
    %84 = tpu.matmul %14, %83, %cst_62 {dimension_numbers = #tpu.dot_dimension_numbers<[1], [0], [0], [1], [0, 0, 1, 1], [], []>} : vector<1x4xf32>, vector<4x32xf32>, vector<1x32xf32> -> vector<1x32xf32>
    %cst_63 = arith.constant dense<0.000000e+00> : vector<1x32xf32>
    %85 = tpu.matmul %13, %83, %cst_63 {dimension_numbers = #tpu.dot_dimension_numbers<[1], [0], [0], [1], [0, 0, 1, 1], [], []>} : vector<1x4xf32>, vector<4x32xf32>, vector<1x32xf32> -> vector<1x32xf32>
    %cst_64 = arith.constant dense<0.000000e+00> : vector<1x32xf32>
    %86 = tpu.matmul %84, %3, %cst_64 {dimension_numbers = #tpu.dot_dimension_numbers<[1], [1], [0], [0], [0, 0, 1, 0], [], []>} : vector<1x32xf32>, vector<32x32xf32>, vector<1x32xf32> -> vector<1x32xf32>
    %87 = arith.addf %8, %86 : vector<1x32xf32>
    %cst_65 = arith.constant dense<0.000000e+00> : vector<1x32xf32>
    %88 = tpu.matmul %85, %4, %cst_65 {dimension_numbers = #tpu.dot_dimension_numbers<[1], [1], [0], [0], [0, 0, 1, 0], [], []>} : vector<1x32xf32>, vector<32x32xf32>, vector<1x32xf32> -> vector<1x32xf32>
    %89 = arith.addf %87, %88 : vector<1x32xf32>
    %c0_66 = arith.constant 0 : index
    %c0_67 = arith.constant 0 : index
    %90 = vector.load %arg2[%c0_66, %c0_67] : memref<128x32xf32, #tpu.memory_space<vmem>>, vector<128x32xf32>
    %cst_68 = arith.constant dense<0.000000e+00> : vector<128x32xf32>
    %91 = tpu.matmul %90, %2, %cst_68 {dimension_numbers = #tpu.dot_dimension_numbers<[1], [1], [0], [0], [0, 0, 1, 0], [], []>} : vector<128x32xf32>, vector<32x32xf32>, vector<128x32xf32> -> vector<128x32xf32>
    %92 = vector.broadcast %89 : vector<1x32xf32> to vector<128x32xf32>
    %93 = arith.addf %91, %92 : vector<128x32xf32>
    %cst_69 = arith.constant 0.000000e+00 : f32
    %94 = vector.broadcast %cst_69 : f32 to vector<128x32xf32>
    %95 = arith.maximumf %93, %94 : vector<128x32xf32>
    %cst_70 = arith.constant dense<0.000000e+00> : vector<128x32xf32>
    %96 = tpu.matmul %95, %5, %cst_70 {dimension_numbers = #tpu.dot_dimension_numbers<[1], [1], [0], [0], [0, 0, 1, 0], [], []>} : vector<128x32xf32>, vector<32x32xf32>, vector<128x32xf32> -> vector<128x32xf32>
    %97 = vector.broadcast %9 : vector<1x32xf32> to vector<128x32xf32>
    %98 = arith.addf %96, %97 : vector<128x32xf32>
    %cst_71 = arith.constant 0.000000e+00 : f32
    %99 = vector.broadcast %cst_71 : f32 to vector<128x32xf32>
    %100 = arith.maximumf %98, %99 : vector<128x32xf32>
    %cst_72 = arith.constant dense<0.000000e+00> : vector<1x128xf32>
    %101 = tpu.matmul %11, %100, %cst_72 {dimension_numbers = #tpu.dot_dimension_numbers<[1], [1], [0], [0], [0, 0, 1, 0], [], []>} : vector<1x32xf32>, vector<128x32xf32>, vector<1x128xf32> -> vector<1x128xf32>
    %102 = vector.broadcast %12 : vector<1x1xf32> to vector<1x128xf32>
    %103 = arith.addf %101, %102 : vector<1x128xf32>
    %c0_73 = arith.constant 0 : index
    %c0_74 = arith.constant 0 : index
    %104 = vector.load %arg4[%c0_73, %c0_74] : memref<1x128xf32, #tpu.memory_space<vmem>>, vector<1x128xf32>
    tpu.vector_store %arg4[%c0_73, %c0_74], %103 {strides = array<i32>} : memref<1x128xf32, #tpu.memory_space<vmem>>, vector<1x128xf32>,
    return
  }
}

</mosaic_0001>

<llo_original>
// kernel: _metalearner_forward_impl.1
$region0: #{_metalearner_forward_impl.1}
  #allocation0 [shape = 'u32[]', space=smem, size = 0x4, offset = 0x4, fixed_abs, tag = 'smem constant byte address 0x4 - core index']
  #allocation1 [shape = 'u32[72,128]{1,0:T(1,128)}', space=vmem, size = 0x9000, scoped, tag = 'internal scratch']
  #allocation2 [shape = 'f32[12,60]{1,0:T(8,128)}', space=vmem, size = 0x2000, scoped, tag = 'scratch operand']
  #allocation3 [shape = 'f32[16,32]{1,0:T(8,128)}', space=vmem, size = 0x2000, scoped, tag = 'scratch operand']
  %s0 = inlined_call_operand.vmem [shape: f32[4,8,65], index: 0, kind: input, shape index: {}]
  %s1 = inlined_call_operand.vmem [shape: f32[60,6,65], index: 1, kind: input, shape index: {}]
  %s2 = inlined_call_operand.vmem [shape: f32[128,32], index: 2, kind: input, shape index: {}]
  %s3 = inlined_call_operand.vmem [shape: f32[160,128], index: 3, kind: input, shape index: {}]
  %s4 = inlined_call_operand.vmem [shape: f32[1,128], index: 4, kind: output, shape index: {}]
  %s5 = sld [smem:[#allocation0]]
  $region26: #{_metalearner_forward_impl.1} parent=0
    _
  %s7 = ssub.s32 1, %s5
  %s8 = scalar_select 0, %s7, %s5
  // Predicated region
  $region2: #{_metalearner_forward_impl.1} parent=0 // pred_check
    _
  $region3: #{_metalearner_forward_impl.1} parent=0 // pred_check_branch
    %10 = sbr.rel (0) target = $region5
  $region4: #{_metalearner_forward_impl.1} parent=0 // pred_region
    _
  $region5: #{_metalearner_forward_impl.1} parent=0 // pred_fallthru
    _
  // Predicated region
  $region6: #{_metalearner_forward_impl.1} parent=0 // pred_check
    _
  $region7: #{_metalearner_forward_impl.1} parent=0 // pred_check_branch
    %12 = sbr.rel (0) target = $region9
  $region8: #{_metalearner_forward_impl.1} parent=0 // pred_region
    _
  $region9: #{_metalearner_forward_impl.1} parent=0 // pred_fallthru
    _
  // Predicated region
  $region10: #{_metalearner_forward_impl.1} parent=0 // pred_check
    _
  $region11: #{_metalearner_forward_impl.1} parent=0 // pred_check_branch
    %14 = sbr.rel (0) target = $region13
  $region12: #{_metalearner_forward_impl.1} parent=0 // pred_region
    _
  $region13: #{_metalearner_forward_impl.1} parent=0 // pred_fallthru
    _
  // Predicated region
  $region14: #{_metalearner_forward_impl.1} parent=0 // pred_check
    _
  $region15: #{_metalearner_forward_impl.1} parent=0 // pred_check_branch
    %16 = sbr.rel (0) target = $region17
  $region16: #{_metalearner_forward_impl.1} parent=0 // pred_region
    _
  $region17: #{_metalearner_forward_impl.1} parent=0 // pred_fallthru
    _
  %v17 = vld [vmem:[%s3] sm:$0xff]
  %v18 = vld [vmem:[%s3 + $0x8] sm:$0xff]
  %v19 = vld [vmem:[%s3 + $0x10] sm:$0xff]
  %v20 = vld [vmem:[%s3 + $0x18] sm:$0xff]
  %v21 = vld [vmem:[%s3 + $0x20] sm:$0xff]
  %v22 = vld [vmem:[%s3 + $0x28] sm:$0xff]
  %v23 = vld [vmem:[%s3 + $0x30] sm:$0xff]
  %v24 = vld [vmem:[%s3 + $0x38] sm:$0xff]
  %v25 = vld [vmem:[%s3 + $0x40] sm:$0xff]
  %v26 = vld [vmem:[%s3 + $0x48] sm:$0xff]
  %v27 = vld [vmem:[%s3 + $0x50] sm:$0xff]
  %v28 = vld [vmem:[%s3 + $0x58] sm:$0xff]
  %v29 = vld [vmem:[%s3 + $0x60] sm:$0xff]
  %v30 = vld [vmem:[%s3 + $0x68] sm:$0xff]
  %v31 = vld [vmem:[%s3 + $0x70] sm:$0xff]
  %v32 = vld [vmem:[%s3 + $0x78] sm:$0xff]
  %v33 = vld [vmem:[%s3 + $0x80] sm:$0x1]
  %v34 = vld [vmem:[%s3 + $0x81] sm:$0x1]
  %v35 = vld [vmem:[%s3 + $0x82] sm:$0x1]
  %v36 = vld [vmem:[%s3 + $0x83] sm:$0x1]
  %v37 = vld [vmem:[%s3 + $0x84] sm:$0x1]
  %v38 = vld [vmem:[%s3 + $0x85] sm:$0x1]
  %v39 = vld [vmem:[%s3 + $0x86] sm:$0x1]
  %v40 = vld [vmem:[%s3 + $0x87] sm:$0x1]
  %v41 = vld [vmem:[%s3 + $0x88] sm:$0x1]
  %v42 = vld [vmem:[%s3 + $0x89] sm:$0xff]
  %v43 = vld [vmem:[%s3 + $0x91] sm:$0xf]
  %v44 = vld [vmem:[%s3 + $0x95] sm:$0xf]
  %v45 = vld [vmem:[%s0] sm:$0xff]
  %v46 = vld [vmem:[%s0 + $0x8] sm:$0xff]
  %v47 = vld [vmem:[%s0 + $0x10] sm:$0xff]
  %v48 = vld [vmem:[%s0 + $0x18] sm:$0xff]
  %v49 = vld [vmem:[%s1] sm:$0x3f]
  %v50 = vld [vmem:[%s1 + $0x8] sm:$0x3f]
  %v51 = vld [vmem:[%s1 + $0x10] sm:$0x3f]
  %v52 = vld [vmem:[%s1 + $0x18] sm:$0x3f]
  %v53 = vld [vmem:[%s1 + $0x20] sm:$0x3f]
  %v54 = vld [vmem:[%s1 + $0x28] sm:$0x3f]
  %v55 = vld [vmem:[%s1 + $0x30] sm:$0x3f]
  %v56 = vld [vmem:[%s1 + $0x38] sm:$0x3f]
  %v57 = vld [vmem:[%s1 + $0x40] sm:$0x3f]
  %v58 = vld [vmem:[%s1 + $0x48] sm:$0x3f]
  %v59 = vld [vmem:[%s1 + $0x50] sm:$0x3f]
  %v60 = vld [vmem:[%s1 + $0x58] sm:$0x3f]
  %v61 = vld [vmem:[%s1 + $0x60] sm:$0x3f]
  %v62 = vld [vmem:[%s1 + $0x68] sm:$0x3f]
  %v63 = vld [vmem:[%s1 + $0x70] sm:$0x3f]
  %v64 = vld [vmem:[%s1 + $0x78] sm:$0x3f]
  %v65 = vld [vmem:[%s1 + $0x80] sm:$0x3f]
  %v66 = vld [vmem:[%s1 + $0x88] sm:$0x3f]
  %v67 = vld [vmem:[%s1 + $0x90] sm:$0x3f]
  %v68 = vld [vmem:[%s1 + $0x98] sm:$0x3f]
  %v69 = vld [vmem:[%s1 + $0xa0] sm:$0x3f]
  %v70 = vld [vmem:[%s1 + $0xa8] sm:$0x3f]
  %v71 = vld [vmem:[%s1 + $0xb0] sm:$0x3f]
  %v72 = vld [vmem:[%s1 + $0xb8] sm:$0x3f]
  %v73 = vld [vmem:[%s1 + $0xc0] sm:$0x3f]
  %v74 = vld [vmem:[%s1 + $0xc8] sm:$0x3f]
  %v75 = vld [vmem:[%s1 + $0xd0] sm:$0x3f]
  %v76 = vld [vmem:[%s1 + $0xd8] sm:$0x3f]
  %v77 = vld [vmem:[%s1 + $0xe0] sm:$0x3f]
  %v78 = vld [vmem:[%s1 + $0xe8] sm:$0x3f]
  %v79 = vld [vmem:[%s1 + $0xf0] sm:$0x3f]
  %v80 = vld [vmem:[%s1 + $0xf8] sm:$0x3f]
  %v81 = vld [vmem:[%s1 + $0x100] sm:$0x3f]
  %v82 = vld [vmem:[%s1 + $0x108] sm:$0x3f]
  %v83 = vld [vmem:[%s1 + $0x110] sm:$0x3f]
  %v84 = vld [vmem:[%s1 + $0x118] sm:$0x3f]
  %v85 = vld [vmem:[%s1 + $0x120] sm:$0x3f]
  %v86 = vld [vmem:[%s1 + $0x128] sm:$0x3f]
  %v87 = vld [vmem:[%s1 + $0x130] sm:$0x3f]
  %v88 = vld [vmem:[%s1 + $0x138] sm:$0x3f]
  %v89 = vld [vmem:[%s1 + $0x140] sm:$0x3f]
  %v90 = vld [vmem:[%s1 + $0x148] sm:$0x3f]
  %v91 = vld [vmem:[%s1 + $0x150] sm:$0x3f]
  %v92 = vld [vmem:[%s1 + $0x158] sm:$0x3f]
  %v93 = vld [vmem:[%s1 + $0x160] sm:$0x3f]
  %v94 = vld [vmem:[%s1 + $0x168] sm:$0x3f]
  %v95 = vld [vmem:[%s1 + $0x170] sm:$0x3f]
  %v96 = vld [vmem:[%s1 + $0x178] sm:$0x3f]
  %v97 = vld [vmem:[%s1 + $0x180] sm:$0x3f]
  %v98 = vld [vmem:[%s1 + $0x188] sm:$0x3f]
  %v99 = vld [vmem:[%s1 + $0x190] sm:$0x3f]
  %v100 = vld [vmem:[%s1 + $0x198] sm:$0x3f]
  %v101 = vld [vmem:[%s1 + $0x1a0] sm:$0x3f]
  %v102 = vld [vmem:[%s1 + $0x1a8] sm:$0x3f]
  %v103 = vld [vmem:[%s1 + $0x1b0] sm:$0x3f]
  %v104 = vld [vmem:[%s1 + $0x1b8] sm:$0x3f]
  %v105 = vld [vmem:[%s1 + $0x1c0] sm:$0x3f]
  %v106 = vld [vmem:[%s1 + $0x1c8] sm:$0x3f]
  %v107 = vld [vmem:[%s1 + $0x1d0] sm:$0x3f]
  %v108 = vld [vmem:[%s1 + $0x1d8] sm:$0x3f]
  %110 = vset.pattern.permute.xlu0 64
  %111 = vperm.xlu0 %110, %v45
  %v112 = vpop.permute.xlu0 %111
  %115 = vset.pattern.permute.xlu0 64
  %116 = vperm.xlu0 %115, %v46
  %v117 = vpop.permute.xlu0 %116
  %120 = vset.pattern.permute.xlu0 64
  %121 = vperm.xlu0 %120, %v47
  %v122 = vpop.permute.xlu0 %121
  %125 = vset.pattern.permute.xlu0 64
  %126 = vperm.xlu0 %125, %v48
  %v127 = vpop.permute.xlu0 %126
  %v129 = vmul.f32 %v45, %v112
  %v130 = vmul.f32 %v46, %v117
  %v131 = vmul.f32 %v47, %v122
  %v132 = vmul.f32 %v48, %v127
  %vm133 = vcmask 523264
  %v134 = vsel %vm133, %v129, 0.0
  %v135 = vrot.slane %v134, 4
  %v136 = vadd.f32 %v134, %v135
  %v137 = vrot.slane %v136, 2
  %v138 = vadd.f32 %v136, %v137
  %v139 = vrot.slane %v138, 1
  %v140 = vadd.f32 %v138, %v139
  %v141 = vsel %vm133, %v130, 0.0
  %v142 = vrot.slane %v141, 4
  %v143 = vadd.f32 %v141, %v142
  %v144 = vrot.slane %v143, 2
  %v145 = vadd.f32 %v143, %v144
  %v146 = vrot.slane %v145, 1
  %v147 = vadd.f32 %v145, %v146
  %v148 = vsel %vm133, %v131, 0.0
  %v149 = vrot.slane %v148, 4
  %v150 = vadd.f32 %v148, %v149
  %v151 = vrot.slane %v150, 2
  %v152 = vadd.f32 %v150, %v151
  %v153 = vrot.slane %v152, 1
  %v154 = vadd.f32 %v152, %v153
  %v155 = vsel %vm133, %v132, 0.0
  %v156 = vrot.slane %v155, 4
  %v157 = vadd.f32 %v155, %v156
  %v158 = vrot.slane %v157, 2
  %v159 = vadd.f32 %v157, %v158
  %v160 = vrot.slane %v159, 1
  %v161 = vadd.f32 %v159, %v160
  %vm162 = vcmask 531968
  %v163 = vsel %vm162, %v45, 0.0
  %v164 = vrot.slane %v163, 4
  %v165 = vadd.f32 %v163, %v164
  %v166 = vrot.slane %v165, 2
  %v167 = vadd.f32 %v165, %v166
  %v168 = vrot.slane %v167, 1
  %v169 = vadd.f32 %v167, %v168
  %v170 = vsel %vm162, %v46, 0.0
  %v171 = vrot.slane %v170, 4
  %v172 = vadd.f32 %v170, %v171
  %v173 = vrot.slane %v172, 2
  %v174 = vadd.f32 %v172, %v173
  %v175 = vrot.slane %v174, 1
  %v176 = vadd.f32 %v174, %v175
  %v177 = vsel %vm162, %v47, 0.0
  %v178 = vrot.slane %v177, 4
  %v179 = vadd.f32 %v177, %v178
  %v180 = vrot.slane %v179, 2
  %v181 = vadd.f32 %v179, %v180
  %v182 = vrot.slane %v181, 1
  %v183 = vadd.f32 %v181, %v182
  %v184 = vsel %vm162, %v48, 0.0
  %v185 = vrot.slane %v184, 4
  %v186 = vadd.f32 %v184, %v185
  %v187 = vrot.slane %v186, 2
  %v188 = vadd.f32 %v186, %v187
  %v189 = vrot.slane %v188, 1
  %v190 = vadd.f32 %v188, %v189
  %v191 = vadd.f32 %v169, 0.0001
  %v192 = vadd.f32 %v176, 0.0001
  %v193 = vadd.f32 %v183, 0.0001
  %v194 = vadd.f32 %v190, 0.0001
  %196 = vset.pattern.permute.xlu0 64
  %197 = vperm.xlu0 %196, %v191
  %v198 = vpop.permute.xlu0 %197
  %201 = vset.pattern.permute.xlu0 64
  %202 = vperm.xlu0 %201, %v192
  %v203 = vpop.permute.xlu0 %202
  %206 = vset.pattern.permute.xlu0 64
  %207 = vperm.xlu0 %206, %v193
  %v208 = vpop.permute.xlu0 %207
  %211 = vset.pattern.permute.xlu0 64
  %212 = vperm.xlu0 %211, %v194
  %v213 = vpop.permute.xlu0 %212
  %v215 = vrcp.pop %v198
  %v216 = vmul.f32 %v198, %v215
  %v217 = vsub.f32 1.0, %v216
  %v218 = vmul.f32 %v215, %v217
  %v219 = vadd.f32 %v215, %v218
  %vm220 = vweird.f32 %v198
  %vm221 = vweird.f32 %v215
  %vm222 = vmor %vm220, %vm221
  %v223 = vsel %vm222, %v215, %v219
  %v224 = vand.u32 2147483647, %v198
  %vm225 = vcmp.eq.f32.partialorder %v224, 8.507059e+37
  %v226 = vand.u32 %v198, 2147483648
  %v227 = vor.u32 1.1754944e-38, %v226
  %v228 = vsel %vm225, %v227, %v223
  %v229 = vmul.f32 %v140, %v228
  %v230 = vrcp.pop %v203
  %v231 = vmul.f32 %v203, %v230
  %v232 = vsub.f32 1.0, %v231
  %v233 = vmul.f32 %v230, %v232
  %v234 = vadd.f32 %v230, %v233
  %vm235 = vweird.f32 %v203
  %vm236 = vweird.f32 %v230
  %vm237 = vmor %vm235, %vm236
  %v238 = vsel %vm237, %v230, %v234
  %v239 = vand.u32 2147483647, %v203
  %vm240 = vcmp.eq.f32.partialorder %v239, 8.507059e+37
  %v241 = vand.u32 %v203, 2147483648
  %v242 = vor.u32 1.1754944e-38, %v241
  %v243 = vsel %vm240, %v242, %v238
  %v244 = vmul.f32 %v147, %v243
  %v245 = vrcp.pop %v208
  %v246 = vmul.f32 %v208, %v245
  %v247 = vsub.f32 1.0, %v246
  %v248 = vmul.f32 %v245, %v247
  %v249 = vadd.f32 %v245, %v248
  %vm250 = vweird.f32 %v208
  %vm251 = vweird.f32 %v245
  %vm252 = vmor %vm250, %vm251
  %v253 = vsel %vm252, %v245, %v249
  %v254 = vand.u32 2147483647, %v208
  %vm255 = vcmp.eq.f32.partialorder %v254, 8.507059e+37
  %v256 = vand.u32 %v208, 2147483648
  %v257 = vor.u32 1.1754944e-38, %v256
  %v258 = vsel %vm255, %v257, %v253
  %v259 = vmul.f32 %v154, %v258
  %v260 = vrcp.pop %v213
  %v261 = vmul.f32 %v213, %v260
  %v262 = vsub.f32 1.0, %v261
  %v263 = vmul.f32 %v260, %v262
  %v264 = vadd.f32 %v260, %v263
  %vm265 = vweird.f32 %v213
  %vm266 = vweird.f32 %v260
  %vm267 = vmor %vm265, %vm266
  %v268 = vsel %vm267, %v260, %v264
  %v269 = vand.u32 2147483647, %v213
  %vm270 = vcmp.eq.f32.partialorder %v269, 8.507059e+37
  %v271 = vand.u32 %v213, 2147483648
  %v272 = vor.u32 1.1754944e-38, %v271
  %v273 = vsel %vm270, %v272, %v268
  %v274 = vmul.f32 %v161, %v273
  %276 = vset.pattern.permute.xlu0 64
  %277 = vperm.xlu0 %276, %v49
  %v278 = vpop.permute.xlu0 %277
  %281 = vset.pattern.permute.xlu0 64
  %282 = vperm.xlu0 %281, %v50
  %v283 = vpop.permute.xlu0 %282
  %286 = vset.pattern.permute.xlu0 64
  %287 = vperm.xlu0 %286, %v51
  %v288 = vpop.permute.xlu0 %287
  %291 = vset.pattern.permute.xlu0 64
  %292 = vperm.xlu0 %291, %v52
  %v293 = vpop.permute.xlu0 %292
  %296 = vset.pattern.permute.xlu0 64
  %297 = vperm.xlu0 %296, %v53
  %v298 = vpop.permute.xlu0 %297
  %301 = vset.pattern.permute.xlu0 64
  %302 = vperm.xlu0 %301, %v54
  %v303 = vpop.permute.xlu0 %302
  %306 = vset.pattern.permute.xlu0 64
  %307 = vperm.xlu0 %306, %v55
  %v308 = vpop.permute.xlu0 %307
  %311 = vset.pattern.permute.xlu0 64
  %312 = vperm.xlu0 %311, %v56
  %v313 = vpop.permute.xlu0 %312
  %316 = vset.pattern.permute.xlu0 64
  %317 = vperm.xlu0 %316, %v57
  %v318 = vpop.permute.xlu0 %317
  %321 = vset.pattern.permute.xlu0 64
  %322 = vperm.xlu0 %321, %v58
  %v323 = vpop.permute.xlu0 %322
  %326 = vset.pattern.permute.xlu0 64
  %327 = vperm.xlu0 %326, %v59
  %v328 = vpop.permute.xlu0 %327
  %331 = vset.pattern.permute.xlu0 64
  %332 = vperm.xlu0 %331, %v60
  %v333 = vpop.permute.xlu0 %332
  %336 = vset.pattern.permute.xlu0 64
  %337 = vperm.xlu0 %336, %v61
  %v338 = vpop.permute.xlu0 %337
  %341 = vset.pattern.permute.xlu0 64
  %342 = vperm.xlu0 %341, %v62
  %v343 = vpop.permute.xlu0 %342
  %346 = vset.pattern.permute.xlu0 64
  %347 = vperm.xlu0 %346, %v63
  %v348 = vpop.permute.xlu0 %347
  %351 = vset.pattern.permute.xlu0 64
  %352 = vperm.xlu0 %351, %v64
  %v353 = vpop.permute.xlu0 %352
  %356 = vset.pattern.permute.xlu0 64
  %357 = vperm.xlu0 %356, %v65
  %v358 = vpop.permute.xlu0 %357
  %361 = vset.pattern.permute.xlu0 64
  %362 = vperm.xlu0 %361, %v66
  %v363 = vpop.permute.xlu0 %362
  %366 = vset.pattern.permute.xlu0 64
  %367 = vperm.xlu0 %366, %v67
  %v368 = vpop.permute.xlu0 %367
  %371 = vset.pattern.permute.xlu0 64
  %372 = vperm.xlu0 %371, %v68
  %v373 = vpop.permute.xlu0 %372
  %376 = vset.pattern.permute.xlu0 64
  %377 = vperm.xlu0 %376, %v69
  %v378 = vpop.permute.xlu0 %377
  %381 = vset.pattern.permute.xlu0 64
  %382 = vperm.xlu0 %381, %v70
  %v383 = vpop.permute.xlu0 %382
  %386 = vset.pattern.permute.xlu0 64
  %387 = vperm.xlu0 %386, %v71
  %v388 = vpop.permute.xlu0 %387
  %391 = vset.pattern.permute.xlu0 64
  %392 = vperm.xlu0 %391, %v72
  %v393 = vpop.permute.xlu0 %392
  %396 = vset.pattern.permute.xlu0 64
  %397 = vperm.xlu0 %396, %v73
  %v398 = vpop.permute.xlu0 %397
  %401 = vset.pattern.permute.xlu0 64
  %402 = vperm.xlu0 %401, %v74
  %v403 = vpop.permute.xlu0 %402
  %406 = vset.pattern.permute.xlu0 64
  %407 = vperm.xlu0 %406, %v75
  %v408 = vpop.permute.xlu0 %407
  %411 = vset.pattern.permute.xlu0 64
  %412 = vperm.xlu0 %411, %v76
  %v413 = vpop.permute.xlu0 %412
  %416 = vset.pattern.permute.xlu0 64
  %417 = vperm.xlu0 %416, %v77
  %v418 = vpop.permute.xlu0 %417
  %421 = vset.pattern.permute.xlu0 64
  %422 = vperm.xlu0 %421, %v78
  %v423 = vpop.permute.xlu0 %422
  %426 = vset.pattern.permute.xlu0 64
  %427 = vperm.xlu0 %426, %v79
  %v428 = vpop.permute.xlu0 %427
  %431 = vset.pattern.permute.xlu0 64
  %432 = vperm.xlu0 %431, %v80
  %v433 = vpop.permute.xlu0 %432
  %436 = vset.pattern.permute.xlu0 64
  %437 = vperm.xlu0 %436, %v81
  %v438 = vpop.permute.xlu0 %437
  %441 = vset.pattern.permute.xlu0 64
  %442 = vperm.xlu0 %441, %v82
  %v443 = vpop.permute.xlu0 %442
  %446 = vset.pattern.permute.xlu0 64
  %447 = vperm.xlu0 %446, %v83
  %v448 = vpop.permute.xlu0 %447
  %451 = vset.pattern.permute.xlu0 64
  %452 = vperm.xlu0 %451, %v84
  %v453 = vpop.permute.xlu0 %452
  %456 = vset.pattern.permute.xlu0 64
  %457 = vperm.xlu0 %456, %v85
  %v458 = vpop.permute.xlu0 %457
  %461 = vset.pattern.permute.xlu0 64
  %462 = vperm.xlu0 %461, %v86
  %v463 = vpop.permute.xlu0 %462
  %466 = vset.pattern.permute.xlu0 64
  %467 = vperm.xlu0 %466, %v87
  %v468 = vpop.permute.xlu0 %467
  %471 = vset.pattern.permute.xlu0 64
  %472 = vperm.xlu0 %471, %v88
  %v473 = vpop.permute.xlu0 %472
  %476 = vset.pattern.permute.xlu0 64
  %477 = vperm.xlu0 %476, %v89
  %v478 = vpop.permute.xlu0 %477
  %481 = vset.pattern.permute.xlu0 64
  %482 = vperm.xlu0 %481, %v90
  %v483 = vpop.permute.xlu0 %482
  %486 = vset.pattern.permute.xlu0 64
  %487 = vperm.xlu0 %486, %v91
  %v488 = vpop.permute.xlu0 %487
  %491 = vset.pattern.permute.xlu0 64
  %492 = vperm.xlu0 %491, %v92
  %v493 = vpop.permute.xlu0 %492
  %496 = vset.pattern.permute.xlu0 64
  %497 = vperm.xlu0 %496, %v93
  %v498 = vpop.permute.xlu0 %497
  %501 = vset.pattern.permute.xlu0 64
  %502 = vperm.xlu0 %501, %v94
  %v503 = vpop.permute.xlu0 %502
  %506 = vset.pattern.permute.xlu0 64
  %507 = vperm.xlu0 %506, %v95
  %v508 = vpop.permute.xlu0 %507
  %511 = vset.pattern.permute.xlu0 64
  %512 = vperm.xlu0 %511, %v96
  %v513 = vpop.permute.xlu0 %512
  %516 = vset.pattern.permute.xlu0 64
  %517 = vperm.xlu0 %516, %v97
  %v518 = vpop.permute.xlu0 %517
  %521 = vset.pattern.permute.xlu0 64
  %522 = vperm.xlu0 %521, %v98
  %v523 = vpop.permute.xlu0 %522
  %526 = vset.pattern.permute.xlu0 64
  %527 = vperm.xlu0 %526, %v99
  %v528 = vpop.permute.xlu0 %527
  %531 = vset.pattern.permute.xlu0 64
  %532 = vperm.xlu0 %531, %v100
  %v533 = vpop.permute.xlu0 %532
  %536 = vset.pattern.permute.xlu0 64
  %537 = vperm.xlu0 %536, %v101
  %v538 = vpop.permute.xlu0 %537
  %541 = vset.pattern.permute.xlu0 64
  %542 = vperm.xlu0 %541, %v102
  %v543 = vpop.permute.xlu0 %542
  %546 = vset.pattern.permute.xlu0 64
  %547 = vperm.xlu0 %546, %v103
  %v548 = vpop.permute.xlu0 %547
  %551 = vset.pattern.permute.xlu0 64
  %552 = vperm.xlu0 %551, %v104
  %v553 = vpop.permute.xlu0 %552
  %556 = vset.pattern.permute.xlu0 64
  %557 = vperm.xlu0 %556, %v105
  %v558 = vpop.permute.xlu0 %557
  %561 = vset.pattern.permute.xlu0 64
  %562 = vperm.xlu0 %561, %v106
  %v563 = vpop.permute.xlu0 %562
  %566 = vset.pattern.permute.xlu0 64
  %567 = vperm.xlu0 %566, %v107
  %v568 = vpop.permute.xlu0 %567
  %571 = vset.pattern.permute.xlu0 64
  %572 = vperm.xlu0 %571, %v108
  %v573 = vpop.permute.xlu0 %572
  %v575 = vmul.f32 %v49, %v278
  %v576 = vmul.f32 %v50, %v283
  %v577 = vmul.f32 %v51, %v288
  %v578 = vmul.f32 %v52, %v293
  %v579 = vmul.f32 %v53, %v298
  %v580 = vmul.f32 %v54, %v303
  %v581 = vmul.f32 %v55, %v308
  %v582 = vmul.f32 %v56, %v313
  %v583 = vmul.f32 %v57, %v318
  %v584 = vmul.f32 %v58, %v323
  %v585 = vmul.f32 %v59, %v328
  %v586 = vmul.f32 %v60, %v333
  %v587 = vmul.f32 %v61, %v338
  %v588 = vmul.f32 %v62, %v343
  %v589 = vmul.f32 %v63, %v348
  %v590 = vmul.f32 %v64, %v353
  %v591 = vmul.f32 %v65, %v358
  %v592 = vmul.f32 %v66, %v363
  %v593 = vmul.f32 %v67, %v368
  %v594 = vmul.f32 %v68, %v373
  %v595 = vmul.f32 %v69, %v378
  %v596 = vmul.f32 %v70, %v383
  %v597 = vmul.f32 %v71, %v388
  %v598 = vmul.f32 %v72, %v393
  %v599 = vmul.f32 %v73, %v398
  %v600 = vmul.f32 %v74, %v403
  %v601 = vmul.f32 %v75, %v408
  %v602 = vmul.f32 %v76, %v413
  %v603 = vmul.f32 %v77, %v418
  %v604 = vmul.f32 %v78, %v423
  %v605 = vmul.f32 %v79, %v428
  %v606 = vmul.f32 %v80, %v433
  %v607 = vmul.f32 %v81, %v438
  %v608 = vmul.f32 %v82, %v443
  %v609 = vmul.f32 %v83, %v448
  %v610 = vmul.f32 %v84, %v453
  %v611 = vmul.f32 %v85, %v458
  %v612 = vmul.f32 %v86, %v463
  %v613 = vmul.f32 %v87, %v468
  %v614 = vmul.f32 %v88, %v473
  %v615 = vmul.f32 %v89, %v478
  %v616 = vmul.f32 %v90, %v483
  %v617 = vmul.f32 %v91, %v488
  %v618 = vmul.f32 %v92, %v493
  %v619 = vmul.f32 %v93, %v498
  %v620 = vmul.f32 %v94, %v503
  %v621 = vmul.f32 %v95, %v508
  %v622 = vmul.f32 %v96, %v513
  %v623 = vmul.f32 %v97, %v518
  %v624 = vmul.f32 %v98, %v523
  %v625 = vmul.f32 %v99, %v528
  %v626 = vmul.f32 %v100, %v533
  %v627 = vmul.f32 %v101, %v538
  %v628 = vmul.f32 %v102, %v543
  %v629 = vmul.f32 %v103, %v548
  %v630 = vmul.f32 %v104, %v553
  %v631 = vmul.f32 %v105, %v558
  %v632 = vmul.f32 %v106, %v563
  %v633 = vmul.f32 %v107, %v568
  %v634 = vmul.f32 %v108, %v573
  %vm635 = vcmask 521216
  %v636 = vsel %vm635, %v575, 0.0
  %v637 = vrot.slane %v636, 4
  %v638 = vadd.f32 %v636, %v637
  %v639 = vrot.slane %v638, 2
  %v640 = vadd.f32 %v638, %v639
  %v641 = vrot.slane %v640, 1
  %v642 = vadd.f32 %v640, %v641
  %v643 = vsel %vm635, %v576, 0.0
  %v644 = vrot.slane %v643, 4
  %v645 = vadd.f32 %v643, %v644
  %v646 = vrot.slane %v645, 2
  %v647 = vadd.f32 %v645, %v646
  %v648 = vrot.slane %v647, 1
  %v649 = vadd.f32 %v647, %v648
  %v650 = vsel %vm635, %v577, 0.0
  %v651 = vrot.slane %v650, 4
  %v652 = vadd.f32 %v650, %v651
  %v653 = vrot.slane %v652, 2
  %v654 = vadd.f32 %v652, %v653
  %v655 = vrot.slane %v654, 1
  %v656 = vadd.f32 %v654, %v655
  %v657 = vsel %vm635, %v578, 0.0
  %v658 = vrot.slane %v657, 4
  %v659 = vadd.f32 %v657, %v658
  %v660 = vrot.slane %v659, 2
  %v661 = vadd.f32 %v659, %v660
  %v662 = vrot.slane %v661, 1
  %v663 = vadd.f32 %v661, %v662
  %v664 = vsel %vm635, %v579, 0.0
  %v665 = vrot.slane %v664, 4
  %v666 = vadd.f32 %v664, %v665
  %v667 = vrot.slane %v666, 2
  %v668 = vadd.f32 %v666, %v667
  %v669 = vrot.slane %v668, 1
  %v670 = vadd.f32 %v668, %v669
  %v671 = vsel %vm635, %v580, 0.0
  %v672 = vrot.slane %v671, 4
  %v673 = vadd.f32 %v671, %v672
  %v674 = vrot.slane %v673, 2
  %v675 = vadd.f32 %v673, %v674
  %v676 = vrot.slane %v675, 1
  %v677 = vadd.f32 %v675, %v676
  %v678 = vsel %vm635, %v581, 0.0
  %v679 = vrot.slane %v678, 4
  %v680 = vadd.f32 %v678, %v679
  %v681 = vrot.slane %v680, 2
  %v682 = vadd.f32 %v680, %v681
  %v683 = vrot.slane %v682, 1
  %v684 = vadd.f32 %v682, %v683
  %v685 = vsel %vm635, %v582, 0.0
  %v686 = vrot.slane %v685, 4
  %v687 = vadd.f32 %v685, %v686
  %v688 = vrot.slane %v687, 2
  %v689 = vadd.f32 %v687, %v688
  %v690 = vrot.slane %v689, 1
  %v691 = vadd.f32 %v689, %v690
  %v692 = vsel %vm635, %v583, 0.0
  %v693 = vrot.slane %v692, 4
  %v694 = vadd.f32 %v692, %v693
  %v695 = vrot.slane %v694, 2
  %v696 = vadd.f32 %v694, %v695
  %v697 = vrot.slane %v696, 1
  %v698 = vadd.f32 %v696, %v697
  %v699 = vsel %vm635, %v584, 0.0
  %v700 = vrot.slane %v699, 4
  %v701 = vadd.f32 %v699, %v700
  %v702 = vrot.slane %v701, 2
  %v703 = vadd.f32 %v701, %v702
  %v704 = vrot.slane %v703, 1
  %v705 = vadd.f32 %v703, %v704
  %v706 = vsel %vm635, %v585, 0.0
  %v707 = vrot.slane %v706, 4
  %v708 = vadd.f32 %v706, %v707
  %v709 = vrot.slane %v708, 2
  %v710 = vadd.f32 %v708, %v709
  %v711 = vrot.slane %v710, 1
  %v712 = vadd.f32 %v710, %v711
  %v713 = vsel %vm635, %v586, 0.0
  %v714 = vrot.slane %v713, 4
  %v715 = vadd.f32 %v713, %v714
  %v716 = vrot.slane %v715, 2
  %v717 = vadd.f32 %v715, %v716
  %v718 = vrot.slane %v717, 1
  %v719 = vadd.f32 %v717, %v718
  %v720 = vsel %vm635, %v587, 0.0
  %v721 = vrot.slane %v720, 4
  %v722 = vadd.f32 %v720, %v721
  %v723 = vrot.slane %v722, 2
  %v724 = vadd.f32 %v722, %v723
  %v725 = vrot.slane %v724, 1
  %v726 = vadd.f32 %v724, %v725
  %v727 = vsel %vm635, %v588, 0.0
  %v728 = vrot.slane %v727, 4
  %v729 = vadd.f32 %v727, %v728
  %v730 = vrot.slane %v729, 2
  %v731 = vadd.f32 %v729, %v730
  %v732 = vrot.slane %v731, 1
  %v733 = vadd.f32 %v731, %v732
  %v734 = vsel %vm635, %v589, 0.0
  %v735 = vrot.slane %v734, 4
  %v736 = vadd.f32 %v734, %v735
  %v737 = vrot.slane %v736, 2
  %v738 = vadd.f32 %v736, %v737
  %v739 = vrot.slane %v738, 1
  %v740 = vadd.f32 %v738, %v739
  %v741 = vsel %vm635, %v590, 0.0
  %v742 = vrot.slane %v741, 4
  %v743 = vadd.f32 %v741, %v742
  %v744 = vrot.slane %v743, 2
  %v745 = vadd.f32 %v743, %v744
  %v746 = vrot.slane %v745, 1
  %v747 = vadd.f32 %v745, %v746
  %v748 = vsel %vm635, %v591, 0.0
  %v749 = vrot.slane %v748, 4
  %v750 = vadd.f32 %v748, %v749
  %v751 = vrot.slane %v750, 2
  %v752 = vadd.f32 %v750, %v751
  %v753 = vrot.slane %v752, 1
  %v754 = vadd.f32 %v752, %v753
  %v755 = vsel %vm635, %v592, 0.0
  %v756 = vrot.slane %v755, 4
  %v757 = vadd.f32 %v755, %v756
  %v758 = vrot.slane %v757, 2
  %v759 = vadd.f32 %v757, %v758
  %v760 = vrot.slane %v759, 1
  %v761 = vadd.f32 %v759, %v760
  %v762 = vsel %vm635, %v593, 0.0
  %v763 = vrot.slane %v762, 4
  %v764 = vadd.f32 %v762, %v763
  %v765 = vrot.slane %v764, 2
  %v766 = vadd.f32 %v764, %v765
  %v767 = vrot.slane %v766, 1
  %v768 = vadd.f32 %v766, %v767
  %v769 = vsel %vm635, %v594, 0.0
  %v770 = vrot.slane %v769, 4
  %v771 = vadd.f32 %v769, %v770
  %v772 = vrot.slane %v771, 2
  %v773 = vadd.f32 %v771, %v772
  %v774 = vrot.slane %v773, 1
  %v775 = vadd.f32 %v773, %v774
  %v776 = vsel %vm635, %v595, 0.0
  %v777 = vrot.slane %v776, 4
  %v778 = vadd.f32 %v776, %v777
  %v779 = vrot.slane %v778, 2
  %v780 = vadd.f32 %v778, %v779
  %v781 = vrot.slane %v780, 1
  %v782 = vadd.f32 %v780, %v781
  %v783 = vsel %vm635, %v596, 0.0
  %v784 = vrot.slane %v783, 4
  %v785 = vadd.f32 %v783, %v784
  %v786 = vrot.slane %v785, 2
  %v787 = vadd.f32 %v785, %v786
  %v788 = vrot.slane %v787, 1
  %v789 = vadd.f32 %v787, %v788
  %v790 = vsel %vm635, %v597, 0.0
  %v791 = vrot.slane %v790, 4
  %v792 = vadd.f32 %v790, %v791
  %v793 = vrot.slane %v792, 2
  %v794 = vadd.f32 %v792, %v793
  %v795 = vrot.slane %v794, 1
  %v796 = vadd.f32 %v794, %v795
  %v797 = vsel %vm635, %v598, 0.0
  %v798 = vrot.slane %v797, 4
  %v799 = vadd.f32 %v797, %v798
  %v800 = vrot.slane %v799, 2
  %v801 = vadd.f32 %v799, %v800
  %v802 = vrot.slane %v801, 1
  %v803 = vadd.f32 %v801, %v802
  %v804 = vsel %vm635, %v599, 0.0
  %v805 = vrot.slane %v804, 4
  %v806 = vadd.f32 %v804, %v805
  %v807 = vrot.slane %v806, 2
  %v808 = vadd.f32 %v806, %v807
  %v809 = vrot.slane %v808, 1
  %v810 = vadd.f32 %v808, %v809
  %v811 = vsel %vm635, %v600, 0.0
  %v812 = vrot.slane %v811, 4
  %v813 = vadd.f32 %v811, %v812
  %v814 = vrot.slane %v813, 2
  %v815 = vadd.f32 %v813, %v814
  %v816 = vrot.slane %v815, 1
  %v817 = vadd.f32 %v815, %v816
  %v818 = vsel %vm635, %v601, 0.0
  %v819 = vrot.slane %v818, 4
  %v820 = vadd.f32 %v818, %v819
  %v821 = vrot.slane %v820, 2
  %v822 = vadd.f32 %v820, %v821
  %v823 = vrot.slane %v822, 1
  %v824 = vadd.f32 %v822, %v823
  %v825 = vsel %vm635, %v602, 0.0
  %v826 = vrot.slane %v825, 4
  %v827 = vadd.f32 %v825, %v826
  %v828 = vrot.slane %v827, 2
  %v829 = vadd.f32 %v827, %v828
  %v830 = vrot.slane %v829, 1
  %v831 = vadd.f32 %v829, %v830
  %v832 = vsel %vm635, %v603, 0.0
  %v833 = vrot.slane %v832, 4
  %v834 = vadd.f32 %v832, %v833
  %v835 = vrot.slane %v834, 2
  %v836 = vadd.f32 %v834, %v835
  %v837 = vrot.slane %v836, 1
  %v838 = vadd.f32 %v836, %v837
  %v839 = vsel %vm635, %v604, 0.0
  %v840 = vrot.slane %v839, 4
  %v841 = vadd.f32 %v839, %v840
  %v842 = vrot.slane %v841, 2
  %v843 = vadd.f32 %v841, %v842
  %v844 = vrot.slane %v843, 1
  %v845 = vadd.f32 %v843, %v844
  %v846 = vsel %vm635, %v605, 0.0
  %v847 = vrot.slane %v846, 4
  %v848 = vadd.f32 %v846, %v847
  %v849 = vrot.slane %v848, 2
  %v850 = vadd.f32 %v848, %v849
  %v851 = vrot.slane %v850, 1
  %v852 = vadd.f32 %v850, %v851
  %v853 = vsel %vm635, %v606, 0.0
  %v854 = vrot.slane %v853, 4
  %v855 = vadd.f32 %v853, %v854
  %v856 = vrot.slane %v855, 2
  %v857 = vadd.f32 %v855, %v856
  %v858 = vrot.slane %v857, 1
  %v859 = vadd.f32 %v857, %v858
  %v860 = vsel %vm635, %v607, 0.0
  %v861 = vrot.slane %v860, 4
  %v862 = vadd.f32 %v860, %v861
  %v863 = vrot.slane %v862, 2
  %v864 = vadd.f32 %v862, %v863
  %v865 = vrot.slane %v864, 1
  %v866 = vadd.f32 %v864, %v865
  %v867 = vsel %vm635, %v608, 0.0
  %v868 = vrot.slane %v867, 4
  %v869 = vadd.f32 %v867, %v868
  %v870 = vrot.slane %v869, 2
  %v871 = vadd.f32 %v869, %v870
  %v872 = vrot.slane %v871, 1
  %v873 = vadd.f32 %v871, %v872
  %v874 = vsel %vm635, %v609, 0.0
  %v875 = vrot.slane %v874, 4
  %v876 = vadd.f32 %v874, %v875
  %v877 = vrot.slane %v876, 2
  %v878 = vadd.f32 %v876, %v877
  %v879 = vrot.slane %v878, 1
  %v880 = vadd.f32 %v878, %v879
  %v881 = vsel %vm635, %v610, 0.0
  %v882 = vrot.slane %v881, 4
  %v883 = vadd.f32 %v881, %v882
  %v884 = vrot.slane %v883, 2
  %v885 = vadd.f32 %v883, %v884
  %v886 = vrot.slane %v885, 1
  %v887 = vadd.f32 %v885, %v886
  %v888 = vsel %vm635, %v611, 0.0
  %v889 = vrot.slane %v888, 4
  %v890 = vadd.f32 %v888, %v889
  %v891 = vrot.slane %v890, 2
  %v892 = vadd.f32 %v890, %v891
  %v893 = vrot.slane %v892, 1
  %v894 = vadd.f32 %v892, %v893
  %v895 = vsel %vm635, %v612, 0.0
  %v896 = vrot.slane %v895, 4
  %v897 = vadd.f32 %v895, %v896
  %v898 = vrot.slane %v897, 2
  %v899 = vadd.f32 %v897, %v898
  %v900 = vrot.slane %v899, 1
  %v901 = vadd.f32 %v899, %v900
  %v902 = vsel %vm635, %v613, 0.0
  %v903 = vrot.slane %v902, 4
  %v904 = vadd.f32 %v902, %v903
  %v905 = vrot.slane %v904, 2
  %v906 = vadd.f32 %v904, %v905
  %v907 = vrot.slane %v906, 1
  %v908 = vadd.f32 %v906, %v907
  %v909 = vsel %vm635, %v614, 0.0
  %v910 = vrot.slane %v909, 4
  %v911 = vadd.f32 %v909, %v910
  %v912 = vrot.slane %v911, 2
  %v913 = vadd.f32 %v911, %v912
  %v914 = vrot.slane %v913, 1
  %v915 = vadd.f32 %v913, %v914
  %v916 = vsel %vm635, %v615, 0.0
  %v917 = vrot.slane %v916, 4
  %v918 = vadd.f32 %v916, %v917
  %v919 = vrot.slane %v918, 2
  %v920 = vadd.f32 %v918, %v919
  %v921 = vrot.slane %v920, 1
  %v922 = vadd.f32 %v920, %v921
  %v923 = vsel %vm635, %v616, 0.0
  %v924 = vrot.slane %v923, 4
  %v925 = vadd.f32 %v923, %v924
  %v926 = vrot.slane %v925, 2
  %v927 = vadd.f32 %v925, %v926
  %v928 = vrot.slane %v927, 1
  %v929 = vadd.f32 %v927, %v928
  %v930 = vsel %vm635, %v617, 0.0
  %v931 = vrot.slane %v930, 4
  %v932 = vadd.f32 %v930, %v931
  %v933 = vrot.slane %v932, 2
  %v934 = vadd.f32 %v932, %v933
  %v935 = vrot.slane %v934, 1
  %v936 = vadd.f32 %v934, %v935
  %v937 = vsel %vm635, %v618, 0.0
  %v938 = vrot.slane %v937, 4
  %v939 = vadd.f32 %v937, %v938
  %v940 = vrot.slane %v939, 2
  %v941 = vadd.f32 %v939, %v940
  %v942 = vrot.slane %v941, 1
  %v943 = vadd.f32 %v941, %v942
  %v944 = vsel %vm635, %v619, 0.0
  %v945 = vrot.slane %v944, 4
  %v946 = vadd.f32 %v944, %v945
  %v947 = vrot.slane %v946, 2
  %v948 = vadd.f32 %v946, %v947
  %v949 = vrot.slane %v948, 1
  %v950 = vadd.f32 %v948, %v949
  %v951 = vsel %vm635, %v620, 0.0
  %v952 = vrot.slane %v951, 4
  %v953 = vadd.f32 %v951, %v952
  %v954 = vrot.slane %v953, 2
  %v955 = vadd.f32 %v953, %v954
  %v956 = vrot.slane %v955, 1
  %v957 = vadd.f32 %v955, %v956
  %v958 = vsel %vm635, %v621, 0.0
  %v959 = vrot.slane %v958, 4
  %v960 = vadd.f32 %v958, %v959
  %v961 = vrot.slane %v960, 2
  %v962 = vadd.f32 %v960, %v961
  %v963 = vrot.slane %v962, 1
  %v964 = vadd.f32 %v962, %v963
  %v965 = vsel %vm635, %v622, 0.0
  %v966 = vrot.slane %v965, 4
  %v967 = vadd.f32 %v965, %v966
  %v968 = vrot.slane %v967, 2
  %v969 = vadd.f32 %v967, %v968
  %v970 = vrot.slane %v969, 1
  %v971 = vadd.f32 %v969, %v970
  %v972 = vsel %vm635, %v623, 0.0
  %v973 = vrot.slane %v972, 4
  %v974 = vadd.f32 %v972, %v973
  %v975 = vrot.slane %v974, 2
  %v976 = vadd.f32 %v974, %v975
  %v977 = vrot.slane %v976, 1
  %v978 = vadd.f32 %v976, %v977
  %v979 = vsel %vm635, %v624, 0.0
  %v980 = vrot.slane %v979, 4
  %v981 = vadd.f32 %v979, %v980
  %v982 = vrot.slane %v981, 2
  %v983 = vadd.f32 %v981, %v982
  %v984 = vrot.slane %v983, 1
  %v985 = vadd.f32 %v983, %v984
  %v986 = vsel %vm635, %v625, 0.0
  %v987 = vrot.slane %v986, 4
  %v988 = vadd.f32 %v986, %v987
  %v989 = vrot.slane %v988, 2
  %v990 = vadd.f32 %v988, %v989
  %v991 = vrot.slane %v990, 1
  %v992 = vadd.f32 %v990, %v991
  %v993 = vsel %vm635, %v626, 0.0
  %v994 = vrot.slane %v993, 4
  %v995 = vadd.f32 %v993, %v994
  %v996 = vrot.slane %v995, 2
  %v997 = vadd.f32 %v995, %v996
  %v998 = vrot.slane %v997, 1
  %v999 = vadd.f32 %v997, %v998
  %v1000 = vsel %vm635, %v627, 0.0
  %v1001 = vrot.slane %v1000, 4
  %v1002 = vadd.f32 %v1000, %v1001
  %v1003 = vrot.slane %v1002, 2
  %v1004 = vadd.f32 %v1002, %v1003
  %v1005 = vrot.slane %v1004, 1
  %v1006 = vadd.f32 %v1004, %v1005
  %v1007 = vsel %vm635, %v628, 0.0
  %v1008 = vrot.slane %v1007, 4
  %v1009 = vadd.f32 %v1007, %v1008
  %v1010 = vrot.slane %v1009, 2
  %v1011 = vadd.f32 %v1009, %v1010
  %v1012 = vrot.slane %v1011, 1
  %v1013 = vadd.f32 %v1011, %v1012
  %v1014 = vsel %vm635, %v629, 0.0
  %v1015 = vrot.slane %v1014, 4
  %v1016 = vadd.f32 %v1014, %v1015
  %v1017 = vrot.slane %v1016, 2
  %v1018 = vadd.f32 %v1016, %v1017
  %v1019 = vrot.slane %v1018, 1
  %v1020 = vadd.f32 %v1018, %v1019
  %v1021 = vsel %vm635, %v630, 0.0
  %v1022 = vrot.slane %v1021, 4
  %v1023 = vadd.f32 %v1021, %v1022
  %v1024 = vrot.slane %v1023, 2
  %v1025 = vadd.f32 %v1023, %v1024
  %v1026 = vrot.slane %v1025, 1
  %v1027 = vadd.f32 %v1025, %v1026
  %v1028 = vsel %vm635, %v631, 0.0
  %v1029 = vrot.slane %v1028, 4
  %v1030 = vadd.f32 %v1028, %v1029
  %v1031 = vrot.slane %v1030, 2
  %v1032 = vadd.f32 %v1030, %v1031
  %v1033 = vrot.slane %v1032, 1
  %v1034 = vadd.f32 %v1032, %v1033
  %v1035 = vsel %vm635, %v632, 0.0
  %v1036 = vrot.slane %v1035, 4
  %v1037 = vadd.f32 %v1035, %v1036
  %v1038 = vrot.slane %v1037, 2
  %v1039 = vadd.f32 %v1037, %v1038
  %v1040 = vrot.slane %v1039, 1
  %v1041 = vadd.f32 %v1039, %v1040
  %v1042 = vsel %vm635, %v633, 0.0
  %v1043 = vrot.slane %v1042, 4
  %v1044 = vadd.f32 %v1042, %v1043
  %v1045 = vrot.slane %v1044, 2
  %v1046 = vadd.f32 %v1044, %v1045
  %v1047 = vrot.slane %v1046, 1
  %v1048 = vadd.f32 %v1046, %v1047
  %v1049 = vsel %vm635, %v634, 0.0
  %v1050 = vrot.slane %v1049, 4
  %v1051 = vadd.f32 %v1049, %v1050
  %v1052 = vrot.slane %v1051, 2
  %v1053 = vadd.f32 %v1051, %v1052
  %v1054 = vrot.slane %v1053, 1
  %v1055 = vadd.f32 %v1053, %v1054
  %vm1056 = vcmask 529920
  %v1057 = vsel %vm1056, %v49, 0.0
  %v1058 = vrot.slane %v1057, 4
  %v1059 = vadd.f32 %v1057, %v1058
  %v1060 = vrot.slane %v1059, 2
  %v1061 = vadd.f32 %v1059, %v1060
  %v1062 = vrot.slane %v1061, 1
  %v1063 = vadd.f32 %v1061, %v1062
  %v1064 = vsel %vm1056, %v50, 0.0
  %v1065 = vrot.slane %v1064, 4
  %v1066 = vadd.f32 %v1064, %v1065
  %v1067 = vrot.slane %v1066, 2
  %v1068 = vadd.f32 %v1066, %v1067
  %v1069 = vrot.slane %v1068, 1
  %v1070 = vadd.f32 %v1068, %v1069
  %v1071 = vsel %vm1056, %v51, 0.0
  %v1072 = vrot.slane %v1071, 4
  %v1073 = vadd.f32 %v1071, %v1072
  %v1074 = vrot.slane %v1073, 2
  %v1075 = vadd.f32 %v1073, %v1074
  %v1076 = vrot.slane %v1075, 1
  %v1077 = vadd.f32 %v1075, %v1076
  %v1078 = vsel %vm1056, %v52, 0.0
  %v1079 = vrot.slane %v1078, 4
  %v1080 = vadd.f32 %v1078, %v1079
  %v1081 = vrot.slane %v1080, 2
  %v1082 = vadd.f32 %v1080, %v1081
  %v1083 = vrot.slane %v1082, 1
  %v1084 = vadd.f32 %v1082, %v1083
  %v1085 = vsel %vm1056, %v53, 0.0
  %v1086 = vrot.slane %v1085, 4
  %v1087 = vadd.f32 %v1085, %v1086
  %v1088 = vrot.slane %v1087, 2
  %v1089 = vadd.f32 %v1087, %v1088
  %v1090 = vrot.slane %v1089, 1
  %v1091 = vadd.f32 %v1089, %v1090
  %v1092 = vsel %vm1056, %v54, 0.0
  %v1093 = vrot.slane %v1092, 4
  %v1094 = vadd.f32 %v1092, %v1093
  %v1095 = vrot.slane %v1094, 2
  %v1096 = vadd.f32 %v1094, %v1095
  %v1097 = vrot.slane %v1096, 1
  %v1098 = vadd.f32 %v1096, %v1097
  %v1099 = vsel %vm1056, %v55, 0.0
  %v1100 = vrot.slane %v1099, 4
  %v1101 = vadd.f32 %v1099, %v1100
  %v1102 = vrot.slane %v1101, 2
  %v1103 = vadd.f32 %v1101, %v1102
  %v1104 = vrot.slane %v1103, 1
  %v1105 = vadd.f32 %v1103, %v1104
  %v1106 = vsel %vm1056, %v56, 0.0
  %v1107 = vrot.slane %v1106, 4
  %v1108 = vadd.f32 %v1106, %v1107
  %v1109 = vrot.slane %v1108, 2
  %v1110 = vadd.f32 %v1108, %v1109
  %v1111 = vrot.slane %v1110, 1
  %v1112 = vadd.f32 %v1110, %v1111
  %v1113 = vsel %vm1056, %v57, 0.0
  %v1114 = vrot.slane %v1113, 4
  %v1115 = vadd.f32 %v1113, %v1114
  %v1116 = vrot.slane %v1115, 2
  %v1117 = vadd.f32 %v1115, %v1116
  %v1118 = vrot.slane %v1117, 1
  %v1119 = vadd.f32 %v1117, %v1118
  %v1120 = vsel %vm1056, %v58, 0.0
  %v1121 = vrot.slane %v1120, 4
  %v1122 = vadd.f32 %v1120, %v1121
  %v1123 = vrot.slane %v1122, 2
  %v1124 = vadd.f32 %v1122, %v1123
  %v1125 = vrot.slane %v1124, 1
  %v1126 = vadd.f32 %v1124, %v1125
  %v1127 = vsel %vm1056, %v59, 0.0
  %v1128 = vrot.slane %v1127, 4
  %v1129 = vadd.f32 %v1127, %v1128
  %v1130 = vrot.slane %v1129, 2
  %v1131 = vadd.f32 %v1129, %v1130
  %v1132 = vrot.slane %v1131, 1
  %v1133 = vadd.f32 %v1131, %v1132
  %v1134 = vsel %vm1056, %v60, 0.0
  %v1135 = vrot.slane %v1134, 4
  %v1136 = vadd.f32 %v1134, %v1135
  %v1137 = vrot.slane %v1136, 2
  %v1138 = vadd.f32 %v1136, %v1137
  %v1139 = vrot.slane %v1138, 1
  %v1140 = vadd.f32 %v1138, %v1139
  %v1141 = vsel %vm1056, %v61, 0.0
  %v1142 = vrot.slane %v1141, 4
  %v1143 = vadd.f32 %v1141, %v1142
  %v1144 = vrot.slane %v1143, 2
  %v1145 = vadd.f32 %v1143, %v1144
  %v1146 = vrot.slane %v1145, 1
  %v1147 = vadd.f32 %v1145, %v1146
  %v1148 = vsel %vm1056, %v62, 0.0
  %v1149 = vrot.slane %v1148, 4
  %v1150 = vadd.f32 %v1148, %v1149
  %v1151 = vrot.slane %v1150, 2
  %v1152 = vadd.f32 %v1150, %v1151
  %v1153 = vrot.slane %v1152, 1
  %v1154 = vadd.f32 %v1152, %v1153
  %v1155 = vsel %vm1056, %v63, 0.0
  %v1156 = vrot.slane %v1155, 4
  %v1157 = vadd.f32 %v1155, %v1156
  %v1158 = vrot.slane %v1157, 2
  %v1159 = vadd.f32 %v1157, %v1158
  %v1160 = vrot.slane %v1159, 1
  %v1161 = vadd.f32 %v1159, %v1160
  %v1162 = vsel %vm1056, %v64, 0.0
  %v1163 = vrot.slane %v1162, 4
  %v1164 = vadd.f32 %v1162, %v1163
  %v1165 = vrot.slane %v1164, 2
  %v1166 = vadd.f32 %v1164, %v1165
  %v1167 = vrot.slane %v1166, 1
  %v1168 = vadd.f32 %v1166, %v1167
  %v1169 = vsel %vm1056, %v65, 0.0
  %v1170 = vrot.slane %v1169, 4
  %v1171 = vadd.f32 %v1169, %v1170
  %v1172 = vrot.slane %v1171, 2
  %v1173 = vadd.f32 %v1171, %v1172
  %v1174 = vrot.slane %v1173, 1
  %v1175 = vadd.f32 %v1173, %v1174
  %v1176 = vsel %vm1056, %v66, 0.0
  %v1177 = vrot.slane %v1176, 4
  %v1178 = vadd.f32 %v1176, %v1177
  %v1179 = vrot.slane %v1178, 2
  %v1180 = vadd.f32 %v1178, %v1179
  %v1181 = vrot.slane %v1180, 1
  %v1182 = vadd.f32 %v1180, %v1181
  %v1183 = vsel %vm1056, %v67, 0.0
  %v1184 = vrot.slane %v1183, 4
  %v1185 = vadd.f32 %v1183, %v1184
  %v1186 = vrot.slane %v1185, 2
  %v1187 = vadd.f32 %v1185, %v1186
  %v1188 = vrot.slane %v1187, 1
  %v1189 = vadd.f32 %v1187, %v1188
  %v1190 = vsel %vm1056, %v68, 0.0
  %v1191 = vrot.slane %v1190, 4
  %v1192 = vadd.f32 %v1190, %v1191
  %v1193 = vrot.slane %v1192, 2
  %v1194 = vadd.f32 %v1192, %v1193
  %v1195 = vrot.slane %v1194, 1
  %v1196 = vadd.f32 %v1194, %v1195
  %v1197 = vsel %vm1056, %v69, 0.0
  %v1198 = vrot.slane %v1197, 4
  %v1199 = vadd.f32 %v1197, %v1198
  %v1200 = vrot.slane %v1199, 2
  %v1201 = vadd.f32 %v1199, %v1200
  %v1202 = vrot.slane %v1201, 1
  %v1203 = vadd.f32 %v1201, %v1202
  %v1204 = vsel %vm1056, %v70, 0.0
  %v1205 = vrot.slane %v1204, 4
  %v1206 = vadd.f32 %v1204, %v1205
  %v1207 = vrot.slane %v1206, 2
  %v1208 = vadd.f32 %v1206, %v1207
  %v1209 = vrot.slane %v1208, 1
  %v1210 = vadd.f32 %v1208, %v1209
  %v1211 = vsel %vm1056, %v71, 0.0
  %v1212 = vrot.slane %v1211, 4
  %v1213 = vadd.f32 %v1211, %v1212
  %v1214 = vrot.slane %v1213, 2
  %v1215 = vadd.f32 %v1213, %v1214
  %v1216 = vrot.slane %v1215, 1
  %v1217 = vadd.f32 %v1215, %v1216
  %v1218 = vsel %vm1056, %v72, 0.0
  %v1219 = vrot.slane %v1218, 4
  %v1220 = vadd.f32 %v1218, %v1219
  %v1221 = vrot.slane %v1220, 2
  %v1222 = vadd.f32 %v1220, %v1221
  %v1223 = vrot.slane %v1222, 1
  %v1224 = vadd.f32 %v1222, %v1223
  %v1225 = vsel %vm1056, %v73, 0.0
  %v1226 = vrot.slane %v1225, 4
  %v1227 = vadd.f32 %v1225, %v1226
  %v1228 = vrot.slane %v1227, 2
  %v1229 = vadd.f32 %v1227, %v1228
  %v1230 = vrot.slane %v1229, 1
  %v1231 = vadd.f32 %v1229, %v1230
  %v1232 = vsel %vm1056, %v74, 0.0
  %v1233 = vrot.slane %v1232, 4
  %v1234 = vadd.f32 %v1232, %v1233
  %v1235 = vrot.slane %v1234, 2
  %v1236 = vadd.f32 %v1234, %v1235
  %v1237 = vrot.slane %v1236, 1
  %v1238 = vadd.f32 %v1236, %v1237
  %v1239 = vsel %vm1056, %v75, 0.0
  %v1240 = vrot.slane %v1239, 4
  %v1241 = vadd.f32 %v1239, %v1240
  %v1242 = vrot.slane %v1241, 2
  %v1243 = vadd.f32 %v1241, %v1242
  %v1244 = vrot.slane %v1243, 1
  %v1245 = vadd.f32 %v1243, %v1244
  %v1246 = vsel %vm1056, %v76, 0.0
  %v1247 = vrot.slane %v1246, 4
  %v1248 = vadd.f32 %v1246, %v1247
  %v1249 = vrot.slane %v1248, 2
  %v1250 = vadd.f32 %v1248, %v1249
  %v1251 = vrot.slane %v1250, 1
  %v1252 = vadd.f32 %v1250, %v1251
  %v1253 = vsel %vm1056, %v77, 0.0
  %v1254 = vrot.slane %v1253, 4
  %v1255 = vadd.f32 %v1253, %v1254
  %v1256 = vrot.slane %v1255, 2
  %v1257 = vadd.f32 %v1255, %v1256
  %v1258 = vrot.slane %v1257, 1
  %v1259 = vadd.f32 %v1257, %v1258
  %v1260 = vsel %vm1056, %v78, 0.0
  %v1261 = vrot.slane %v1260, 4
  %v1262 = vadd.f32 %v1260, %v1261
  %v1263 = vrot.slane %v1262, 2
  %v1264 = vadd.f32 %v1262, %v1263
  %v1265 = vrot.slane %v1264, 1
  %v1266 = vadd.f32 %v1264, %v1265
  %v1267 = vsel %vm1056, %v79, 0.0
  %v1268 = vrot.slane %v1267, 4
  %v1269 = vadd.f32 %v1267, %v1268
  %v1270 = vrot.slane %v1269, 2
  %v1271 = vadd.f32 %v1269, %v1270
  %v1272 = vrot.slane %v1271, 1
  %v1273 = vadd.f32 %v1271, %v1272
  %v1274 = vsel %vm1056, %v80, 0.0
  %v1275 = vrot.slane %v1274, 4
  %v1276 = vadd.f32 %v1274, %v1275
  %v1277 = vrot.slane %v1276, 2
  %v1278 = vadd.f32 %v1276, %v1277
  %v1279 = vrot.slane %v1278, 1
  %v1280 = vadd.f32 %v1278, %v1279
  %v1281 = vsel %vm1056, %v81, 0.0
  %v1282 = vrot.slane %v1281, 4
  %v1283 = vadd.f32 %v1281, %v1282
  %v1284 = vrot.slane %v1283, 2
  %v1285 = vadd.f32 %v1283, %v1284
  %v1286 = vrot.slane %v1285, 1
  %v1287 = vadd.f32 %v1285, %v1286
  %v1288 = vsel %vm1056, %v82, 0.0
  %v1289 = vrot.slane %v1288, 4
  %v1290 = vadd.f32 %v1288, %v1289
  %v1291 = vrot.slane %v1290, 2
  %v1292 = vadd.f32 %v1290, %v1291
  %v1293 = vrot.slane %v1292, 1
  %v1294 = vadd.f32 %v1292, %v1293
  %v1295 = vsel %vm1056, %v83, 0.0
  %v1296 = vrot.slane %v1295, 4
  %v1297 = vadd.f32 %v1295, %v1296
  %v1298 = vrot.slane %v1297, 2
  %v1299 = vadd.f32 %v1297, %v1298
  %v1300 = vrot.slane %v1299, 1
  %v1301 = vadd.f32 %v1299, %v1300
  %v1302 = vsel %vm1056, %v84, 0.0
  %v1303 = vrot.slane %v1302, 4
  %v1304 = vadd.f32 %v1302, %v1303
  %v1305 = vrot.slane %v1304, 2
  %v1306 = vadd.f32 %v1304, %v1305
  %v1307 = vrot.slane %v1306, 1
  %v1308 = vadd.f32 %v1306, %v1307
  %v1309 = vsel %vm1056, %v85, 0.0
  %v1310 = vrot.slane %v1309, 4
  %v1311 = vadd.f32 %v1309, %v1310
  %v1312 = vrot.slane %v1311, 2
  %v1313 = vadd.f32 %v1311, %v1312
  %v1314 = vrot.slane %v1313, 1
  %v1315 = vadd.f32 %v1313, %v1314
  %v1316 = vsel %vm1056, %v86, 0.0
  %v1317 = vrot.slane %v1316, 4
  %v1318 = vadd.f32 %v1316, %v1317
  %v1319 = vrot.slane %v1318, 2
  %v1320 = vadd.f32 %v1318, %v1319
  %v1321 = vrot.slane %v1320, 1
  %v1322 = vadd.f32 %v1320, %v1321
  %v1323 = vsel %vm1056, %v87, 0.0
  %v1324 = vrot.slane %v1323, 4
  %v1325 = vadd.f32 %v1323, %v1324
  %v1326 = vrot.slane %v1325, 2
  %v1327 = vadd.f32 %v1325, %v1326
  %v1328 = vrot.slane %v1327, 1
  %v1329 = vadd.f32 %v1327, %v1328
  %v1330 = vsel %vm1056, %v88, 0.0
  %v1331 = vrot.slane %v1330, 4
  %v1332 = vadd.f32 %v1330, %v1331
  %v1333 = vrot.slane %v1332, 2
  %v1334 = vadd.f32 %v1332, %v1333
  %v1335 = vrot.slane %v1334, 1
  %v1336 = vadd.f32 %v1334, %v1335
  %v1337 = vsel %vm1056, %v89, 0.0
  %v1338 = vrot.slane %v1337, 4
  %v1339 = vadd.f32 %v1337, %v1338
  %v1340 = vrot.slane %v1339, 2
  %v1341 = vadd.f32 %v1339, %v1340
  %v1342 = vrot.slane %v1341, 1
  %v1343 = vadd.f32 %v1341, %v1342
  %v1344 = vsel %vm1056, %v90, 0.0
  %v1345 = vrot.slane %v1344, 4
  %v1346 = vadd.f32 %v1344, %v1345
  %v1347 = vrot.slane %v1346, 2
  %v1348 = vadd.f32 %v1346, %v1347
  %v1349 = vrot.slane %v1348, 1
  %v1350 = vadd.f32 %v1348, %v1349
  %v1351 = vsel %vm1056, %v91, 0.0
  %v1352 = vrot.slane %v1351, 4
  %v1353 = vadd.f32 %v1351, %v1352
  %v1354 = vrot.slane %v1353, 2
  %v1355 = vadd.f32 %v1353, %v1354
  %v1356 = vrot.slane %v1355, 1
  %v1357 = vadd.f32 %v1355, %v1356
  %v1358 = vsel %vm1056, %v92, 0.0
  %v1359 = vrot.slane %v1358, 4
  %v1360 = vadd.f32 %v1358, %v1359
  %v1361 = vrot.slane %v1360, 2
  %v1362 = vadd.f32 %v1360, %v1361
  %v1363 = vrot.slane %v1362, 1
  %v1364 = vadd.f32 %v1362, %v1363
  %v1365 = vsel %vm1056, %v93, 0.0
  %v1366 = vrot.slane %v1365, 4
  %v1367 = vadd.f32 %v1365, %v1366
  %v1368 = vrot.slane %v1367, 2
  %v1369 = vadd.f32 %v1367, %v1368
  %v1370 = vrot.slane %v1369, 1
  %v1371 = vadd.f32 %v1369, %v1370
  %v1372 = vsel %vm1056, %v94, 0.0
  %v1373 = vrot.slane %v1372, 4
  %v1374 = vadd.f32 %v1372, %v1373
  %v1375 = vrot.slane %v1374, 2
  %v1376 = vadd.f32 %v1374, %v1375
  %v1377 = vrot.slane %v1376, 1
  %v1378 = vadd.f32 %v1376, %v1377
  %v1379 = vsel %vm1056, %v95, 0.0
  %v1380 = vrot.slane %v1379, 4
  %v1381 = vadd.f32 %v1379, %v1380
  %v1382 = vrot.slane %v1381, 2
  %v1383 = vadd.f32 %v1381, %v1382
  %v1384 = vrot.slane %v1383, 1
  %v1385 = vadd.f32 %v1383, %v1384
  %v1386 = vsel %vm1056, %v96, 0.0
  %v1387 = vrot.slane %v1386, 4
  %v1388 = vadd.f32 %v1386, %v1387
  %v1389 = vrot.slane %v1388, 2
  %v1390 = vadd.f32 %v1388, %v1389
  %v1391 = vrot.slane %v1390, 1
  %v1392 = vadd.f32 %v1390, %v1391
  %v1393 = vsel %vm1056, %v97, 0.0
  %v1394 = vrot.slane %v1393, 4
  %v1395 = vadd.f32 %v1393, %v1394
  %v1396 = vrot.slane %v1395, 2
  %v1397 = vadd.f32 %v1395, %v1396
  %v1398 = vrot.slane %v1397, 1
  %v1399 = vadd.f32 %v1397, %v1398
  %v1400 = vsel %vm1056, %v98, 0.0
  %v1401 = vrot.slane %v1400, 4
  %v1402 = vadd.f32 %v1400, %v1401
  %v1403 = vrot.slane %v1402, 2
  %v1404 = vadd.f32 %v1402, %v1403
  %v1405 = vrot.slane %v1404, 1
  %v1406 = vadd.f32 %v1404, %v1405
  %v1407 = vsel %vm1056, %v99, 0.0
  %v1408 = vrot.slane %v1407, 4
  %v1409 = vadd.f32 %v1407, %v1408
  %v1410 = vrot.slane %v1409, 2
  %v1411 = vadd.f32 %v1409, %v1410
  %v1412 = vrot.slane %v1411, 1
  %v1413 = vadd.f32 %v1411, %v1412
  %v1414 = vsel %vm1056, %v100, 0.0
  %v1415 = vrot.slane %v1414, 4
  %v1416 = vadd.f32 %v1414, %v1415
  %v1417 = vrot.slane %v1416, 2
  %v1418 = vadd.f32 %v1416, %v1417
  %v1419 = vrot.slane %v1418, 1
  %v1420 = vadd.f32 %v1418, %v1419
  %v1421 = vsel %vm1056, %v101, 0.0
  %v1422 = vrot.slane %v1421, 4
  %v1423 = vadd.f32 %v1421, %v1422
  %v1424 = vrot.slane %v1423, 2
  %v1425 = vadd.f32 %v1423, %v1424
  %v1426 = vrot.slane %v1425, 1
  %v1427 = vadd.f32 %v1425, %v1426
  %v1428 = vsel %vm1056, %v102, 0.0
  %v1429 = vrot.slane %v1428, 4
  %v1430 = vadd.f32 %v1428, %v1429
  %v1431 = vrot.slane %v1430, 2
  %v1432 = vadd.f32 %v1430, %v1431
  %v1433 = vrot.slane %v1432, 1
  %v1434 = vadd.f32 %v1432, %v1433
  %v1435 = vsel %vm1056, %v103, 0.0
  %v1436 = vrot.slane %v1435, 4
  %v1437 = vadd.f32 %v1435, %v1436
  %v1438 = vrot.slane %v1437, 2
  %v1439 = vadd.f32 %v1437, %v1438
  %v1440 = vrot.slane %v1439, 1
  %v1441 = vadd.f32 %v1439, %v1440
  %v1442 = vsel %vm1056, %v104, 0.0
  %v1443 = vrot.slane %v1442, 4
  %v1444 = vadd.f32 %v1442, %v1443
  %v1445 = vrot.slane %v1444, 2
  %v1446 = vadd.f32 %v1444, %v1445
  %v1447 = vrot.slane %v1446, 1
  %v1448 = vadd.f32 %v1446, %v1447
  %v1449 = vsel %vm1056, %v105, 0.0
  %v1450 = vrot.slane %v1449, 4
  %v1451 = vadd.f32 %v1449, %v1450
  %v1452 = vrot.slane %v1451, 2
  %v1453 = vadd.f32 %v1451, %v1452
  %v1454 = vrot.slane %v1453, 1
  %v1455 = vadd.f32 %v1453, %v1454
  %v1456 = vsel %vm1056, %v106, 0.0
  %v1457 = vrot.slane %v1456, 4
  %v1458 = vadd.f32 %v1456, %v1457
  %v1459 = vrot.slane %v1458, 2
  %v1460 = vadd.f32 %v1458, %v1459
  %v1461 = vrot.slane %v1460, 1
  %v1462 = vadd.f32 %v1460, %v1461
  %v1463 = vsel %vm1056, %v107, 0.0
  %v1464 = vrot.slane %v1463, 4
  %v1465 = vadd.f32 %v1463, %v1464
  %v1466 = vrot.slane %v1465, 2
  %v1467 = vadd.f32 %v1465, %v1466
  %v1468 = vrot.slane %v1467, 1
  %v1469 = vadd.f32 %v1467, %v1468
  %v1470 = vsel %vm1056, %v108, 0.0
  %v1471 = vrot.slane %v1470, 4
  %v1472 = vadd.f32 %v1470, %v1471
  %v1473 = vrot.slane %v1472, 2
  %v1474 = vadd.f32 %v1472, %v1473
  %v1475 = vrot.slane %v1474, 1
  %v1476 = vadd.f32 %v1474, %v1475
  %v1477 = vadd.f32 %v1063, 0.0001
  %v1478 = vadd.f32 %v1070, 0.0001
  %v1479 = vadd.f32 %v1077, 0.0001
  %v1480 = vadd.f32 %v1084, 0.0001
  %v1481 = vadd.f32 %v1091, 0.0001
  %v1482 = vadd.f32 %v1098, 0.0001
  %v1483 = vadd.f32 %v1105, 0.0001
  %v1484 = vadd.f32 %v1112, 0.0001
  %v1485 = vadd.f32 %v1119, 0.0001
  %v1486 = vadd.f32 %v1126, 0.0001
  %v1487 = vadd.f32 %v1133, 0.0001
  %v1488 = vadd.f32 %v1140, 0.0001
  %v1489 = vadd.f32 %v1147, 0.0001
  %v1490 = vadd.f32 %v1154, 0.0001
  %v1491 = vadd.f32 %v1161, 0.0001
  %v1492 = vadd.f32 %v1168, 0.0001
  %v1493 = vadd.f32 %v1175, 0.0001
  %v1494 = vadd.f32 %v1182, 0.0001
  %v1495 = vadd.f32 %v1189, 0.0001
  %v1496 = vadd.f32 %v1196, 0.0001
  %v1497 = vadd.f32 %v1203, 0.0001
  %v1498 = vadd.f32 %v1210, 0.0001
  %v1499 = vadd.f32 %v1217, 0.0001
  %v1500 = vadd.f32 %v1224, 0.0001
  %v1501 = vadd.f32 %v1231, 0.0001
  %v1502 = vadd.f32 %v1238, 0.0001
  %v1503 = vadd.f32 %v1245, 0.0001
  %v1504 = vadd.f32 %v1252, 0.0001
  %v1505 = vadd.f32 %v1259, 0.0001
  %v1506 = vadd.f32 %v1266, 0.0001
  %v1507 = vadd.f32 %v1273, 0.0001
  %v1508 = vadd.f32 %v1280, 0.0001
  %v1509 = vadd.f32 %v1287, 0.0001
  %v1510 = vadd.f32 %v1294, 0.0001
  %v1511 = vadd.f32 %v1301, 0.0001
  %v1512 = vadd.f32 %v1308, 0.0001
  %v1513 = vadd.f32 %v1315, 0.0001
  %v1514 = vadd.f32 %v1322, 0.0001
  %v1515 = vadd.f32 %v1329, 0.0001
  %v1516 = vadd.f32 %v1336, 0.0001
  %v1517 = vadd.f32 %v1343, 0.0001
  %v1518 = vadd.f32 %v1350, 0.0001
  %v1519 = vadd.f32 %v1357, 0.0001
  %v1520 = vadd.f32 %v1364, 0.0001
  %v1521 = vadd.f32 %v1371, 0.0001
  %v1522 = vadd.f32 %v1378, 0.0001
  %v1523 = vadd.f32 %v1385, 0.0001
  %v1524 = vadd.f32 %v1392, 0.0001
  %v1525 = vadd.f32 %v1399, 0.0001
  %v1526 = vadd.f32 %v1406, 0.0001
  %v1527 = vadd.f32 %v1413, 0.0001
  %v1528 = vadd.f32 %v1420, 0.0001
  %v1529 = vadd.f32 %v1427, 0.0001
  %v1530 = vadd.f32 %v1434, 0.0001
  %v1531 = vadd.f32 %v1441, 0.0001
  %v1532 = vadd.f32 %v1448, 0.0001
  %v1533 = vadd.f32 %v1455, 0.0001
  %v1534 = vadd.f32 %v1462, 0.0001
  %v1535 = vadd.f32 %v1469, 0.0001
  %v1536 = vadd.f32 %v1476, 0.0001
  %1538 = vset.pattern.permute.xlu0 64
  %1539 = vperm.xlu0 %1538, %v1477
  %v1540 = vpop.permute.xlu0 %1539
  %1543 = vset.pattern.permute.xlu0 64
  %1544 = vperm.xlu0 %1543, %v1478
  %v1545 = vpop.permute.xlu0 %1544
  %1548 = vset.pattern.permute.xlu0 64
  %1549 = vperm.xlu0 %1548, %v1479
  %v1550 = vpop.permute.xlu0 %1549
  %1553 = vset.pattern.permute.xlu0 64
  %1554 = vperm.xlu0 %1553, %v1480
  %v1555 = vpop.permute.xlu0 %1554
  %1558 = vset.pattern.permute.xlu0 64
  %1559 = vperm.xlu0 %1558, %v1481
  %v1560 = vpop.permute.xlu0 %1559
  %1563 = vset.pattern.permute.xlu0 64
  %1564 = vperm.xlu0 %1563, %v1482
  %v1565 = vpop.permute.xlu0 %1564
  %1568 = vset.pattern.permute.xlu0 64
  %1569 = vperm.xlu0 %1568, %v1483
  %v1570 = vpop.permute.xlu0 %1569
  %1573 = vset.pattern.permute.xlu0 64
  %1574 = vperm.xlu0 %1573, %v1484
  %v1575 = vpop.permute.xlu0 %1574
  %1578 = vset.pattern.permute.xlu0 64
  %1579 = vperm.xlu0 %1578, %v1485
  %v1580 = vpop.permute.xlu0 %1579
  %1583 = vset.pattern.permute.xlu0 64
  %1584 = vperm.xlu0 %1583, %v1486
  %v1585 = vpop.permute.xlu0 %1584
  %1588 = vset.pattern.permute.xlu0 64
  %1589 = vperm.xlu0 %1588, %v1487
  %v1590 = vpop.permute.xlu0 %1589
  %1593 = vset.pattern.permute.xlu0 64
  %1594 = vperm.xlu0 %1593, %v1488
  %v1595 = vpop.permute.xlu0 %1594
  %1598 = vset.pattern.permute.xlu0 64
  %1599 = vperm.xlu0 %1598, %v1489
  %v1600 = vpop.permute.xlu0 %1599
  %1603 = vset.pattern.permute.xlu0 64
  %1604 = vperm.xlu0 %1603, %v1490
  %v1605 = vpop.permute.xlu0 %1604
  %1608 = vset.pattern.permute.xlu0 64
  %1609 = vperm.xlu0 %1608, %v1491
  %v1610 = vpop.permute.xlu0 %1609
  %1613 = vset.pattern.permute.xlu0 64
  %1614 = vperm.xlu0 %1613, %v1492
  %v1615 = vpop.permute.xlu0 %1614
  %1618 = vset.pattern.permute.xlu0 64
  %1619 = vperm.xlu0 %1618, %v1493
  %v1620 = vpop.permute.xlu0 %1619
  %1623 = vset.pattern.permute.xlu0 64
  %1624 = vperm.xlu0 %1623, %v1494
  %v1625 = vpop.permute.xlu0 %1624
  %1628 = vset.pattern.permute.xlu0 64
  %1629 = vperm.xlu0 %1628, %v1495
  %v1630 = vpop.permute.xlu0 %1629
  %1633 = vset.pattern.permute.xlu0 64
  %1634 = vperm.xlu0 %1633, %v1496
  %v1635 = vpop.permute.xlu0 %1634
  %1638 = vset.pattern.permute.xlu0 64
  %1639 = vperm.xlu0 %1638, %v1497
  %v1640 = vpop.permute.xlu0 %1639
  %1643 = vset.pattern.permute.xlu0 64
  %1644 = vperm.xlu0 %1643, %v1498
  %v1645 = vpop.permute.xlu0 %1644
  %1648 = vset.pattern.permute.xlu0 64
  %1649 = vperm.xlu0 %1648, %v1499
  %v1650 = vpop.permute.xlu0 %1649
  %1653 = vset.pattern.permute.xlu0 64
  %1654 = vperm.xlu0 %1653, %v1500
  %v1655 = vpop.permute.xlu0 %1654
  %1658 = vset.pattern.permute.xlu0 64
  %1659 = vperm.xlu0 %1658, %v1501
  %v1660 = vpop.permute.xlu0 %1659
  %1663 = vset.pattern.permute.xlu0 64
  %1664 = vperm.xlu0 %1663, %v1502
  %v1665 = vpop.permute.xlu0 %1664
  %1668 = vset.pattern.permute.xlu0 64
  %1669 = vperm.xlu0 %1668, %v1503
  %v1670 = vpop.permute.xlu0 %1669
  %1673 = vset.pattern.permute.xlu0 64
  %1674 = vperm.xlu0 %1673, %v1504
  %v1675 = vpop.permute.xlu0 %1674
  %1678 = vset.pattern.permute.xlu0 64
  %1679 = vperm.xlu0 %1678, %v1505
  %v1680 = vpop.permute.xlu0 %1679
  %1683 = vset.pattern.permute.xlu0 64
  %1684 = vperm.xlu0 %1683, %v1506
  %v1685 = vpop.permute.xlu0 %1684
  %1688 = vset.pattern.permute.xlu0 64
  %1689 = vperm.xlu0 %1688, %v1507
  %v1690 = vpop.permute.xlu0 %1689
  %1693 = vset.pattern.permute.xlu0 64
  %1694 = vperm.xlu0 %1693, %v1508
  %v1695 = vpop.permute.xlu0 %1694
  %1698 = vset.pattern.permute.xlu0 64
  %1699 = vperm.xlu0 %1698, %v1509
  %v1700 = vpop.permute.xlu0 %1699
  %1703 = vset.pattern.permute.xlu0 64
  %1704 = vperm.xlu0 %1703, %v1510
  %v1705 = vpop.permute.xlu0 %1704
  %1708 = vset.pattern.permute.xlu0 64
  %1709 = vperm.xlu0 %1708, %v1511
  %v1710 = vpop.permute.xlu0 %1709
  %1713 = vset.pattern.permute.xlu0 64
  %1714 = vperm.xlu0 %1713, %v1512
  %v1715 = vpop.permute.xlu0 %1714
  %1718 = vset.pattern.permute.xlu0 64
  %1719 = vperm.xlu0 %1718, %v1513
  %v1720 = vpop.permute.xlu0 %1719
  %1723 = vset.pattern.permute.xlu0 64
  %1724 = vperm.xlu0 %1723, %v1514
  %v1725 = vpop.permute.xlu0 %1724
  %1728 = vset.pattern.permute.xlu0 64
  %1729 = vperm.xlu0 %1728, %v1515
  %v1730 = vpop.permute.xlu0 %1729
  %1733 = vset.pattern.permute.xlu0 64
  %1734 = vperm.xlu0 %1733, %v1516
  %v1735 = vpop.permute.xlu0 %1734
  %1738 = vset.pattern.permute.xlu0 64
  %1739 = vperm.xlu0 %1738, %v1517
  %v1740 = vpop.permute.xlu0 %1739
  %1743 = vset.pattern.permute.xlu0 64
  %1744 = vperm.xlu0 %1743, %v1518
  %v1745 = vpop.permute.xlu0 %1744
  %1748 = vset.pattern.permute.xlu0 64
  %1749 = vperm.xlu0 %1748, %v1519
  %v1750 = vpop.permute.xlu0 %1749
  %1753 = vset.pattern.permute.xlu0 64
  %1754 = vperm.xlu0 %1753, %v1520
  %v1755 = vpop.permute.xlu0 %1754
  %1758 = vset.pattern.permute.xlu0 64
  %1759 = vperm.xlu0 %1758, %v1521
  %v1760 = vpop.permute.xlu0 %1759
  %1763 = vset.pattern.permute.xlu0 64
  %1764 = vperm.xlu0 %1763, %v1522
  %v1765 = vpop.permute.xlu0 %1764
  %1768 = vset.pattern.permute.xlu0 64
  %1769 = vperm.xlu0 %1768, %v1523
  %v1770 = vpop.permute.xlu0 %1769
  %1773 = vset.pattern.permute.xlu0 64
  %1774 = vperm.xlu0 %1773, %v1524
  %v1775 = vpop.permute.xlu0 %1774
  %1778 = vset.pattern.permute.xlu0 64
  %1779 = vperm.xlu0 %1778, %v1525
  %v1780 = vpop.permute.xlu0 %1779
  %1783 = vset.pattern.permute.xlu0 64
  %1784 = vperm.xlu0 %1783, %v1526
  %v1785 = vpop.permute.xlu0 %1784
  %1788 = vset.pattern.permute.xlu0 64
  %1789 = vperm.xlu0 %1788, %v1527
  %v1790 = vpop.permute.xlu0 %1789
  %1793 = vset.pattern.permute.xlu0 64
  %1794 = vperm.xlu0 %1793, %v1528
  %v1795 = vpop.permute.xlu0 %1794
  %1798 = vset.pattern.permute.xlu0 64
  %1799 = vperm.xlu0 %1798, %v1529
  %v1800 = vpop.permute.xlu0 %1799
  %1803 = vset.pattern.permute.xlu0 64
  %1804 = vperm.xlu0 %1803, %v1530
  %v1805 = vpop.permute.xlu0 %1804
  %1808 = vset.pattern.permute.xlu0 64
  %1809 = vperm.xlu0 %1808, %v1531
  %v1810 = vpop.permute.xlu0 %1809
  %1813 = vset.pattern.permute.xlu0 64
  %1814 = vperm.xlu0 %1813, %v1532
  %v1815 = vpop.permute.xlu0 %1814
  %1818 = vset.pattern.permute.xlu0 64
  %1819 = vperm.xlu0 %1818, %v1533
  %v1820 = vpop.permute.xlu0 %1819
  %1823 = vset.pattern.permute.xlu0 64
  %1824 = vperm.xlu0 %1823, %v1534
  %v1825 = vpop.permute.xlu0 %1824
  %1828 = vset.pattern.permute.xlu0 64
  %1829 = vperm.xlu0 %1828, %v1535
  %v1830 = vpop.permute.xlu0 %1829
  %1833 = vset.pattern.permute.xlu0 64
  %1834 = vperm.xlu0 %1833, %v1536
  %v1835 = vpop.permute.xlu0 %1834
  %v1837 = vrcp.pop %v1540
  %v1838 = vmul.f32 %v1540, %v1837
  %v1839 = vsub.f32 1.0, %v1838
  %v1840 = vmul.f32 %v1837, %v1839
  %v1841 = vadd.f32 %v1837, %v1840
  %vm1842 = vweird.f32 %v1540
  %vm1843 = vweird.f32 %v1837
  %vm1844 = vmor %vm1842, %vm1843
  %v1845 = vsel %vm1844, %v1837, %v1841
  %v1846 = vand.u32 2147483647, %v1540
  %vm1847 = vcmp.eq.f32.partialorder %v1846, 8.507059e+37
  %v1848 = vand.u32 %v1540, 2147483648
  %v1849 = vor.u32 1.1754944e-38, %v1848
  %v1850 = vsel %vm1847, %v1849, %v1845
  %v1851 = vmul.f32 %v642, %v1850
  %v1852 = vrcp.pop %v1545
  %v1853 = vmul.f32 %v1545, %v1852
  %v1854 = vsub.f32 1.0, %v1853
  %v1855 = vmul.f32 %v1852, %v1854
  %v1856 = vadd.f32 %v1852, %v1855
  %vm1857 = vweird.f32 %v1545
  %vm1858 = vweird.f32 %v1852
  %vm1859 = vmor %vm1857, %vm1858
  %v1860 = vsel %vm1859, %v1852, %v1856
  %v1861 = vand.u32 2147483647, %v1545
  %vm1862 = vcmp.eq.f32.partialorder %v1861, 8.507059e+37
  %v1863 = vand.u32 %v1545, 2147483648
  %v1864 = vor.u32 1.1754944e-38, %v1863
  %v1865 = vsel %vm1862, %v1864, %v1860
  %v1866 = vmul.f32 %v649, %v1865
  %v1867 = vrcp.pop %v1550
  %v1868 = vmul.f32 %v1550, %v1867
  %v1869 = vsub.f32 1.0, %v1868
  %v1870 = vmul.f32 %v1867, %v1869
  %v1871 = vadd.f32 %v1867, %v1870
  %vm1872 = vweird.f32 %v1550
  %vm1873 = vweird.f32 %v1867
  %vm1874 = vmor %vm1872, %vm1873
  %v1875 = vsel %vm1874, %v1867, %v1871
  %v1876 = vand.u32 2147483647, %v1550
  %vm1877 = vcmp.eq.f32.partialorder %v1876, 8.507059e+37
  %v1878 = vand.u32 %v1550, 2147483648
  %v1879 = vor.u32 1.1754944e-38, %v1878
  %v1880 = vsel %vm1877, %v1879, %v1875
  %v1881 = vmul.f32 %v656, %v1880
  %v1882 = vrcp.pop %v1555
  %v1883 = vmul.f32 %v1555, %v1882
  %v1884 = vsub.f32 1.0, %v1883
  %v1885 = vmul.f32 %v1882, %v1884
  %v1886 = vadd.f32 %v1882, %v1885
  %vm1887 = vweird.f32 %v1555
  %vm1888 = vweird.f32 %v1882
  %vm1889 = vmor %vm1887, %vm1888
  %v1890 = vsel %vm1889, %v1882, %v1886
  %v1891 = vand.u32 2147483647, %v1555
  %vm1892 = vcmp.eq.f32.partialorder %v1891, 8.507059e+37
  %v1893 = vand.u32 %v1555, 2147483648
  %v1894 = vor.u32 1.1754944e-38, %v1893
  %v1895 = vsel %vm1892, %v1894, %v1890
  %v1896 = vmul.f32 %v663, %v1895
  %v1897 = vrcp.pop %v1560
  %v1898 = vmul.f32 %v1560, %v1897
  %v1899 = vsub.f32 1.0, %v1898
  %v1900 = vmul.f32 %v1897, %v1899
  %v1901 = vadd.f32 %v1897, %v1900
  %vm1902 = vweird.f32 %v1560
  %vm1903 = vweird.f32 %v1897
  %vm1904 = vmor %vm1902, %vm1903
  %v1905 = vsel %vm1904, %v1897, %v1901
  %v1906 = vand.u32 2147483647, %v1560
  %vm1907 = vcmp.eq.f32.partialorder %v1906, 8.507059e+37
  %v1908 = vand.u32 %v1560, 2147483648
  %v1909 = vor.u32 1.1754944e-38, %v1908
  %v1910 = vsel %vm1907, %v1909, %v1905
  %v1911 = vmul.f32 %v670, %v1910
  %v1912 = vrcp.pop %v1565
  %v1913 = vmul.f32 %v1565, %v1912
  %v1914 = vsub.f32 1.0, %v1913
  %v1915 = vmul.f32 %v1912, %v1914
  %v1916 = vadd.f32 %v1912, %v1915
  %vm1917 = vweird.f32 %v1565
  %vm1918 = vweird.f32 %v1912
  %vm1919 = vmor %vm1917, %vm1918
  %v1920 = vsel %vm1919, %v1912, %v1916
  %v1921 = vand.u32 2147483647, %v1565
  %vm1922 = vcmp.eq.f32.partialorder %v1921, 8.507059e+37
  %v1923 = vand.u32 %v1565, 2147483648
  %v1924 = vor.u32 1.1754944e-38, %v1923
  %v1925 = vsel %vm1922, %v1924, %v1920
  %v1926 = vmul.f32 %v677, %v1925
  %v1927 = vrcp.pop %v1570
  %v1928 = vmul.f32 %v1570, %v1927
  %v1929 = vsub.f32 1.0, %v1928
  %v1930 = vmul.f32 %v1927, %v1929
  %v1931 = vadd.f32 %v1927, %v1930
  %vm1932 = vweird.f32 %v1570
  %vm1933 = vweird.f32 %v1927
  %vm1934 = vmor %vm1932, %vm1933
  %v1935 = vsel %vm1934, %v1927, %v1931
  %v1936 = vand.u32 2147483647, %v1570
  %vm1937 = vcmp.eq.f32.partialorder %v1936, 8.507059e+37
  %v1938 = vand.u32 %v1570, 2147483648
  %v1939 = vor.u32 1.1754944e-38, %v1938
  %v1940 = vsel %vm1937, %v1939, %v1935
  %v1941 = vmul.f32 %v684, %v1940
  %v1942 = vrcp.pop %v1575
  %v1943 = vmul.f32 %v1575, %v1942
  %v1944 = vsub.f32 1.0, %v1943
  %v1945 = vmul.f32 %v1942, %v1944
  %v1946 = vadd.f32 %v1942, %v1945
  %vm1947 = vweird.f32 %v1575
  %vm1948 = vweird.f32 %v1942
  %vm1949 = vmor %vm1947, %vm1948
  %v1950 = vsel %vm1949, %v1942, %v1946
  %v1951 = vand.u32 2147483647, %v1575
  %vm1952 = vcmp.eq.f32.partialorder %v1951, 8.507059e+37
  %v1953 = vand.u32 %v1575, 2147483648
  %v1954 = vor.u32 1.1754944e-38, %v1953
  %v1955 = vsel %vm1952, %v1954, %v1950
  %v1956 = vmul.f32 %v691, %v1955
  %v1957 = vrcp.pop %v1580
  %v1958 = vmul.f32 %v1580, %v1957
  %v1959 = vsub.f32 1.0, %v1958
  %v1960 = vmul.f32 %v1957, %v1959
  %v1961 = vadd.f32 %v1957, %v1960
  %vm1962 = vweird.f32 %v1580
  %vm1963 = vweird.f32 %v1957
  %vm1964 = vmor %vm1962, %vm1963
  %v1965 = vsel %vm1964, %v1957, %v1961
  %v1966 = vand.u32 2147483647, %v1580
  %vm1967 = vcmp.eq.f32.partialorder %v1966, 8.507059e+37
  %v1968 = vand.u32 %v1580, 2147483648
  %v1969 = vor.u32 1.1754944e-38, %v1968
  %v1970 = vsel %vm1967, %v1969, %v1965
  %v1971 = vmul.f32 %v698, %v1970
  %v1972 = vrcp.pop %v1585
  %v1973 = vmul.f32 %v1585, %v1972
  %v1974 = vsub.f32 1.0, %v1973
  %v1975 = vmul.f32 %v1972, %v1974
  %v1976 = vadd.f32 %v1972, %v1975
  %vm1977 = vweird.f32 %v1585
  %vm1978 = vweird.f32 %v1972
  %vm1979 = vmor %vm1977, %vm1978
  %v1980 = vsel %vm1979, %v1972, %v1976
  %v1981 = vand.u32 2147483647, %v1585
  %vm1982 = vcmp.eq.f32.partialorder %v1981, 8.507059e+37
  %v1983 = vand.u32 %v1585, 2147483648
  %v1984 = vor.u32 1.1754944e-38, %v1983
  %v1985 = vsel %vm1982, %v1984, %v1980
  %v1986 = vmul.f32 %v705, %v1985
  %v1987 = vrcp.pop %v1590
  %v1988 = vmul.f32 %v1590, %v1987
  %v1989 = vsub.f32 1.0, %v1988
  %v1990 = vmul.f32 %v1987, %v1989
  %v1991 = vadd.f32 %v1987, %v1990
  %vm1992 = vweird.f32 %v1590
  %vm1993 = vweird.f32 %v1987
  %vm1994 = vmor %vm1992, %vm1993
  %v1995 = vsel %vm1994, %v1987, %v1991
  %v1996 = vand.u32 2147483647, %v1590
  %vm1997 = vcmp.eq.f32.partialorder %v1996, 8.507059e+37
  %v1998 = vand.u32 %v1590, 2147483648
  %v1999 = vor.u32 1.1754944e-38, %v1998
  %v2000 = vsel %vm1997, %v1999, %v1995
  %v2001 = vmul.f32 %v712, %v2000
  %v2002 = vrcp.pop %v1595
  %v2003 = vmul.f32 %v1595, %v2002
  %v2004 = vsub.f32 1.0, %v2003
  %v2005 = vmul.f32 %v2002, %v2004
  %v2006 = vadd.f32 %v2002, %v2005
  %vm2007 = vweird.f32 %v1595
  %vm2008 = vweird.f32 %v2002
  %vm2009 = vmor %vm2007, %vm2008
  %v2010 = vsel %vm2009, %v2002, %v2006
  %v2011 = vand.u32 2147483647, %v1595
  %vm2012 = vcmp.eq.f32.partialorder %v2011, 8.507059e+37
  %v2013 = vand.u32 %v1595, 2147483648
  %v2014 = vor.u32 1.1754944e-38, %v2013
  %v2015 = vsel %vm2012, %v2014, %v2010
  %v2016 = vmul.f32 %v719, %v2015
  %v2017 = vrcp.pop %v1600
  %v2018 = vmul.f32 %v1600, %v2017
  %v2019 = vsub.f32 1.0, %v2018
  %v2020 = vmul.f32 %v2017, %v2019
  %v2021 = vadd.f32 %v2017, %v2020
  %vm2022 = vweird.f32 %v1600
  %vm2023 = vweird.f32 %v2017
  %vm2024 = vmor %vm2022, %vm2023
  %v2025 = vsel %vm2024, %v2017, %v2021
  %v2026 = vand.u32 2147483647, %v1600
  %vm2027 = vcmp.eq.f32.partialorder %v2026, 8.507059e+37
  %v2028 = vand.u32 %v1600, 2147483648
  %v2029 = vor.u32 1.1754944e-38, %v2028
  %v2030 = vsel %vm2027, %v2029, %v2025
  %v2031 = vmul.f32 %v726, %v2030
  %v2032 = vrcp.pop %v1605
  %v2033 = vmul.f32 %v1605, %v2032
  %v2034 = vsub.f32 1.0, %v2033
  %v2035 = vmul.f32 %v2032, %v2034
  %v2036 = vadd.f32 %v2032, %v2035
  %vm2037 = vweird.f32 %v1605
  %vm2038 = vweird.f32 %v2032
  %vm2039 = vmor %vm2037, %vm2038
  %v2040 = vsel %vm2039, %v2032, %v2036
  %v2041 = vand.u32 2147483647, %v1605
  %vm2042 = vcmp.eq.f32.partialorder %v2041, 8.507059e+37
  %v2043 = vand.u32 %v1605, 2147483648
  %v2044 = vor.u32 1.1754944e-38, %v2043
  %v2045 = vsel %vm2042, %v2044, %v2040
  %v2046 = vmul.f32 %v733, %v2045
  %v2047 = vrcp.pop %v1610
  %v2048 = vmul.f32 %v1610, %v2047
  %v2049 = vsub.f32 1.0, %v2048
  %v2050 = vmul.f32 %v2047, %v2049
  %v2051 = vadd.f32 %v2047, %v2050
  %vm2052 = vweird.f32 %v1610
  %vm2053 = vweird.f32 %v2047
  %vm2054 = vmor %vm2052, %vm2053
  %v2055 = vsel %vm2054, %v2047, %v2051
  %v2056 = vand.u32 2147483647, %v1610
  %vm2057 = vcmp.eq.f32.partialorder %v2056, 8.507059e+37
  %v2058 = vand.u32 %v1610, 2147483648
  %v2059 = vor.u32 1.1754944e-38, %v2058
  %v2060 = vsel %vm2057, %v2059, %v2055
  %v2061 = vmul.f32 %v740, %v2060
  %v2062 = vrcp.pop %v1615
  %v2063 = vmul.f32 %v1615, %v2062
  %v2064 = vsub.f32 1.0, %v2063
  %v2065 = vmul.f32 %v2062, %v2064
  %v2066 = vadd.f32 %v2062, %v2065
  %vm2067 = vweird.f32 %v1615
  %vm2068 = vweird.f32 %v2062
  %vm2069 = vmor %vm2067, %vm2068
  %v2070 = vsel %vm2069, %v2062, %v2066
  %v2071 = vand.u32 2147483647, %v1615
  %vm2072 = vcmp.eq.f32.partialorder %v2071, 8.507059e+37
  %v2073 = vand.u32 %v1615, 2147483648
  %v2074 = vor.u32 1.1754944e-38, %v2073
  %v2075 = vsel %vm2072, %v2074, %v2070
  %v2076 = vmul.f32 %v747, %v2075
  %v2077 = vrcp.pop %v1620
  %v2078 = vmul.f32 %v1620, %v2077
  %v2079 = vsub.f32 1.0, %v2078
  %v2080 = vmul.f32 %v2077, %v2079
  %v2081 = vadd.f32 %v2077, %v2080
  %vm2082 = vweird.f32 %v1620
  %vm2083 = vweird.f32 %v2077
  %vm2084 = vmor %vm2082, %vm2083
  %v2085 = vsel %vm2084, %v2077, %v2081
  %v2086 = vand.u32 2147483647, %v1620
  %vm2087 = vcmp.eq.f32.partialorder %v2086, 8.507059e+37
  %v2088 = vand.u32 %v1620, 2147483648
  %v2089 = vor.u32 1.1754944e-38, %v2088
  %v2090 = vsel %vm2087, %v2089, %v2085
  %v2091 = vmul.f32 %v754, %v2090
  %v2092 = vrcp.pop %v1625
  %v2093 = vmul.f32 %v1625, %v2092
  %v2094 = vsub.f32 1.0, %v2093
  %v2095 = vmul.f32 %v2092, %v2094
  %v2096 = vadd.f32 %v2092, %v2095
  %vm2097 = vweird.f32 %v1625
  %vm2098 = vweird.f32 %v2092
  %vm2099 = vmor %vm2097, %vm2098
  %v2100 = vsel %vm2099, %v2092, %v2096
  %v2101 = vand.u32 2147483647, %v1625
  %vm2102 = vcmp.eq.f32.partialorder %v2101, 8.507059e+37
  %v2103 = vand.u32 %v1625, 2147483648
  %v2104 = vor.u32 1.1754944e-38, %v2103
  %v2105 = vsel %vm2102, %v2104, %v2100
  %v2106 = vmul.f32 %v761, %v2105
  %v2107 = vrcp.pop %v1630
  %v2108 = vmul.f32 %v1630, %v2107
  %v2109 = vsub.f32 1.0, %v2108
  %v2110 = vmul.f32 %v2107, %v2109
  %v2111 = vadd.f32 %v2107, %v2110
  %vm2112 = vweird.f32 %v1630
  %vm2113 = vweird.f32 %v2107
  %vm2114 = vmor %vm2112, %vm2113
  %v2115 = vsel %vm2114, %v2107, %v2111
  %v2116 = vand.u32 2147483647, %v1630
  %vm2117 = vcmp.eq.f32.partialorder %v2116, 8.507059e+37
  %v2118 = vand.u32 %v1630, 2147483648
  %v2119 = vor.u32 1.1754944e-38, %v2118
  %v2120 = vsel %vm2117, %v2119, %v2115
  %v2121 = vmul.f32 %v768, %v2120
  %v2122 = vrcp.pop %v1635
  %v2123 = vmul.f32 %v1635, %v2122
  %v2124 = vsub.f32 1.0, %v2123
  %v2125 = vmul.f32 %v2122, %v2124
  %v2126 = vadd.f32 %v2122, %v2125
  %vm2127 = vweird.f32 %v1635
  %vm2128 = vweird.f32 %v2122
  %vm2129 = vmor %vm2127, %vm2128
  %v2130 = vsel %vm2129, %v2122, %v2126
  %v2131 = vand.u32 2147483647, %v1635
  %vm2132 = vcmp.eq.f32.partialorder %v2131, 8.507059e+37
  %v2133 = vand.u32 %v1635, 2147483648
  %v2134 = vor.u32 1.1754944e-38, %v2133
  %v2135 = vsel %vm2132, %v2134, %v2130
  %v2136 = vmul.f32 %v775, %v2135
  %v2137 = vrcp.pop %v1640
  %v2138 = vmul.f32 %v1640, %v2137
  %v2139 = vsub.f32 1.0, %v2138
  %v2140 = vmul.f32 %v2137, %v2139
  %v2141 = vadd.f32 %v2137, %v2140
  %vm2142 = vweird.f32 %v1640
  %vm2143 = vweird.f32 %v2137
  %vm2144 = vmor %vm2142, %vm2143
  %v2145 = vsel %vm2144, %v2137, %v2141
  %v2146 = vand.u32 2147483647, %v1640
  %vm2147 = vcmp.eq.f32.partialorder %v2146, 8.507059e+37
  %v2148 = vand.u32 %v1640, 2147483648
  %v2149 = vor.u32 1.1754944e-38, %v2148
  %v2150 = vsel %vm2147, %v2149, %v2145
  %v2151 = vmul.f32 %v782, %v2150
  %v2152 = vrcp.pop %v1645
  %v2153 = vmul.f32 %v1645, %v2152
  %v2154 = vsub.f32 1.0, %v2153
  %v2155 = vmul.f32 %v2152, %v2154
  %v2156 = vadd.f32 %v2152, %v2155
  %vm2157 = vweird.f32 %v1645
  %vm2158 = vweird.f32 %v2152
  %vm2159 = vmor %vm2157, %vm2158
  %v2160 = vsel %vm2159, %v2152, %v2156
  %v2161 = vand.u32 2147483647, %v1645
  %vm2162 = vcmp.eq.f32.partialorder %v2161, 8.507059e+37
  %v2163 = vand.u32 %v1645, 2147483648
  %v2164 = vor.u32 1.1754944e-38, %v2163
  %v2165 = vsel %vm2162, %v2164, %v2160
  %v2166 = vmul.f32 %v789, %v2165
  %v2167 = vrcp.pop %v1650
  %v2168 = vmul.f32 %v1650, %v2167
  %v2169 = vsub.f32 1.0, %v2168
  %v2170 = vmul.f32 %v2167, %v2169
  %v2171 = vadd.f32 %v2167, %v2170
  %vm2172 = vweird.f32 %v1650
  %vm2173 = vweird.f32 %v2167
  %vm2174 = vmor %vm2172, %vm2173
  %v2175 = vsel %vm2174, %v2167, %v2171
  %v2176 = vand.u32 2147483647, %v1650
  %vm2177 = vcmp.eq.f32.partialorder %v2176, 8.507059e+37
  %v2178 = vand.u32 %v1650, 2147483648
  %v2179 = vor.u32 1.1754944e-38, %v2178
  %v2180 = vsel %vm2177, %v2179, %v2175
  %v2181 = vmul.f32 %v796, %v2180
  %v2182 = vrcp.pop %v1655
  %v2183 = vmul.f32 %v1655, %v2182
  %v2184 = vsub.f32 1.0, %v2183
  %v2185 = vmul.f32 %v2182, %v2184
  %v2186 = vadd.f32 %v2182, %v2185
  %vm2187 = vweird.f32 %v1655
  %vm2188 = vweird.f32 %v2182
  %vm2189 = vmor %vm2187, %vm2188
  %v2190 = vsel %vm2189, %v2182, %v2186
  %v2191 = vand.u32 2147483647, %v1655
  %vm2192 = vcmp.eq.f32.partialorder %v2191, 8.507059e+37
  %v2193 = vand.u32 %v1655, 2147483648
  %v2194 = vor.u32 1.1754944e-38, %v2193
  %v2195 = vsel %vm2192, %v2194, %v2190
  %v2196 = vmul.f32 %v803, %v2195
  %v2197 = vrcp.pop %v1660
  %v2198 = vmul.f32 %v1660, %v2197
  %v2199 = vsub.f32 1.0, %v2198
  %v2200 = vmul.f32 %v2197, %v2199
  %v2201 = vadd.f32 %v2197, %v2200
  %vm2202 = vweird.f32 %v1660
  %vm2203 = vweird.f32 %v2197
  %vm2204 = vmor %vm2202, %vm2203
  %v2205 = vsel %vm2204, %v2197, %v2201
  %v2206 = vand.u32 2147483647, %v1660
  %vm2207 = vcmp.eq.f32.partialorder %v2206, 8.507059e+37
  %v2208 = vand.u32 %v1660, 2147483648
  %v2209 = vor.u32 1.1754944e-38, %v2208
  %v2210 = vsel %vm2207, %v2209, %v2205
  %v2211 = vmul.f32 %v810, %v2210
  %v2212 = vrcp.pop %v1665
  %v2213 = vmul.f32 %v1665, %v2212
  %v2214 = vsub.f32 1.0, %v2213
  %v2215 = vmul.f32 %v2212, %v2214
  %v2216 = vadd.f32 %v2212, %v2215
  %vm2217 = vweird.f32 %v1665
  %vm2218 = vweird.f32 %v2212
  %vm2219 = vmor %vm2217, %vm2218
  %v2220 = vsel %vm2219, %v2212, %v2216
  %v2221 = vand.u32 2147483647, %v1665
  %vm2222 = vcmp.eq.f32.partialorder %v2221, 8.507059e+37
  %v2223 = vand.u32 %v1665, 2147483648
  %v2224 = vor.u32 1.1754944e-38, %v2223
  %v2225 = vsel %vm2222, %v2224, %v2220
  %v2226 = vmul.f32 %v817, %v2225
  %v2227 = vrcp.pop %v1670
  %v2228 = vmul.f32 %v1670, %v2227
  %v2229 = vsub.f32 1.0, %v2228
  %v2230 = vmul.f32 %v2227, %v2229
  %v2231 = vadd.f32 %v2227, %v2230
  %vm2232 = vweird.f32 %v1670
  %vm2233 = vweird.f32 %v2227
  %vm2234 = vmor %vm2232, %vm2233
  %v2235 = vsel %vm2234, %v2227, %v2231
  %v2236 = vand.u32 2147483647, %v1670
  %vm2237 = vcmp.eq.f32.partialorder %v2236, 8.507059e+37
  %v2238 = vand.u32 %v1670, 2147483648
  %v2239 = vor.u32 1.1754944e-38, %v2238
  %v2240 = vsel %vm2237, %v2239, %v2235
  %v2241 = vmul.f32 %v824, %v2240
  %v2242 = vrcp.pop %v1675
  %v2243 = vmul.f32 %v1675, %v2242
  %v2244 = vsub.f32 1.0, %v2243
  %v2245 = vmul.f32 %v2242, %v2244
  %v2246 = vadd.f32 %v2242, %v2245
  %vm2247 = vweird.f32 %v1675
  %vm2248 = vweird.f32 %v2242
  %vm2249 = vmor %vm2247, %vm2248
  %v2250 = vsel %vm2249, %v2242, %v2246
  %v2251 = vand.u32 2147483647, %v1675
  %vm2252 = vcmp.eq.f32.partialorder %v2251, 8.507059e+37
  %v2253 = vand.u32 %v1675, 2147483648
  %v2254 = vor.u32 1.1754944e-38, %v2253
  %v2255 = vsel %vm2252, %v2254, %v2250
  %v2256 = vmul.f32 %v831, %v2255
  %v2257 = vrcp.pop %v1680
  %v2258 = vmul.f32 %v1680, %v2257
  %v2259 = vsub.f32 1.0, %v2258
  %v2260 = vmul.f32 %v2257, %v2259
  %v2261 = vadd.f32 %v2257, %v2260
  %vm2262 = vweird.f32 %v1680
  %vm2263 = vweird.f32 %v2257
  %vm2264 = vmor %vm2262, %vm2263
  %v2265 = vsel %vm2264, %v2257, %v2261
  %v2266 = vand.u32 2147483647, %v1680
  %vm2267 = vcmp.eq.f32.partialorder %v2266, 8.507059e+37
  %v2268 = vand.u32 %v1680, 2147483648
  %v2269 = vor.u32 1.1754944e-38, %v2268
  %v2270 = vsel %vm2267, %v2269, %v2265
  %v2271 = vmul.f32 %v838, %v2270
  %v2272 = vrcp.pop %v1685
  %v2273 = vmul.f32 %v1685, %v2272
  %v2274 = vsub.f32 1.0, %v2273
  %v2275 = vmul.f32 %v2272, %v2274
  %v2276 = vadd.f32 %v2272, %v2275
  %vm2277 = vweird.f32 %v1685
  %vm2278 = vweird.f32 %v2272
  %vm2279 = vmor %vm2277, %vm2278
  %v2280 = vsel %vm2279, %v2272, %v2276
  %v2281 = vand.u32 2147483647, %v1685
  %vm2282 = vcmp.eq.f32.partialorder %v2281, 8.507059e+37
  %v2283 = vand.u32 %v1685, 2147483648
  %v2284 = vor.u32 1.1754944e-38, %v2283
  %v2285 = vsel %vm2282, %v2284, %v2280
  %v2286 = vmul.f32 %v845, %v2285
  %v2287 = vrcp.pop %v1690
  %v2288 = vmul.f32 %v1690, %v2287
  %v2289 = vsub.f32 1.0, %v2288
  %v2290 = vmul.f32 %v2287, %v2289
  %v2291 = vadd.f32 %v2287, %v2290
  %vm2292 = vweird.f32 %v1690
  %vm2293 = vweird.f32 %v2287
  %vm2294 = vmor %vm2292, %vm2293
  %v2295 = vsel %vm2294, %v2287, %v2291
  %v2296 = vand.u32 2147483647, %v1690
  %vm2297 = vcmp.eq.f32.partialorder %v2296, 8.507059e+37
  %v2298 = vand.u32 %v1690, 2147483648
  %v2299 = vor.u32 1.1754944e-38, %v2298
  %v2300 = vsel %vm2297, %v2299, %v2295
  %v2301 = vmul.f32 %v852, %v2300
  %v2302 = vrcp.pop %v1695
  %v2303 = vmul.f32 %v1695, %v2302
  %v2304 = vsub.f32 1.0, %v2303
  %v2305 = vmul.f32 %v2302, %v2304
  %v2306 = vadd.f32 %v2302, %v2305
  %vm2307 = vweird.f32 %v1695
  %vm2308 = vweird.f32 %v2302
  %vm2309 = vmor %vm2307, %vm2308
  %v2310 = vsel %vm2309, %v2302, %v2306
  %v2311 = vand.u32 2147483647, %v1695
  %vm2312 = vcmp.eq.f32.partialorder %v2311, 8.507059e+37
  %v2313 = vand.u32 %v1695, 2147483648
  %v2314 = vor.u32 1.1754944e-38, %v2313
  %v2315 = vsel %vm2312, %v2314, %v2310
  %v2316 = vmul.f32 %v859, %v2315
  %v2317 = vrcp.pop %v1700
  %v2318 = vmul.f32 %v1700, %v2317
  %v2319 = vsub.f32 1.0, %v2318
  %v2320 = vmul.f32 %v2317, %v2319
  %v2321 = vadd.f32 %v2317, %v2320
  %vm2322 = vweird.f32 %v1700
  %vm2323 = vweird.f32 %v2317
  %vm2324 = vmor %vm2322, %vm2323
  %v2325 = vsel %vm2324, %v2317, %v2321
  %v2326 = vand.u32 2147483647, %v1700
  %vm2327 = vcmp.eq.f32.partialorder %v2326, 8.507059e+37
  %v2328 = vand.u32 %v1700, 2147483648
  %v2329 = vor.u32 1.1754944e-38, %v2328
  %v2330 = vsel %vm2327, %v2329, %v2325
  %v2331 = vmul.f32 %v866, %v2330
  %v2332 = vrcp.pop %v1705
  %v2333 = vmul.f32 %v1705, %v2332
  %v2334 = vsub.f32 1.0, %v2333
  %v2335 = vmul.f32 %v2332, %v2334
  %v2336 = vadd.f32 %v2332, %v2335
  %vm2337 = vweird.f32 %v1705
  %vm2338 = vweird.f32 %v2332
  %vm2339 = vmor %vm2337, %vm2338
  %v2340 = vsel %vm2339, %v2332, %v2336
  %v2341 = vand.u32 2147483647, %v1705
  %vm2342 = vcmp.eq.f32.partialorder %v2341, 8.507059e+37
  %v2343 = vand.u32 %v1705, 2147483648
  %v2344 = vor.u32 1.1754944e-38, %v2343
  %v2345 = vsel %vm2342, %v2344, %v2340
  %v2346 = vmul.f32 %v873, %v2345
  %v2347 = vrcp.pop %v1710
  %v2348 = vmul.f32 %v1710, %v2347
  %v2349 = vsub.f32 1.0, %v2348
  %v2350 = vmul.f32 %v2347, %v2349
  %v2351 = vadd.f32 %v2347, %v2350
  %vm2352 = vweird.f32 %v1710
  %vm2353 = vweird.f32 %v2347
  %vm2354 = vmor %vm2352, %vm2353
  %v2355 = vsel %vm2354, %v2347, %v2351
  %v2356 = vand.u32 2147483647, %v1710
  %vm2357 = vcmp.eq.f32.partialorder %v2356, 8.507059e+37
  %v2358 = vand.u32 %v1710, 2147483648
  %v2359 = vor.u32 1.1754944e-38, %v2358
  %v2360 = vsel %vm2357, %v2359, %v2355
  %v2361 = vmul.f32 %v880, %v2360
  %v2362 = vrcp.pop %v1715
  %v2363 = vmul.f32 %v1715, %v2362
  %v2364 = vsub.f32 1.0, %v2363
  %v2365 = vmul.f32 %v2362, %v2364
  %v2366 = vadd.f32 %v2362, %v2365
  %vm2367 = vweird.f32 %v1715
  %vm2368 = vweird.f32 %v2362
  %vm2369 = vmor %vm2367, %vm2368
  %v2370 = vsel %vm2369, %v2362, %v2366
  %v2371 = vand.u32 2147483647, %v1715
  %vm2372 = vcmp.eq.f32.partialorder %v2371, 8.507059e+37
  %v2373 = vand.u32 %v1715, 2147483648
  %v2374 = vor.u32 1.1754944e-38, %v2373
  %v2375 = vsel %vm2372, %v2374, %v2370
  %v2376 = vmul.f32 %v887, %v2375
  %v2377 = vrcp.pop %v1720
  %v2378 = vmul.f32 %v1720, %v2377
  %v2379 = vsub.f32 1.0, %v2378
  %v2380 = vmul.f32 %v2377, %v2379
  %v2381 = vadd.f32 %v2377, %v2380
  %vm2382 = vweird.f32 %v1720
  %vm2383 = vweird.f32 %v2377
  %vm2384 = vmor %vm2382, %vm2383
  %v2385 = vsel %vm2384, %v2377, %v2381
  %v2386 = vand.u32 2147483647, %v1720
  %vm2387 = vcmp.eq.f32.partialorder %v2386, 8.507059e+37
  %v2388 = vand.u32 %v1720, 2147483648
  %v2389 = vor.u32 1.1754944e-38, %v2388
  %v2390 = vsel %vm2387, %v2389, %v2385
  %v2391 = vmul.f32 %v894, %v2390
  %v2392 = vrcp.pop %v1725
  %v2393 = vmul.f32 %v1725, %v2392
  %v2394 = vsub.f32 1.0, %v2393
  %v2395 = vmul.f32 %v2392, %v2394
  %v2396 = vadd.f32 %v2392, %v2395
  %vm2397 = vweird.f32 %v1725
  %vm2398 = vweird.f32 %v2392
  %vm2399 = vmor %vm2397, %vm2398
  %v2400 = vsel %vm2399, %v2392, %v2396
  %v2401 = vand.u32 2147483647, %v1725
  %vm2402 = vcmp.eq.f32.partialorder %v2401, 8.507059e+37
  %v2403 = vand.u32 %v1725, 2147483648
  %v2404 = vor.u32 1.1754944e-38, %v2403
  %v2405 = vsel %vm2402, %v2404, %v2400
  %v2406 = vmul.f32 %v901, %v2405
  %v2407 = vrcp.pop %v1730
  %v2408 = vmul.f32 %v1730, %v2407
  %v2409 = vsub.f32 1.0, %v2408
  %v2410 = vmul.f32 %v2407, %v2409
  %v2411 = vadd.f32 %v2407, %v2410
  %vm2412 = vweird.f32 %v1730
  %vm2413 = vweird.f32 %v2407
  %vm2414 = vmor %vm2412, %vm2413
  %v2415 = vsel %vm2414, %v2407, %v2411
  %v2416 = vand.u32 2147483647, %v1730
  %vm2417 = vcmp.eq.f32.partialorder %v2416, 8.507059e+37
  %v2418 = vand.u32 %v1730, 2147483648
  %v2419 = vor.u32 1.1754944e-38, %v2418
  %v2420 = vsel %vm2417, %v2419, %v2415
  %v2421 = vmul.f32 %v908, %v2420
  %v2422 = vrcp.pop %v1735
  %v2423 = vmul.f32 %v1735, %v2422
  %v2424 = vsub.f32 1.0, %v2423
  %v2425 = vmul.f32 %v2422, %v2424
  %v2426 = vadd.f32 %v2422, %v2425
  %vm2427 = vweird.f32 %v1735
  %vm2428 = vweird.f32 %v2422
  %vm2429 = vmor %vm2427, %vm2428
  %v2430 = vsel %vm2429, %v2422, %v2426
  %v2431 = vand.u32 2147483647, %v1735
  %vm2432 = vcmp.eq.f32.partialorder %v2431, 8.507059e+37
  %v2433 = vand.u32 %v1735, 2147483648
  %v2434 = vor.u32 1.1754944e-38, %v2433
  %v2435 = vsel %vm2432, %v2434, %v2430
  %v2436 = vmul.f32 %v915, %v2435
  %v2437 = vrcp.pop %v1740
  %v2438 = vmul.f32 %v1740, %v2437
  %v2439 = vsub.f32 1.0, %v2438
  %v2440 = vmul.f32 %v2437, %v2439
  %v2441 = vadd.f32 %v2437, %v2440
  %vm2442 = vweird.f32 %v1740
  %vm2443 = vweird.f32 %v2437
  %vm2444 = vmor %vm2442, %vm2443
  %v2445 = vsel %vm2444, %v2437, %v2441
  %v2446 = vand.u32 2147483647, %v1740
  %vm2447 = vcmp.eq.f32.partialorder %v2446, 8.507059e+37
  %v2448 = vand.u32 %v1740, 2147483648
  %v2449 = vor.u32 1.1754944e-38, %v2448
  %v2450 = vsel %vm2447, %v2449, %v2445
  %v2451 = vmul.f32 %v922, %v2450
  %v2452 = vrcp.pop %v1745
  %v2453 = vmul.f32 %v1745, %v2452
  %v2454 = vsub.f32 1.0, %v2453
  %v2455 = vmul.f32 %v2452, %v2454
  %v2456 = vadd.f32 %v2452, %v2455
  %vm2457 = vweird.f32 %v1745
  %vm2458 = vweird.f32 %v2452
  %vm2459 = vmor %vm2457, %vm2458
  %v2460 = vsel %vm2459, %v2452, %v2456
  %v2461 = vand.u32 2147483647, %v1745
  %vm2462 = vcmp.eq.f32.partialorder %v2461, 8.507059e+37
  %v2463 = vand.u32 %v1745, 2147483648
  %v2464 = vor.u32 1.1754944e-38, %v2463
  %v2465 = vsel %vm2462, %v2464, %v2460
  %v2466 = vmul.f32 %v929, %v2465
  %v2467 = vrcp.pop %v1750
  %v2468 = vmul.f32 %v1750, %v2467
  %v2469 = vsub.f32 1.0, %v2468
  %v2470 = vmul.f32 %v2467, %v2469
  %v2471 = vadd.f32 %v2467, %v2470
  %vm2472 = vweird.f32 %v1750
  %vm2473 = vweird.f32 %v2467
  %vm2474 = vmor %vm2472, %vm2473
  %v2475 = vsel %vm2474, %v2467, %v2471
  %v2476 = vand.u32 2147483647, %v1750
  %vm2477 = vcmp.eq.f32.partialorder %v2476, 8.507059e+37
  %v2478 = vand.u32 %v1750, 2147483648
  %v2479 = vor.u32 1.1754944e-38, %v2478
  %v2480 = vsel %vm2477, %v2479, %v2475
  %v2481 = vmul.f32 %v936, %v2480
  %v2482 = vrcp.pop %v1755
  %v2483 = vmul.f32 %v1755, %v2482
  %v2484 = vsub.f32 1.0, %v2483
  %v2485 = vmul.f32 %v2482, %v2484
  %v2486 = vadd.f32 %v2482, %v2485
  %vm2487 = vweird.f32 %v1755
  %vm2488 = vweird.f32 %v2482
  %vm2489 = vmor %vm2487, %vm2488
  %v2490 = vsel %vm2489, %v2482, %v2486
  %v2491 = vand.u32 2147483647, %v1755
  %vm2492 = vcmp.eq.f32.partialorder %v2491, 8.507059e+37
  %v2493 = vand.u32 %v1755, 2147483648
  %v2494 = vor.u32 1.1754944e-38, %v2493
  %v2495 = vsel %vm2492, %v2494, %v2490
  %v2496 = vmul.f32 %v943, %v2495
  %v2497 = vrcp.pop %v1760
  %v2498 = vmul.f32 %v1760, %v2497
  %v2499 = vsub.f32 1.0, %v2498
  %v2500 = vmul.f32 %v2497, %v2499
  %v2501 = vadd.f32 %v2497, %v2500
  %vm2502 = vweird.f32 %v1760
  %vm2503 = vweird.f32 %v2497
  %vm2504 = vmor %vm2502, %vm2503
  %v2505 = vsel %vm2504, %v2497, %v2501
  %v2506 = vand.u32 2147483647, %v1760
  %vm2507 = vcmp.eq.f32.partialorder %v2506, 8.507059e+37
  %v2508 = vand.u32 %v1760, 2147483648
  %v2509 = vor.u32 1.1754944e-38, %v2508
  %v2510 = vsel %vm2507, %v2509, %v2505
  %v2511 = vmul.f32 %v950, %v2510
  %v2512 = vrcp.pop %v1765
  %v2513 = vmul.f32 %v1765, %v2512
  %v2514 = vsub.f32 1.0, %v2513
  %v2515 = vmul.f32 %v2512, %v2514
  %v2516 = vadd.f32 %v2512, %v2515
  %vm2517 = vweird.f32 %v1765
  %vm2518 = vweird.f32 %v2512
  %vm2519 = vmor %vm2517, %vm2518
  %v2520 = vsel %vm2519, %v2512, %v2516
  %v2521 = vand.u32 2147483647, %v1765
  %vm2522 = vcmp.eq.f32.partialorder %v2521, 8.507059e+37
  %v2523 = vand.u32 %v1765, 2147483648
  %v2524 = vor.u32 1.1754944e-38, %v2523
  %v2525 = vsel %vm2522, %v2524, %v2520
  %v2526 = vmul.f32 %v957, %v2525
  %v2527 = vrcp.pop %v1770
  %v2528 = vmul.f32 %v1770, %v2527
  %v2529 = vsub.f32 1.0, %v2528
  %v2530 = vmul.f32 %v2527, %v2529
  %v2531 = vadd.f32 %v2527, %v2530
  %vm2532 = vweird.f32 %v1770
  %vm2533 = vweird.f32 %v2527
  %vm2534 = vmor %vm2532, %vm2533
  %v2535 = vsel %vm2534, %v2527, %v2531
  %v2536 = vand.u32 2147483647, %v1770
  %vm2537 = vcmp.eq.f32.partialorder %v2536, 8.507059e+37
  %v2538 = vand.u32 %v1770, 2147483648
  %v2539 = vor.u32 1.1754944e-38, %v2538
  %v2540 = vsel %vm2537, %v2539, %v2535
  %v2541 = vmul.f32 %v964, %v2540
  %v2542 = vrcp.pop %v1775
  %v2543 = vmul.f32 %v1775, %v2542
  %v2544 = vsub.f32 1.0, %v2543
  %v2545 = vmul.f32 %v2542, %v2544
  %v2546 = vadd.f32 %v2542, %v2545
  %vm2547 = vweird.f32 %v1775
  %vm2548 = vweird.f32 %v2542
  %vm2549 = vmor %vm2547, %vm2548
  %v2550 = vsel %vm2549, %v2542, %v2546
  %v2551 = vand.u32 2147483647, %v1775
  %vm2552 = vcmp.eq.f32.partialorder %v2551, 8.507059e+37
  %v2553 = vand.u32 %v1775, 2147483648
  %v2554 = vor.u32 1.1754944e-38, %v2553
  %v2555 = vsel %vm2552, %v2554, %v2550
  %v2556 = vmul.f32 %v971, %v2555
  %v2557 = vrcp.pop %v1780
  %v2558 = vmul.f32 %v1780, %v2557
  %v2559 = vsub.f32 1.0, %v2558
  %v2560 = vmul.f32 %v2557, %v2559
  %v2561 = vadd.f32 %v2557, %v2560
  %vm2562 = vweird.f32 %v1780
  %vm2563 = vweird.f32 %v2557
  %vm2564 = vmor %vm2562, %vm2563
  %v2565 = vsel %vm2564, %v2557, %v2561
  %v2566 = vand.u32 2147483647, %v1780
  %vm2567 = vcmp.eq.f32.partialorder %v2566, 8.507059e+37
  %v2568 = vand.u32 %v1780, 2147483648
  %v2569 = vor.u32 1.1754944e-38, %v2568
  %v2570 = vsel %vm2567, %v2569, %v2565
  %v2571 = vmul.f32 %v978, %v2570
  %v2572 = vrcp.pop %v1785
  %v2573 = vmul.f32 %v1785, %v2572
  %v2574 = vsub.f32 1.0, %v2573
  %v2575 = vmul.f32 %v2572, %v2574
  %v2576 = vadd.f32 %v2572, %v2575
  %vm2577 = vweird.f32 %v1785
  %vm2578 = vweird.f32 %v2572
  %vm2579 = vmor %vm2577, %vm2578
  %v2580 = vsel %vm2579, %v2572, %v2576
  %v2581 = vand.u32 2147483647, %v1785
  %vm2582 = vcmp.eq.f32.partialorder %v2581, 8.507059e+37
  %v2583 = vand.u32 %v1785, 2147483648
  %v2584 = vor.u32 1.1754944e-38, %v2583
  %v2585 = vsel %vm2582, %v2584, %v2580
  %v2586 = vmul.f32 %v985, %v2585
  %v2587 = vrcp.pop %v1790
  %v2588 = vmul.f32 %v1790, %v2587
  %v2589 = vsub.f32 1.0, %v2588
  %v2590 = vmul.f32 %v2587, %v2589
  %v2591 = vadd.f32 %v2587, %v2590
  %vm2592 = vweird.f32 %v1790
  %vm2593 = vweird.f32 %v2587
  %vm2594 = vmor %vm2592, %vm2593
  %v2595 = vsel %vm2594, %v2587, %v2591
  %v2596 = vand.u32 2147483647, %v1790
  %vm2597 = vcmp.eq.f32.partialorder %v2596, 8.507059e+37
  %v2598 = vand.u32 %v1790, 2147483648
  %v2599 = vor.u32 1.1754944e-38, %v2598
  %v2600 = vsel %vm2597, %v2599, %v2595
  %v2601 = vmul.f32 %v992, %v2600
  %v2602 = vrcp.pop %v1795
  %v2603 = vmul.f32 %v1795, %v2602
  %v2604 = vsub.f32 1.0, %v2603
  %v2605 = vmul.f32 %v2602, %v2604
  %v2606 = vadd.f32 %v2602, %v2605
  %vm2607 = vweird.f32 %v1795
  %vm2608 = vweird.f32 %v2602
  %vm2609 = vmor %vm2607, %vm2608
  %v2610 = vsel %vm2609, %v2602, %v2606
  %v2611 = vand.u32 2147483647, %v1795
  %vm2612 = vcmp.eq.f32.partialorder %v2611, 8.507059e+37
  %v2613 = vand.u32 %v1795, 2147483648
  %v2614 = vor.u32 1.1754944e-38, %v2613
  %v2615 = vsel %vm2612, %v2614, %v2610
  %v2616 = vmul.f32 %v999, %v2615
  %v2617 = vrcp.pop %v1800
  %v2618 = vmul.f32 %v1800, %v2617
  %v2619 = vsub.f32 1.0, %v2618
  %v2620 = vmul.f32 %v2617, %v2619
  %v2621 = vadd.f32 %v2617, %v2620
  %vm2622 = vweird.f32 %v1800
  %vm2623 = vweird.f32 %v2617
  %vm2624 = vmor %vm2622, %vm2623
  %v2625 = vsel %vm2624, %v2617, %v2621
  %v2626 = vand.u32 2147483647, %v1800
  %vm2627 = vcmp.eq.f32.partialorder %v2626, 8.507059e+37
  %v2628 = vand.u32 %v1800, 2147483648
  %v2629 = vor.u32 1.1754944e-38, %v2628
  %v2630 = vsel %vm2627, %v2629, %v2625
  %v2631 = vmul.f32 %v1006, %v2630
  %v2632 = vrcp.pop %v1805
  %v2633 = vmul.f32 %v1805, %v2632
  %v2634 = vsub.f32 1.0, %v2633
  %v2635 = vmul.f32 %v2632, %v2634
  %v2636 = vadd.f32 %v2632, %v2635
  %vm2637 = vweird.f32 %v1805
  %vm2638 = vweird.f32 %v2632
  %vm2639 = vmor %vm2637, %vm2638
  %v2640 = vsel %vm2639, %v2632, %v2636
  %v2641 = vand.u32 2147483647, %v1805
  %vm2642 = vcmp.eq.f32.partialorder %v2641, 8.507059e+37
  %v2643 = vand.u32 %v1805, 2147483648
  %v2644 = vor.u32 1.1754944e-38, %v2643
  %v2645 = vsel %vm2642, %v2644, %v2640
  %v2646 = vmul.f32 %v1013, %v2645
  %v2647 = vrcp.pop %v1810
  %v2648 = vmul.f32 %v1810, %v2647
  %v2649 = vsub.f32 1.0, %v2648
  %v2650 = vmul.f32 %v2647, %v2649
  %v2651 = vadd.f32 %v2647, %v2650
  %vm2652 = vweird.f32 %v1810
  %vm2653 = vweird.f32 %v2647
  %vm2654 = vmor %vm2652, %vm2653
  %v2655 = vsel %vm2654, %v2647, %v2651
  %v2656 = vand.u32 2147483647, %v1810
  %vm2657 = vcmp.eq.f32.partialorder %v2656, 8.507059e+37
  %v2658 = vand.u32 %v1810, 2147483648
  %v2659 = vor.u32 1.1754944e-38, %v2658
  %v2660 = vsel %vm2657, %v2659, %v2655
  %v2661 = vmul.f32 %v1020, %v2660
  %v2662 = vrcp.pop %v1815
  %v2663 = vmul.f32 %v1815, %v2662
  %v2664 = vsub.f32 1.0, %v2663
  %v2665 = vmul.f32 %v2662, %v2664
  %v2666 = vadd.f32 %v2662, %v2665
  %vm2667 = vweird.f32 %v1815
  %vm2668 = vweird.f32 %v2662
  %vm2669 = vmor %vm2667, %vm2668
  %v2670 = vsel %vm2669, %v2662, %v2666
  %v2671 = vand.u32 2147483647, %v1815
  %vm2672 = vcmp.eq.f32.partialorder %v2671, 8.507059e+37
  %v2673 = vand.u32 %v1815, 2147483648
  %v2674 = vor.u32 1.1754944e-38, %v2673
  %v2675 = vsel %vm2672, %v2674, %v2670
  %v2676 = vmul.f32 %v1027, %v2675
  %v2677 = vrcp.pop %v1820
  %v2678 = vmul.f32 %v1820, %v2677
  %v2679 = vsub.f32 1.0, %v2678
  %v2680 = vmul.f32 %v2677, %v2679
  %v2681 = vadd.f32 %v2677, %v2680
  %vm2682 = vweird.f32 %v1820
  %vm2683 = vweird.f32 %v2677
  %vm2684 = vmor %vm2682, %vm2683
  %v2685 = vsel %vm2684, %v2677, %v2681
  %v2686 = vand.u32 2147483647, %v1820
  %vm2687 = vcmp.eq.f32.partialorder %v2686, 8.507059e+37
  %v2688 = vand.u32 %v1820, 2147483648
  %v2689 = vor.u32 1.1754944e-38, %v2688
  %v2690 = vsel %vm2687, %v2689, %v2685
  %v2691 = vmul.f32 %v1034, %v2690
  %v2692 = vrcp.pop %v1825
  %v2693 = vmul.f32 %v1825, %v2692
  %v2694 = vsub.f32 1.0, %v2693
  %v2695 = vmul.f32 %v2692, %v2694
  %v2696 = vadd.f32 %v2692, %v2695
  %vm2697 = vweird.f32 %v1825
  %vm2698 = vweird.f32 %v2692
  %vm2699 = vmor %vm2697, %vm2698
  %v2700 = vsel %vm2699, %v2692, %v2696
  %v2701 = vand.u32 2147483647, %v1825
  %vm2702 = vcmp.eq.f32.partialorder %v2701, 8.507059e+37
  %v2703 = vand.u32 %v1825, 2147483648
  %v2704 = vor.u32 1.1754944e-38, %v2703
  %v2705 = vsel %vm2702, %v2704, %v2700
  %v2706 = vmul.f32 %v1041, %v2705
  %v2707 = vrcp.pop %v1830
  %v2708 = vmul.f32 %v1830, %v2707
  %v2709 = vsub.f32 1.0, %v2708
  %v2710 = vmul.f32 %v2707, %v2709
  %v2711 = vadd.f32 %v2707, %v2710
  %vm2712 = vweird.f32 %v1830
  %vm2713 = vweird.f32 %v2707
  %vm2714 = vmor %vm2712, %vm2713
  %v2715 = vsel %vm2714, %v2707, %v2711
  %v2716 = vand.u32 2147483647, %v1830
  %vm2717 = vcmp.eq.f32.partialorder %v2716, 8.507059e+37
  %v2718 = vand.u32 %v1830, 2147483648
  %v2719 = vor.u32 1.1754944e-38, %v2718
  %v2720 = vsel %vm2717, %v2719, %v2715
  %v2721 = vmul.f32 %v1048, %v2720
  %v2722 = vrcp.pop %v1835
  %v2723 = vmul.f32 %v1835, %v2722
  %v2724 = vsub.f32 1.0, %v2723
  %v2725 = vmul.f32 %v2722, %v2724
  %v2726 = vadd.f32 %v2722, %v2725
  %vm2727 = vweird.f32 %v1835
  %vm2728 = vweird.f32 %v2722
  %vm2729 = vmor %vm2727, %vm2728
  %v2730 = vsel %vm2729, %v2722, %v2726
  %v2731 = vand.u32 2147483647, %v1835
  %vm2732 = vcmp.eq.f32.partialorder %v2731, 8.507059e+37
  %v2733 = vand.u32 %v1835, 2147483648
  %v2734 = vor.u32 1.1754944e-38, %v2733
  %v2735 = vsel %vm2732, %v2734, %v2730
  %v2736 = vmul.f32 %v1055, %v2735
  %v2737 = vperm.slane %v33, 0
  %vm2742 = vcmask 1041409
  %v2743 = vsel %vm2742, %v244, %v229
  %vm2744 = vcmask 1042434
  %v2745 = vsel %vm2744, %v259, %v2743
  %vm2746 = vcmask 1043459
  %v2747 = vsel %vm2746, %v274, %v2745
  %v2748 = vsel %vm133, %v2747, 0
  %v2751 = vsel %vm133, %v17, 0
  %v2754 = vsel %vm133, %v18, 0
  %v2757 = vsel %vm133, %v19, 0
  %v2760 = vsel %vm133, %v20, 0
  %2762 = vmatpush.xpose.msra.mxu0 0.0
  %2763 = vmatpush.xpose.msra.mxu0 0.0
  %2764 = vmatpush.xpose.msra.mxu0 0.0
  %2765 = vmatpush.xpose.msra.mxu0 0.0
  %2766 = vmatpush.xpose.msra.mxu0 0.0
  %2767 = vmatpush.xpose.msra.mxu0 0.0
  %2768 = vmatpush.xpose.msra.mxu0 0.0
  %2769 = vmatpush.xpose.msra.mxu0 0.0
  %2770 = vmatpush.xpose.msra.mxu0 0.0
  %2771 = vmatpush.xpose.msra.mxu0 0.0
  %2772 = vmatpush.xpose.msra.mxu0 0.0
  %2773 = vmatpush.xpose.msra.mxu0 0.0
  %2774 = vmatpush.xpose.msra.mxu0 %v2760
  %2775 = vmatpush.xpose.msra.mxu0 %v2757
  %2776 = vmatpush.xpose.msra.mxu0 %v2754
  %2777 = vmatpush.xpose.msra.mxu0 %v2751
  %2778 = vmatmul.f32.gmra.mxu0 %v2748
  %v2779 = vpop.f32.mrf.mxu0
  %v2780 = vadd.f32 %v2737, %v2779
  %2781 = vdwg.mxu0
  %v2782 = vmax.f32 %v2780, 0.0
  %v2843 = vsel %vm2742, %v1866, %v1851
  %v2844 = vsel %vm2744, %v1881, %v2843
  %v2845 = vsel %vm2746, %v1896, %v2844
  %vm2846 = vcmask 1044484
  %v2847 = vsel %vm2846, %v1911, %v2845
  %vm2848 = vcmask 1045509
  %v2849 = vsel %vm2848, %v1926, %v2847
  %vm2850 = vcmask 1046534
  %v2851 = vsel %vm2850, %v1941, %v2849
  %vm2852 = vcmask 1047559
  %v2853 = vsel %vm2852, %v1956, %v2851
  %v2854 = vsel %vm2742, %v1986, %v1971
  %v2855 = vsel %vm2744, %v2001, %v2854
  %v2856 = vsel %vm2746, %v2016, %v2855
  %v2857 = vsel %vm2846, %v2031, %v2856
  %v2858 = vsel %vm2848, %v2046, %v2857
  %v2859 = vsel %vm2850, %v2061, %v2858
  %v2860 = vsel %vm2852, %v2076, %v2859
  %v2861 = vsel %vm2742, %v2106, %v2091
  %v2862 = vsel %vm2744, %v2121, %v2861
  %v2863 = vsel %vm2746, %v2136, %v2862
  %v2864 = vsel %vm2846, %v2151, %v2863
  %v2865 = vsel %vm2848, %v2166, %v2864
  %v2866 = vsel %vm2850, %v2181, %v2865
  %v2867 = vsel %vm2852, %v2196, %v2866
  %v2868 = vsel %vm2742, %v2226, %v2211
  %v2869 = vsel %vm2744, %v2241, %v2868
  %v2870 = vsel %vm2746, %v2256, %v2869
  %v2871 = vsel %vm2846, %v2271, %v2870
  %v2872 = vsel %vm2848, %v2286, %v2871
  %v2873 = vsel %vm2850, %v2301, %v2872
  %v2874 = vsel %vm2852, %v2316, %v2873
  %v2875 = vsel %vm2742, %v2346, %v2331
  %v2876 = vsel %vm2744, %v2361, %v2875
  %v2877 = vsel %vm2746, %v2376, %v2876
  %v2878 = vsel %vm2846, %v2391, %v2877
  %v2879 = vsel %vm2848, %v2406, %v2878
  %v2880 = vsel %vm2850, %v2421, %v2879
  %v2881 = vsel %vm2852, %v2436, %v2880
  %v2882 = vsel %vm2742, %v2466, %v2451
  %v2883 = vsel %vm2744, %v2481, %v2882
  %v2884 = vsel %vm2746, %v2496, %v2883
  %v2885 = vsel %vm2846, %v2511, %v2884
  %v2886 = vsel %vm2848, %v2526, %v2885
  %v2887 = vsel %vm2850, %v2541, %v2886
  %v2888 = vsel %vm2852, %v2556, %v2887
  %v2889 = vsel %vm2742, %v2586, %v2571
  %v2890 = vsel %vm2744, %v2601, %v2889
  %v2891 = vsel %vm2746, %v2616, %v2890
  %v2892 = vsel %vm2846, %v2631, %v2891
  %v2893 = vsel %vm2848, %v2646, %v2892
  %v2894 = vsel %vm2850, %v2661, %v2893
  %v2895 = vsel %vm2852, %v2676, %v2894
  %v2896 = vsel %vm2742, %v2706, %v2691
  %v2897 = vsel %vm2744, %v2721, %v2896
  %v2898 = vsel %vm2746, %v2736, %v2897
  %v2899 = vsel %vm133, %v2853, 0
  %v2901 = vsel %vm133, %v2860, 0
  %v2903 = vsel %vm133, %v2867, 0
  %v2905 = vsel %vm133, %v2874, 0
  %v2907 = vsel %vm133, %v2881, 0
  %v2909 = vsel %vm133, %v2888, 0
  %v2911 = vsel %vm133, %v2895, 0
  %v2913 = vsel %vm133, %v2898, 0
  %2915 = vmatpush.xpose.msra.mxu0 0.0
  %2916 = vmatpush.xpose.msra.mxu0 0.0
  %2917 = vmatpush.xpose.msra.mxu0 0.0
  %2918 = vmatpush.xpose.msra.mxu0 0.0
  %2919 = vmatpush.xpose.msra.mxu0 0.0
  %2920 = vmatpush.xpose.msra.mxu0 0.0
  %2921 = vmatpush.xpose.msra.mxu0 0.0
  %2922 = vmatpush.xpose.msra.mxu0 0.0
  %2923 = vmatpush.xpose.msra.mxu0 0.0
  %2924 = vmatpush.xpose.msra.mxu0 0.0
  %2925 = vmatpush.xpose.msra.mxu0 0.0
  %2926 = vmatpush.xpose.msra.mxu0 0.0
  %2927 = vmatpush.xpose.msra.mxu0 %v2760
  %2928 = vmatpush.xpose.msra.mxu0 %v2757
  %2929 = vmatpush.xpose.msra.mxu0 %v2754
  %2930 = vmatpush.xpose.msra.mxu0 %v2751
  %2931 = vmatmul.f32.gmra.mxu0 %v2899
  %v2932 = vpop.f32.mrf.mxu0
  %v2933 = vadd.f32 %v2737, %v2932
  %2934 = vmatmul.f32.gmra.mxu0 %v2901
  %v2935 = vpop.f32.mrf.mxu0
  %v2936 = vadd.f32 %v2737, %v2935
  %2937 = vmatmul.f32.gmra.mxu0 %v2903
  %v2938 = vpop.f32.mrf.mxu0
  %v2939 = vadd.f32 %v2737, %v2938
  %2940 = vmatmul.f32.gmra.mxu0 %v2905
  %v2941 = vpop.f32.mrf.mxu0
  %v2942 = vadd.f32 %v2737, %v2941
  %2943 = vmatmul.f32.gmra.mxu0 %v2907
  %v2944 = vpop.f32.mrf.mxu0
  %v2945 = vadd.f32 %v2737, %v2944
  %2946 = vmatmul.f32.gmra.mxu0 %v2909
  %v2947 = vpop.f32.mrf.mxu0
  %v2948 = vadd.f32 %v2737, %v2947
  %2949 = vmatmul.f32.gmra.mxu0 %v2911
  %v2950 = vpop.f32.mrf.mxu0
  %v2951 = vadd.f32 %v2737, %v2950
  %2952 = vmatmul.f32.gmra.mxu0 %v2913
  %v2953 = vpop.f32.mrf.mxu0
  %v2954 = vadd.f32 %v2737, %v2953
  %2955 = vdwg.mxu0
  %v2956 = vmax.f32 %v2933, 0.0
  %v2957 = vmax.f32 %v2936, 0.0
  %v2958 = vmax.f32 %v2939, 0.0
  %v2959 = vmax.f32 %v2942, 0.0
  %v2960 = vmax.f32 %v2945, 0.0
  %v2961 = vmax.f32 %v2948, 0.0
  %v2962 = vmax.f32 %v2951, 0.0
  %v2963 = vmax.f32 %v2954, 0.0
  %vm2964 = vcmask 261120
  %v2966 = vsel %vm2964, %v2782, 0
  %v2969 = vsel %vm2964, %v2956, 0
  %v2972 = vsel %vm2964, %v2957, 0
  %v2975 = vsel %vm2964, %v2958, 0
  %v2978 = vsel %vm2964, %v2959, 0
  %v2981 = vsel %vm2964, %v2960, 0
  %v2984 = vsel %vm2964, %v2961, 0
  %v2987 = vsel %vm2964, %v2962, 0
  %v2990 = vsel %vm2964, %v2963, 0
  %2992 = vmatpush.xpose.msra.mxu0 0.0
  %2993 = vmatpush.xpose.msra.mxu0 0.0
  %2994 = vmatpush.xpose.msra.mxu0 0.0
  %2995 = vmatpush.xpose.msra.mxu0 0.0
  %2996 = vmatpush.xpose.msra.mxu0 0.0
  %2997 = vmatpush.xpose.msra.mxu0 0.0
  %2998 = vmatpush.xpose.msra.mxu0 0.0
  %2999 = vmatpush.xpose.msra.mxu0 0.0
  %3000 = vmatpush.xpose.msra.mxu0 %v2990
  %3001 = vmatpush.xpose.msra.mxu0 %v2987
  %3002 = vmatpush.xpose.msra.mxu0 %v2984
  %3003 = vmatpush.xpose.msra.mxu0 %v2981
  %3004 = vmatpush.xpose.msra.mxu0 %v2978
  %3005 = vmatpush.xpose.msra.mxu0 %v2975
  %3006 = vmatpush.xpose.msra.mxu0 %v2972
  %3007 = vmatpush.xpose.msra.mxu0 %v2969
  %3008 = vmatmul.f32.gmra.mxu0 %v2966
  %v3009 = vpop.f32.mrf.mxu0
  %v3010 = vadd.f32 0.0, %v3009
  %3011 = vdwg.mxu0
  %vm3012 = vcmask 486400
  %v3013 = vsel %vm3012, %v3010, -inf
  %3014 = vmax.xlane.f32.xlu0 %v3013
  %v3015 = vpop.xlane.xlu0 %3014
  %v3016 = vsub.f32 %v3010, %v3015
  %v3017 = vmul.f32 %v3016, 1.442695
  %v3018 = vpow.pop %v3017
  %3019 = vst.msk [vmem:[#allocation2] sm:$0xf] %vm3012, %v3018
  %3020 = vst.msk [vmem:[#allocation2 + $0x4] sm:$0xf] %vm3012, %v3018
  %3021 = vst.msk [vmem:[#allocation2 + $0x8] sm:$0xf] %vm3012, %v3018
  %v3022 = vld [vmem:[#allocation2] sm:$0xff]
  %v3023 = vld [vmem:[#allocation2 + $0x8] sm:$0xf]
  %v3024 = vmul.f32 %v3022, %v42
  %v3025 = vmul.f32 %v3023, %v43
  %vm3026 = vcmask 490496
  %v3027 = vsel %vm3026, %v3024, 0.0
  %3028 = vadd.xlane.f32.xlu0 %v3027
  %v3029 = vpop.xlane.xlu0 %3028
  %v3030 = vsel %vm3012, %v3025, 0.0
  %3031 = vadd.xlane.f32.xlu0 %v3030
  %v3032 = vpop.xlane.xlu0 %3031
  %v3034 = vsel %vm3026, %v3024, 0
  %v3037 = vsel %vm3026, %v3025, 0
  %vm3039 = vcmask 1043456
  %v3040 = vsel %vm3039, %v2963, 0
  %3042 = vmatpush.msra.mxu0 0.0
  %3043 = vmatpush.msra.mxu0 0.0
  %3044 = vmatpush.msra.mxu0 0.0
  %3045 = vmatpush.msra.mxu0 0.0
  %3046 = vmatpush.msra.mxu0 0.0
  %3047 = vmatpush.msra.mxu0 0.0
  %3048 = vmatpush.msra.mxu0 0.0
  %3049 = vmatpush.msra.mxu0 0.0
  %3050 = vmatpush.msra.mxu0 %v3040
  %3051 = vmatpush.msra.mxu0 %v2962
  %3052 = vmatpush.msra.mxu0 %v2961
  %3053 = vmatpush.msra.mxu0 %v2960
  %3054 = vmatpush.msra.mxu0 %v2959
  %3055 = vmatpush.msra.mxu0 %v2958
  %3056 = vmatpush.msra.mxu0 %v2957
  %3057 = vmatpush.msra.mxu0 %v2956
  %3058 = vmatmul.f32.gmra.mxu0 %v3034
  %v3059 = vpop.f32.mrf.mxu0
  %v3060 = vadd.f32 0.0, %v3059
  %3061 = vmatmul.f32.gmra.mxu0 %v3037
  %v3062 = vpop.f32.mrf.mxu0
  %v3063 = vadd.f32 0.0, %v3062
  %3064 = vdwg.mxu0
  %v3065 = vrcp.pop %v3029
  %v3066 = vmul.f32 %v3029, %v3065
  %v3067 = vsub.f32 1.0, %v3066
  %v3068 = vmul.f32 %v3065, %v3067
  %v3069 = vadd.f32 %v3065, %v3068
  %vm3070 = vweird.f32 %v3029
  %vm3071 = vweird.f32 %v3065
  %vm3072 = vmor %vm3070, %vm3071
  %v3073 = vsel %vm3072, %v3065, %v3069
  %v3074 = vand.u32 2147483647, %v3029
  %vm3075 = vcmp.eq.f32.partialorder %v3074, 8.507059e+37
  %v3076 = vand.u32 %v3029, 2147483648
  %v3077 = vor.u32 1.1754944e-38, %v3076
  %v3078 = vsel %vm3075, %v3077, %v3073
  %v3079 = vmul.f32 %v3060, %v3078
  %v3080 = vrcp.pop %v3032
  %v3081 = vmul.f32 %v3032, %v3080
  %v3082 = vsub.f32 1.0, %v3081
  %v3083 = vmul.f32 %v3080, %v3082
  %v3084 = vadd.f32 %v3080, %v3083
  %vm3085 = vweird.f32 %v3032
  %vm3086 = vweird.f32 %v3080
  %vm3087 = vmor %vm3085, %vm3086
  %v3088 = vsel %vm3087, %v3080, %v3084
  %v3089 = vand.u32 2147483647, %v3032
  %vm3090 = vcmp.eq.f32.partialorder %v3089, 8.507059e+37
  %v3091 = vand.u32 %v3032, 2147483648
  %v3092 = vor.u32 1.1754944e-38, %v3091
  %v3093 = vsel %vm3090, %v3092, %v3088
  %v3094 = vmul.f32 %v3063, %v3093
  %vm3095 = vcmask 257024
  %3096 = vst.msk [vmem:[#allocation3] sm:$0xf] %vm3095, %v2782
  %3097 = vst.msk [vmem:[#allocation3 + $0x4] sm:$0xff] %vm2964, %v3079
  %3098 = vst.msk [vmem:[#allocation3 + $0xc] sm:$0xf] %vm3095, %v3094
  %v3099 = vld [vmem:[#allocation3] sm:$0xff]
  %v3100 = vld [vmem:[#allocation3 + $0x8] sm:$0xff]
  %v3101 = vperm.slane %v34, 0
  %v3103 = vsel %vm2964, %v3099, 0
  %v3106 = vsel %vm2964, %v3100, 0
  %v3109 = vsel %vm2964, %v21, 0
  %v3112 = vsel %vm2964, %v22, 0
  %v3115 = vsel %vm2964, %v23, 0
  %v3118 = vsel %vm2964, %v24, 0
  %3120 = vmatpush.xpose.msra.mxu0 0.0
  %3121 = vmatpush.xpose.msra.mxu0 0.0
  %3122 = vmatpush.xpose.msra.mxu0 0.0
  %3123 = vmatpush.xpose.msra.mxu0 0.0
  %3124 = vmatpush.xpose.msra.mxu0 0.0
  %3125 = vmatpush.xpose.msra.mxu0 0.0
  %3126 = vmatpush.xpose.msra.mxu0 0.0
  %3127 = vmatpush.xpose.msra.mxu0 0.0
  %3128 = vmatpush.xpose.msra.mxu0 0.0
  %3129 = vmatpush.xpose.msra.mxu0 0.0
  %3130 = vmatpush.xpose.msra.mxu0 0.0
  %3131 = vmatpush.xpose.msra.mxu0 0.0
  %3132 = vmatpush.xpose.msra.mxu0 %v3118
  %3133 = vmatpush.xpose.msra.mxu0 %v3115
  %3134 = vmatpush.xpose.msra.mxu0 %v3112
  %3135 = vmatpush.xpose.msra.mxu0 %v3109
  %3136 = vmatmul.f32.gmra.mxu0 %v3103
  %v3137 = vpop.f32.mrf.mxu0
  %v3138 = vadd.f32 %v3101, %v3137
  %3139 = vmatmul.f32.gmra.mxu0 %v3106
  %v3140 = vpop.f32.mrf.mxu0
  %v3141 = vadd.f32 %v3101, %v3140
  %3142 = vdwg.mxu0
  %v3143 = vmax.f32 %v3138, 0.0
  %v3144 = vmax.f32 %v3141, 0.0
  %v3146 = vsel %vm2964, %v37, 0
  %v3149 = vsel %vm2964, %v3143, 0
  %v3152 = vsel %vm2964, %v3144, 0
  %3154 = vmatpush.xpose.msra.mxu0 0.0
  %3155 = vmatpush.xpose.msra.mxu0 0.0
  %3156 = vmatpush.xpose.msra.mxu0 0.0
  %3157 = vmatpush.xpose.msra.mxu0 0.0
  %3158 = vmatpush.xpose.msra.mxu0 0.0
  %3159 = vmatpush.xpose.msra.mxu0 0.0
  %3160 = vmatpush.xpose.msra.mxu0 0.0
  %3161 = vmatpush.xpose.msra.mxu0 0.0
  %3162 = vmatpush.xpose.msra.mxu0 0.0
  %3163 = vmatpush.xpose.msra.mxu0 0.0
  %3164 = vmatpush.xpose.msra.mxu0 0.0
  %3165 = vmatpush.xpose.msra.mxu0 0.0
  %3166 = vmatpush.xpose.msra.mxu0 0.0
  %3167 = vmatpush.xpose.msra.mxu0 0.0
  %3168 = vmatpush.xpose.msra.mxu0 %v3152
  %3169 = vmatpush.xpose.msra.mxu0 %v3149
  %3170 = vmatmul.f32.gmra.mxu0 %v3146
  %v3171 = vpop.f32.mrf.mxu0
  %v3172 = vadd.f32 0.0, %v3171
  %3173 = vdwg.mxu0
  %vm3174 = vcmask 122880
  %v3175 = vsel %vm3174, %v3172, -inf
  %3176 = vmax.xlane.f32.xlu0 %v3175
  %v3177 = vpop.xlane.xlu0 %3176
  %v3178 = vsub.f32 %v3172, %v3177
  %v3179 = vmul.f32 %v3178, 1.442695
  %v3180 = vpow.pop %v3179
  %v3181 = vperm.slane %v3180, 0
  %v3182 = vmul.f32 %v44, %v3181
  %vm3183 = vcmask 130048
  %v3185 = vsel %vm3183, %v3182, 0
  %3187 = vmatpush.msra.mxu0 0.0
  %3188 = vmatpush.msra.mxu0 0.0
  %3189 = vmatpush.msra.mxu0 0.0
  %3190 = vmatpush.msra.mxu0 0.0
  %3191 = vmatpush.msra.mxu0 0.0
  %3192 = vmatpush.msra.mxu0 0.0
  %3193 = vmatpush.msra.mxu0 0.0
  %3194 = vmatpush.msra.mxu0 0.0
  %3195 = vmatpush.msra.mxu0 0.0
  %3196 = vmatpush.msra.mxu0 0.0
  %3197 = vmatpush.msra.mxu0 0.0
  %3198 = vmatpush.msra.mxu0 0.0
  %3199 = vmatpush.msra.mxu0 0.0
  %3200 = vmatpush.msra.mxu0 0.0
  %3201 = vmatpush.msra.mxu0 %v3100
  %3202 = vmatpush.msra.mxu0 %v3099
  %3203 = vmatmul.f32.gmra.mxu0 %v3185
  %v3204 = vpop.f32.mrf.mxu0
  %v3205 = vadd.f32 0.0, %v3204
  %3206 = vdwg.mxu0
  %vm3207 = vcmask 125952
  %v3208 = vsel %vm3207, %v3182, 0.0
  %3209 = vadd.xlane.f32.xlu0 %v3208
  %v3210 = vpop.xlane.xlu0 %3209
  %v3211 = vrcp.pop %v3210
  %v3212 = vmul.f32 %v3210, %v3211
  %v3213 = vsub.f32 1.0, %v3212
  %v3214 = vmul.f32 %v3211, %v3213
  %v3215 = vadd.f32 %v3211, %v3214
  %vm3216 = vweird.f32 %v3210
  %vm3217 = vweird.f32 %v3211
  %vm3218 = vmor %vm3216, %vm3217
  %v3219 = vsel %vm3218, %v3211, %v3215
  %v3220 = vand.u32 2147483647, %v3210
  %vm3221 = vcmp.eq.f32.partialorder %v3220, 8.507059e+37
  %v3222 = vand.u32 %v3210, 2147483648
  %v3223 = vor.u32 1.1754944e-38, %v3222
  %v3224 = vsel %vm3221, %v3223, %v3219
  %v3225 = vmul.f32 %v3205, %v3224
  %vm3226 = vcmask 31744
  %v3228 = vsel %vm3226, %v41, 0
  %v3231 = vsel %vm3039, %v3225, 0
  %3233 = vmatpush.msra.mxu0 0.0
  %3234 = vmatpush.msra.mxu0 0.0
  %3235 = vmatpush.msra.mxu0 0.0
  %3236 = vmatpush.msra.mxu0 0.0
  %3237 = vmatpush.msra.mxu0 0.0
  %3238 = vmatpush.msra.mxu0 0.0
  %3239 = vmatpush.msra.mxu0 0.0
  %3240 = vmatpush.msra.mxu0 0.0
  %3241 = vmatpush.msra.mxu0 0.0
  %3242 = vmatpush.msra.mxu0 0.0
  %3243 = vmatpush.msra.mxu0 0.0
  %3244 = vmatpush.msra.mxu0 0.0
  %3245 = vmatpush.msra.mxu0 0.0
  %3246 = vmatpush.msra.mxu0 0.0
  %3247 = vmatpush.msra.mxu0 0.0
  %3248 = vmatpush.msra.mxu0 %v3231
  %3249 = vmatmul.f32.gmra.mxu0 %v3228
  %v3250 = vpop.f32.mrf.mxu0
  %v3251 = vadd.f32 0.0, %v3250
  %3252 = vdwg.mxu0
  %v3254 = vsel %vm3226, %v40, 0
  %3256 = vmatpush.msra.mxu0 0.0
  %3257 = vmatpush.msra.mxu0 0.0
  %3258 = vmatpush.msra.mxu0 0.0
  %3259 = vmatpush.msra.mxu0 0.0
  %3260 = vmatpush.msra.mxu0 0.0
  %3261 = vmatpush.msra.mxu0 0.0
  %3262 = vmatpush.msra.mxu0 0.0
  %3263 = vmatpush.msra.mxu0 0.0
  %3264 = vmatpush.msra.mxu0 0.0
  %3265 = vmatpush.msra.mxu0 0.0
  %3266 = vmatpush.msra.mxu0 0.0
  %3267 = vmatpush.msra.mxu0 0.0
  %3268 = vmatpush.msra.mxu0 0.0
  %3269 = vmatpush.msra.mxu0 0.0
  %3270 = vmatpush.msra.mxu0 0.0
  %3271 = vmatpush.msra.mxu0 %v3231
  %3272 = vmatmul.f32.gmra.mxu0 %v3254
  %v3273 = vpop.f32.mrf.mxu0
  %v3274 = vadd.f32 0.0, %v3273
  %3275 = vdwg.mxu0
  %3280 = vrot.lane.b32.xlu0 %v25, 96
  %v3281 = vpop.permute.xlu0 %3280
  %3282 = vrot.lane.b32.xlu0 %v26, 96
  %v3283 = vpop.permute.xlu0 %3282
  %3284 = vrot.lane.b32.xlu0 %v27, 96
  %v3285 = vpop.permute.xlu0 %3284
  %3286 = vrot.lane.b32.xlu0 %v28, 96
  %v3287 = vpop.permute.xlu0 %3286
  %v3289 = vsel %vm2964, %v3251, 0
  %v3291 = vsel %vm2964, %v3281, 0
  %v3293 = vsel %vm2964, %v3283, 0
  %v3295 = vsel %vm2964, %v3285, 0
  %v3297 = vsel %vm2964, %v3287, 0
  %3299 = vmatpush.xpose.msra.mxu0 0.0
  %3300 = vmatpush.xpose.msra.mxu0 0.0
  %3301 = vmatpush.xpose.msra.mxu0 0.0
  %3302 = vmatpush.xpose.msra.mxu0 0.0
  %3303 = vmatpush.xpose.msra.mxu0 0.0
  %3304 = vmatpush.xpose.msra.mxu0 0.0
  %3305 = vmatpush.xpose.msra.mxu0 0.0
  %3306 = vmatpush.xpose.msra.mxu0 0.0
  %3307 = vmatpush.xpose.msra.mxu0 0.0
  %3308 = vmatpush.xpose.msra.mxu0 0.0
  %3309 = vmatpush.xpose.msra.mxu0 0.0
  %3310 = vmatpush.xpose.msra.mxu0 0.0
  %3311 = vmatpush.xpose.msra.mxu0 %v3297
  %3312 = vmatpush.xpose.msra.mxu0 %v3295
  %3313 = vmatpush.xpose.msra.mxu0 %v3293
  %3314 = vmatpush.xpose.msra.mxu0 %v3291
  %3315 = vmatmul.f32.gmra.mxu0 %v3289
  %v3316 = vpop.f32.mrf.mxu0
  %v3317 = vadd.f32 0.0, %v3316
  %3318 = vdwg.mxu0
  %v3319 = vadd.f32 %v35, %v3317
  %3320 = vrot.lane.b32.xlu0 %v25, 64
  %v3321 = vpop.permute.xlu0 %3320
  %3322 = vrot.lane.b32.xlu0 %v26, 64
  %v3323 = vpop.permute.xlu0 %3322
  %3324 = vrot.lane.b32.xlu0 %v27, 64
  %v3325 = vpop.permute.xlu0 %3324
  %3326 = vrot.lane.b32.xlu0 %v28, 64
  %v3327 = vpop.permute.xlu0 %3326
  %v3329 = vsel %vm2964, %v3274, 0
  %v3331 = vsel %vm2964, %v3321, 0
  %v3333 = vsel %vm2964, %v3323, 0
  %v3335 = vsel %vm2964, %v3325, 0
  %v3337 = vsel %vm2964, %v3327, 0
  %3339 = vmatpush.xpose.msra.mxu0 0.0
  %3340 = vmatpush.xpose.msra.mxu0 0.0
  %3341 = vmatpush.xpose.msra.mxu0 0.0
  %3342 = vmatpush.xpose.msra.mxu0 0.0
  %3343 = vmatpush.xpose.msra.mxu0 0.0
  %3344 = vmatpush.xpose.msra.mxu0 0.0
  %3345 = vmatpush.xpose.msra.mxu0 0.0
  %3346 = vmatpush.xpose.msra.mxu0 0.0
  %3347 = vmatpush.xpose.msra.mxu0 0.0
  %3348 = vmatpush.xpose.msra.mxu0 0.0
  %3349 = vmatpush.xpose.msra.mxu0 0.0
  %3350 = vmatpush.xpose.msra.mxu0 0.0
  %3351 = vmatpush.xpose.msra.mxu0 %v3337
  %3352 = vmatpush.xpose.msra.mxu0 %v3335
  %3353 = vmatpush.xpose.msra.mxu0 %v3333
  %3354 = vmatpush.xpose.msra.mxu0 %v3331
  %3355 = vmatmul.f32.gmra.mxu0 %v3329
  %v3356 = vpop.f32.mrf.mxu0
  %v3357 = vadd.f32 0.0, %v3356
  %3358 = vdwg.mxu0
  %v3359 = vadd.f32 %v3319, %v3357
  %v3360 = vld [vmem:[%s2] sm:$0xff]
  %v3361 = vld [vmem:[%s2 + $0x8] sm:$0xff]
  %v3362 = vld [vmem:[%s2 + $0x10] sm:$0xff]
  %v3363 = vld [vmem:[%s2 + $0x18] sm:$0xff]
  %v3364 = vld [vmem:[%s2 + $0x20] sm:$0xff]
  %v3365 = vld [vmem:[%s2 + $0x28] sm:$0xff]
  %v3366 = vld [vmem:[%s2 + $0x30] sm:$0xff]
  %v3367 = vld [vmem:[%s2 + $0x38] sm:$0xff]
  %v3368 = vld [vmem:[%s2 + $0x40] sm:$0xff]
  %v3369 = vld [vmem:[%s2 + $0x48] sm:$0xff]
  %v3370 = vld [vmem:[%s2 + $0x50] sm:$0xff]
  %v3371 = vld [vmem:[%s2 + $0x58] sm:$0xff]
  %v3372 = vld [vmem:[%s2 + $0x60] sm:$0xff]
  %v3373 = vld [vmem:[%s2 + $0x68] sm:$0xff]
  %v3374 = vld [vmem:[%s2 + $0x70] sm:$0xff]
  %v3375 = vld [vmem:[%s2 + $0x78] sm:$0xff]
  %v3376 = vperm.slane %v3359, 0
  %v3378 = vsel %vm2964, %v3360, 0
  %v3381 = vsel %vm2964, %v3361, 0
  %v3384 = vsel %vm2964, %v3362, 0
  %v3387 = vsel %vm2964, %v3363, 0
  %v3390 = vsel %vm2964, %v3364, 0
  %v3393 = vsel %vm2964, %v3365, 0
  %v3396 = vsel %vm2964, %v3366, 0
  %v3399 = vsel %vm2964, %v3367, 0
  %v3402 = vsel %vm2964, %v3368, 0
  %v3405 = vsel %vm2964, %v3369, 0
  %v3408 = vsel %vm2964, %v3370, 0
  %v3411 = vsel %vm2964, %v3371, 0
  %v3414 = vsel %vm2964, %v3372, 0
  %v3417 = vsel %vm2964, %v3373, 0
  %v3420 = vsel %vm2964, %v3374, 0
  %v3423 = vsel %vm2964, %v3375, 0
  %v3425 = vsel %vm2964, %v25, 0
  %v3427 = vsel %vm2964, %v26, 0
  %v3429 = vsel %vm2964, %v27, 0
  %v3431 = vsel %vm2964, %v28, 0
  %3433 = vmatpush.xpose.msra.mxu0 0.0
  %3434 = vmatpush.xpose.msra.mxu0 0.0
  %3435 = vmatpush.xpose.msra.mxu0 0.0
  %3436 = vmatpush.xpose.msra.mxu0 0.0
  %3437 = vmatpush.xpose.msra.mxu0 0.0
  %3438 = vmatpush.xpose.msra.mxu0 0.0
  %3439 = vmatpush.xpose.msra.mxu0 0.0
  %3440 = vmatpush.xpose.msra.mxu0 0.0
  %3441 = vmatpush.xpose.msra.mxu0 0.0
  %3442 = vmatpush.xpose.msra.mxu0 0.0
  %3443 = vmatpush.xpose.msra.mxu0 0.0
  %3444 = vmatpush.xpose.msra.mxu0 0.0
  %3445 = vmatpush.xpose.msra.mxu0 %v3431
  %3446 = vmatpush.xpose.msra.mxu0 %v3429
  %3447 = vmatpush.xpose.msra.mxu0 %v3427
  %3448 = vmatpush.xpose.msra.mxu0 %v3425
  %3449 = vmatmul.f32.gmra.mxu0 %v3378
  %v3450 = vpop.f32.mrf.mxu0
  %v3451 = vadd.f32 %v3376, %v3450
  %3452 = vmatmul.f32.gmra.mxu0 %v3381
  %v3453 = vpop.f32.mrf.mxu0
  %v3454 = vadd.f32 %v3376, %v3453
  %3455 = vmatmul.f32.gmra.mxu0 %v3384
  %v3456 = vpop.f32.mrf.mxu0
  %v3457 = vadd.f32 %v3376, %v3456
  %3458 = vmatmul.f32.gmra.mxu0 %v3387
  %v3459 = vpop.f32.mrf.mxu0
  %v3460 = vadd.f32 %v3376, %v3459
  %3461 = vmatmul.f32.gmra.mxu0 %v3390
  %v3462 = vpop.f32.mrf.mxu0
  %v3463 = vadd.f32 %v3376, %v3462
  %3464 = vmatmul.f32.gmra.mxu0 %v3393
  %v3465 = vpop.f32.mrf.mxu0
  %v3466 = vadd.f32 %v3376, %v3465
  %3467 = vmatmul.f32.gmra.mxu0 %v3396
  %v3468 = vpop.f32.mrf.mxu0
  %v3469 = vadd.f32 %v3376, %v3468
  %3470 = vmatmul.f32.gmra.mxu0 %v3399
  %v3471 = vpop.f32.mrf.mxu0
  %v3472 = vadd.f32 %v3376, %v3471
  %3473 = vmatmul.f32.gmra.mxu0 %v3402
  %v3474 = vpop.f32.mrf.mxu0
  %v3475 = vadd.f32 %v3376, %v3474
  %3476 = vmatmul.f32.gmra.mxu0 %v3405
  %v3477 = vpop.f32.mrf.mxu0
  %v3478 = vadd.f32 %v3376, %v3477
  %3479 = vmatmul.f32.gmra.mxu0 %v3408
  %v3480 = vpop.f32.mrf.mxu0
  %v3481 = vadd.f32 %v3376, %v3480
  %3482 = vmatmul.f32.gmra.mxu0 %v3411
  %v3483 = vpop.f32.mrf.mxu0
  %v3484 = vadd.f32 %v3376, %v3483
  %3485 = vmatmul.f32.gmra.mxu0 %v3414
  %v3486 = vpop.f32.mrf.mxu0
  %v3487 = vadd.f32 %v3376, %v3486
  %3488 = vmatmul.f32.gmra.mxu0 %v3417
  %v3489 = vpop.f32.mrf.mxu0
  %v3490 = vadd.f32 %v3376, %v3489
  %3491 = vmatmul.f32.gmra.mxu0 %v3420
  %v3492 = vpop.f32.mrf.mxu0
  %v3493 = vadd.f32 %v3376, %v3492
  %3494 = vmatmul.f32.gmra.mxu0 %v3423
  %v3495 = vpop.f32.mrf.mxu0
  %v3496 = vadd.f32 %v3376, %v3495
  %3497 = vdwg.mxu0
  %v3498 = vmax.f32 %v3451, 0.0
  %v3499 = vmax.f32 %v3454, 0.0
  %v3500 = vmax.f32 %v3457, 0.0
  %v3501 = vmax.f32 %v3460, 0.0
  %v3502 = vmax.f32 %v3463, 0.0
  %v3503 = vmax.f32 %v3466, 0.0
  %v3504 = vmax.f32 %v3469, 0.0
  %v3505 = vmax.f32 %v3472, 0.0
  %v3506 = vmax.f32 %v3475, 0.0
  %v3507 = vmax.f32 %v3478, 0.0
  %v3508 = vmax.f32 %v3481, 0.0
  %v3509 = vmax.f32 %v3484, 0.0
  %v3510 = vmax.f32 %v3487, 0.0
  %v3511 = vmax.f32 %v3490, 0.0
  %v3512 = vmax.f32 %v3493, 0.0
  %v3513 = vmax.f32 %v3496, 0.0
  %v3514 = vperm.slane %v36, 0
  %v3516 = vsel %vm2964, %v3498, 0
  %v3519 = vsel %vm2964, %v3499, 0
  %v3522 = vsel %vm2964, %v3500, 0
  %v3525 = vsel %vm2964, %v3501, 0
  %v3528 = vsel %vm2964, %v3502, 0
  %v3531 = vsel %vm2964, %v3503, 0
  %v3534 = vsel %vm2964, %v3504, 0
  %v3537 = vsel %vm2964, %v3505, 0
  %v3540 = vsel %vm2964, %v3506, 0
  %v3543 = vsel %vm2964, %v3507, 0
  %v3546 = vsel %vm2964, %v3508, 0
  %v3549 = vsel %vm2964, %v3509, 0
  %v3552 = vsel %vm2964, %v3510, 0
  %v3555 = vsel %vm2964, %v3511, 0
  %v3558 = vsel %vm2964, %v3512, 0
  %v3561 = vsel %vm2964, %v3513, 0
  %v3564 = vsel %vm2964, %v29, 0
  %v3567 = vsel %vm2964, %v30, 0
  %v3570 = vsel %vm2964, %v31, 0
  %v3573 = vsel %vm2964, %v32, 0
  %3575 = vmatpush.xpose.msra.mxu0 0.0
  %3576 = vmatpush.xpose.msra.mxu0 0.0
  %3577 = vmatpush.xpose.msra.mxu0 0.0
  %3578 = vmatpush.xpose.msra.mxu0 0.0
  %3579 = vmatpush.xpose.msra.mxu0 0.0
  %3580 = vmatpush.xpose.msra.mxu0 0.0
  %3581 = vmatpush.xpose.msra.mxu0 0.0
  %3582 = vmatpush.xpose.msra.mxu0 0.0
  %3583 = vmatpush.xpose.msra.mxu0 0.0
  %3584 = vmatpush.xpose.msra.mxu0 0.0
  %3585 = vmatpush.xpose.msra.mxu0 0.0
  %3586 = vmatpush.xpose.msra.mxu0 0.0
  %3587 = vmatpush.xpose.msra.mxu0 %v3573
  %3588 = vmatpush.xpose.msra.mxu0 %v3570
  %3589 = vmatpush.xpose.msra.mxu0 %v3567
  %3590 = vmatpush.xpose.msra.mxu0 %v3564
  %3591 = vmatmul.f32.gmra.mxu0 %v3516
  %v3592 = vpop.f32.mrf.mxu0
  %v3593 = vadd.f32 %v3514, %v3592
  %3594 = vmatmul.f32.gmra.mxu0 %v3519
  %v3595 = vpop.f32.mrf.mxu0
  %v3596 = vadd.f32 %v3514, %v3595
  %3597 = vmatmul.f32.gmra.mxu0 %v3522
  %v3598 = vpop.f32.mrf.mxu0
  %v3599 = vadd.f32 %v3514, %v3598
  %3600 = vmatmul.f32.gmra.mxu0 %v3525
  %v3601 = vpop.f32.mrf.mxu0
  %v3602 = vadd.f32 %v3514, %v3601
  %3603 = vmatmul.f32.gmra.mxu0 %v3528
  %v3604 = vpop.f32.mrf.mxu0
  %v3605 = vadd.f32 %v3514, %v3604
  %3606 = vmatmul.f32.gmra.mxu0 %v3531
  %v3607 = vpop.f32.mrf.mxu0
  %v3608 = vadd.f32 %v3514, %v3607
  %3609 = vmatmul.f32.gmra.mxu0 %v3534
  %v3610 = vpop.f32.mrf.mxu0
  %v3611 = vadd.f32 %v3514, %v3610
  %3612 = vmatmul.f32.gmra.mxu0 %v3537
  %v3613 = vpop.f32.mrf.mxu0
  %v3614 = vadd.f32 %v3514, %v3613
  %3615 = vmatmul.f32.gmra.mxu0 %v3540
  %v3616 = vpop.f32.mrf.mxu0
  %v3617 = vadd.f32 %v3514, %v3616
  %3618 = vmatmul.f32.gmra.mxu0 %v3543
  %v3619 = vpop.f32.mrf.mxu0
  %v3620 = vadd.f32 %v3514, %v3619
  %3621 = vmatmul.f32.gmra.mxu0 %v3546
  %v3622 = vpop.f32.mrf.mxu0
  %v3623 = vadd.f32 %v3514, %v3622
  %3624 = vmatmul.f32.gmra.mxu0 %v3549
  %v3625 = vpop.f32.mrf.mxu0
  %v3626 = vadd.f32 %v3514, %v3625
  %3627 = vmatmul.f32.gmra.mxu0 %v3552
  %v3628 = vpop.f32.mrf.mxu0
  %v3629 = vadd.f32 %v3514, %v3628
  %3630 = vmatmul.f32.gmra.mxu0 %v3555
  %v3631 = vpop.f32.mrf.mxu0
  %v3632 = vadd.f32 %v3514, %v3631
  %3633 = vmatmul.f32.gmra.mxu0 %v3558
  %v3634 = vpop.f32.mrf.mxu0
  %v3635 = vadd.f32 %v3514, %v3634
  %3636 = vmatmul.f32.gmra.mxu0 %v3561
  %v3637 = vpop.f32.mrf.mxu0
  %v3638 = vadd.f32 %v3514, %v3637
  %3639 = vdwg.mxu0
  %v3640 = vmax.f32 %v3593, 0.0
  %v3641 = vmax.f32 %v3596, 0.0
  %v3642 = vmax.f32 %v3599, 0.0
  %v3643 = vmax.f32 %v3602, 0.0
  %v3644 = vmax.f32 %v3605, 0.0
  %v3645 = vmax.f32 %v3608, 0.0
  %v3646 = vmax.f32 %v3611, 0.0
  %v3647 = vmax.f32 %v3614, 0.0
  %v3648 = vmax.f32 %v3617, 0.0
  %v3649 = vmax.f32 %v3620, 0.0
  %v3650 = vmax.f32 %v3623, 0.0
  %v3651 = vmax.f32 %v3626, 0.0
  %v3652 = vmax.f32 %v3629, 0.0
  %v3653 = vmax.f32 %v3632, 0.0
  %v3654 = vmax.f32 %v3635, 0.0
  %v3655 = vmax.f32 %v3638, 0.0
  %3657 = vset.pattern.permute.xlu0 0
  %3658 = vperm.xlu0 %3657, %v39
  %v3659 = vpop.permute.xlu0 %3658
  %v3662 = vsel %vm2964, %v38, 0
  %v3665 = vsel %vm2964, %v3640, 0
  %v3668 = vsel %vm2964, %v3641, 0
  %v3671 = vsel %vm2964, %v3642, 0
  %v3674 = vsel %vm2964, %v3643, 0
  %v3677 = vsel %vm2964, %v3644, 0
  %v3680 = vsel %vm2964, %v3645, 0
  %v3683 = vsel %vm2964, %v3646, 0
  %v3686 = vsel %vm2964, %v3647, 0
  %v3689 = vsel %vm2964, %v3648, 0
  %v3692 = vsel %vm2964, %v3649, 0
  %v3695 = vsel %vm2964, %v3650, 0
  %v3698 = vsel %vm2964, %v3651, 0
  %v3701 = vsel %vm2964, %v3652, 0
  %v3704 = vsel %vm2964, %v3653, 0
  %v3707 = vsel %vm2964, %v3654, 0
  %v3710 = vsel %vm2964, %v3655, 0
  %3712 = vmatpush.xpose.msra.mxu0 %v3710
  %3713 = vmatpush.xpose.msra.mxu0 %v3707
  %3714 = vmatpush.xpose.msra.mxu0 %v3704
  %3715 = vmatpush.xpose.msra.mxu0 %v3701
  %3716 = vmatpush.xpose.msra.mxu0 %v3698
  %3717 = vmatpush.xpose.msra.mxu0 %v3695
  %3718 = vmatpush.xpose.msra.mxu0 %v3692
  %3719 = vmatpush.xpose.msra.mxu0 %v3689
  %3720 = vmatpush.xpose.msra.mxu0 %v3686
  %3721 = vmatpush.xpose.msra.mxu0 %v3683
  %3722 = vmatpush.xpose.msra.mxu0 %v3680
  %3723 = vmatpush.xpose.msra.mxu0 %v3677
  %3724 = vmatpush.xpose.msra.mxu0 %v3674
  %3725 = vmatpush.xpose.msra.mxu0 %v3671
  %3726 = vmatpush.xpose.msra.mxu0 %v3668
  %3727 = vmatpush.xpose.msra.mxu0 %v3665
  %3728 = vmatmul.f32.gmra.mxu0 %v3662
  %v3729 = vpop.f32.mrf.mxu0
  %v3730 = vadd.f32 %v3659, %v3729
  %3731 = vdwg.mxu0
  %3732 = vst [vmem:[%s4] sm:$0x1] %v3730
  // Predicated region
  $region18: #{_metalearner_forward_impl.1} parent=0 // pred_check
    _
  $region19: #{_metalearner_forward_impl.1} parent=0 // pred_check_branch
    %3734 = sbr.rel (0) target = $region21
  $region20: #{_metalearner_forward_impl.1} parent=0 // pred_region
    _
  $region21: #{_metalearner_forward_impl.1} parent=0 // pred_fallthru
    _
  // Predicated region
  $region22: #{_metalearner_forward_impl.1} parent=0 // pred_check
    _
  $region23: #{_metalearner_forward_impl.1} parent=0 // pred_check_branch
    %3736 = sbr.rel (0) target = $region25
  $region24: #{_metalearner_forward_impl.1} parent=0 // pred_region
    _
  $region25: #{_metalearner_forward_impl.1} parent=0 // pred_fallthru
    _

</llo_original>
